<compile_context>
chip_gen: v7x
topology: tpu7x:2x2x1
jax: 0.10.0
libtpu: 0.0.40
codegen_flags: <defaults>
</compile_context>

<pallas_src>
import jax
import jax.numpy as jnp
from jax.experimental import pallas as pl
from jax.experimental.pallas import tpu as pltpu

EPS = 1e-5      # nn.BatchNorm2d default eps
LANE = 128      # keep channel axes a multiple of the TPU lane width


def _rup(x, m):
    return (x + m - 1) // m * m


def _pick_tile_m(M):
    # Largest row tile (multiple of 8) dividing M, preferring 256-1024 rows.
    # Tiles this size keep double-buffered blocks far below v7x's 64 MiB VMEM.
    for tm in (256, 512, 1024, 128, 64, 32, 16, 8):
        if M % tm == 0:
            return tm
    return M


# ----------------------------- Pallas kernels ------------------------------ #

def conv1x1_stats_kernel(x_ref, w_ref, y_ref, psum_ref, psq_ref):
    """1x1 conv (bf16 MXU matmul, f32 acc) over a row tile + channel stats."""
    y = jnp.dot(x_ref[...], w_ref[...], preferred_element_type=jnp.float32)
    y_ref[...] = y
    s = jnp.sum(y, axis=0, keepdims=True)            # (1, C) partial sum
    q = jnp.sum(y * y, axis=0, keepdims=True)        # (1, C) partial sumsq
    psum_ref[0] = jnp.broadcast_to(s, psum_ref.shape[1:])
    psq_ref[0] = jnp.broadcast_to(q, psq_ref.shape[1:])


def conv3x3_stats_kernel(xpad_ref, ss_ref, w_ref, y_ref, psum_ref, psq_ref):
    """Fused: normalize+ReLU the previous stage's pre-BN activation (f32),
    then 3x3 / stride-1 / pad-1 conv as 9 accumulated bf16 MXU matmuls over
    shifted windows of the VMEM tile, plus per-image channel stats."""
    _, Hp2, Wp2, Cin = xpad_ref.shape
    H, W = Hp2 - 2, Wp2 - 2

    x = xpad_ref[0]                                  # (H+2, W+2, Cin) f32, pre-BN
    scale = ss_ref[0:1, :].reshape(1, 1, Cin)
    shift = ss_ref[1:2, :].reshape(1, 1, Cin)
    a = jnp.maximum(x * scale + shift, 0.0)          # bn + relu (f32, one FMA)

    # The spatial border was zero *before* normalization; conv padding must be
    # zero *after* bn+relu, so re-zero the 1-pixel border here.
    ri = jax.lax.broadcasted_iota(jnp.int32, a.shape, 0)
    ci = jax.lax.broadcasted_iota(jnp.int32, a.shape, 1)
    interior = (ri >= 1) & (ri <= H) & (ci >= 1) & (ci <= W)
    a = jnp.where(interior, a, 0.0)

    acc = None
    for t in range(9):                               # unrolled: 9 MXU matmuls
        dh, dw = t // 3, t % 3
        patch = a[dh:dh + H, dw:dw + W, :].reshape(H * W, Cin)
        d = jnp.dot(patch.astype(jnp.bfloat16), w_ref[t],
                    preferred_element_type=jnp.float32)
        acc = d if acc is None else acc + d

    y_ref[0] = acc                                   # pre-BN conv output (f32)
    s = jnp.sum(acc, axis=0, keepdims=True)
    q = jnp.sum(acc * acc, axis=0, keepdims=True)
    psum_ref[0] = jnp.broadcast_to(s, psum_ref.shape[1:])
    psq_ref[0] = jnp.broadcast_to(q, psq_ref.shape[1:])


def finalize_kernel(y_ref, res_ref, ss_ref, o_ref):
    """out = relu(identity + relu(y*scale + shift))."""
    scale = ss_ref[0:1, :]
    shift = ss_ref[1:2, :]
    z = jnp.maximum(y_ref[...] * scale + shift, 0.0)
    o_ref[...] = jnp.maximum(res_ref[...] + z, 0.0)


# --------------------------- pallas_call wrappers --------------------------- #

_PARALLEL1 = pltpu.CompilerParams(dimension_semantics=("parallel",))


def conv1x1_stage(x_bf16, w_bf16):
    M, CinP = x_bf16.shape
    CoutP = w_bf16.shape[1]
    tm = _pick_tile_m(M)
    T = M // tm
    return pl.pallas_call(
        conv1x1_stats_kernel,
        grid=(T,),
        in_specs=[pl.BlockSpec((tm, CinP), lambda i: (i, 0)),
                  pl.BlockSpec((CinP, CoutP), lambda i: (0, 0))],
        out_specs=[pl.BlockSpec((tm, CoutP), lambda i: (i, 0)),
                   pl.BlockSpec((1, 8, CoutP), lambda i: (i, 0, 0)),
                   pl.BlockSpec((1, 8, CoutP), lambda i: (i, 0, 0))],
        out_shape=[jax.ShapeDtypeStruct((M, CoutP), jnp.float32),
                   jax.ShapeDtypeStruct((T, 8, CoutP), jnp.float32),
                   jax.ShapeDtypeStruct((T, 8, CoutP), jnp.float32)],
        compiler_params=_PARALLEL1,
    )(x_bf16, w_bf16)


def conv3x3_stage(xpad, scale_shift, w_taps):
    N, Hp2, Wp2, CinP = xpad.shape
    H, W = Hp2 - 2, Wp2 - 2
    CoutP = w_taps.shape[2]
    return pl.pallas_call(
        conv3x3_stats_kernel,
        grid=(N,),
        in_specs=[pl.BlockSpec((1, Hp2, Wp2, CinP), lambda n: (n, 0, 0, 0)),
                  pl.BlockSpec((2, CinP), lambda n: (0, 0)),
                  pl.BlockSpec((9, CinP, CoutP), lambda n: (0, 0, 0))],
        out_specs=[pl.BlockSpec((1, H * W, CoutP), lambda n: (n, 0, 0)),
                   pl.BlockSpec((1, 8, CoutP), lambda n: (n, 0, 0)),
                   pl.BlockSpec((1, 8, CoutP), lambda n: (n, 0, 0))],
        out_shape=[jax.ShapeDtypeStruct((N, H * W, CoutP), jnp.float32),
                   jax.ShapeDtypeStruct((N, 8, CoutP), jnp.float32),
                   jax.ShapeDtypeStruct((N, 8, CoutP), jnp.float32)],
        compiler_params=_PARALLEL1,
    )(xpad, scale_shift, w_taps)


def finalize_stage(y, res, scale_shift):
    M, CP = y.shape
    tm = _pick_tile_m(M)
    T = M // tm
    return pl.pallas_call(
        finalize_kernel,
        grid=(T,),
        in_specs=[pl.BlockSpec((tm, CP), lambda i: (i, 0)),
                  pl.BlockSpec((tm, CP), lambda i: (i, 0)),
                  pl.BlockSpec((2, CP), lambda i: (0, 0))],
        out_specs=pl.BlockSpec((tm, CP), lambda i: (i, 0)),
        out_shape=jax.ShapeDtypeStruct((M, CP), jnp.float32),
        compiler_params=_PARALLEL1,
    )(y, res, scale_shift)


# ------------------------------ JAX glue ----------------------------------- #

def bn_scale_shift(psum, psumsq, count, gamma, beta, cpad):
    """Reduce per-tile partials to the fused BN affine: y*scale + shift."""
    s = jnp.sum(psum[:, 0, :], axis=0)
    q = jnp.sum(psumsq[:, 0, :], axis=0)
    mean = s / count
    var = jnp.maximum(q / count - mean * mean, 0.0)   # biased batch variance
    g = jnp.pad(gamma, (0, cpad - gamma.shape[0]))    # padded channels -> 0
    b = jnp.pad(beta, (0, cpad - beta.shape[0]))
    scale = g * jax.lax.rsqrt(var + EPS)
    shift = b - mean * scale
    return jnp.stack([scale, shift], axis=0).astype(jnp.float32)   # (2, cpad)


def conv1x1_to_mat(w, cin_p, cout_p):
    cout, cin = w.shape[0], w.shape[1]
    m = jnp.transpose(w[:, :, 0, 0], (1, 0))          # (Cin, Cout)
    m = jnp.pad(m, ((0, cin_p - cin), (0, cout_p - cout)))
    return m.astype(jnp.bfloat16)


def conv3x3_to_taps(w, cin_p, cout_p):
    cout, cin, kh, kw = w.shape
    taps = jnp.transpose(w, (2, 3, 1, 0)).reshape(kh * kw, cin, cout)
    taps = jnp.pad(taps, ((0, 0), (0, cin_p - cin), (0, cout_p - cout)))
    return taps.astype(jnp.bfloat16)


def block_forward_pallas(x_nchw, p):
    N, Cin, H, W = x_nchw.shape
    cmid = p["w1"].shape[0]
    cout = 4 * cmid
    # identity_downsample=None / stride=1 path needs in_channels == 4*out_channels.
    assert Cin == cout, "residual add requires in_channels == 4*out_channels"
    CinP, CmidP, CoutP = _rup(Cin, LANE), _rup(cmid, LANE), _rup(cout, LANE)
    M = N * H * W

    x_nhwc = jnp.transpose(x_nchw, (0, 2, 3, 1)).astype(jnp.float32)
    x2d = x_nhwc.reshape(M, Cin)
    x2d_p = jnp.pad(x2d, ((0, 0), (0, CinP - Cin)))
    identity_p = jnp.pad(x2d, ((0, 0), (0, CoutP - Cin)))   # f32 residual

    # stage 1: 1x1 conv + batch stats (bn1+relu applied inside stage 2)
    w1 = conv1x1_to_mat(p["w1"], CinP, CmidP)
    y1, s1, q1 = conv1x1_stage(x2d_p.astype(jnp.bfloat16), w1)
    ss1 = bn_scale_shift(s1, q1, M, p["g1"], p["be1"], CmidP)

    # stage 2: bn1+relu fused into 3x3 conv2 + batch stats
    y1p = jnp.pad(y1.reshape(N, H, W, CmidP), ((0, 0), (1, 1), (1, 1), (0, 0)))
    w2 = conv3x3_to_taps(p["w2"], CmidP, CmidP)
    y2, s2, q2 = conv3x3_stage(y1p, ss1, w2)
    ss2 = bn_scale_shift(s2, q2, M, p["g2"], p["be2"], CmidP)

    # stage 3: bn2+relu fused into 3x3 conv3 + batch stats
    y2p = jnp.pad(y2.reshape(N, H, W, CmidP), ((0, 0), (1, 1), (1, 1), (0, 0)))
    w3 = conv3x3_to_taps(p["w3"], CmidP, CoutP)
    y3, s3, q3 = conv3x3_stage(y2p, ss2, w3)
    ss3 = bn_scale_shift(s3, q3, M, p["g3"], p["be3"], CoutP)

    # stage 4: bn3 + relu + residual add + relu
    out2d = finalize_stage(y3.reshape(M, CoutP), identity_p, ss3)
    out = out2d[:, :cout].reshape(N, H, W, cout)
    return jnp.transpose(out, (0, 3, 1, 2))               # back to NCHW


# --------------------------- Pure-JAX reference ----------------------------- #

def block_forward_reference(x_nchw, p, matmul_dtype=jnp.float32):
    def conv(x, w, b, pad):
        w_hwio = jnp.transpose(w, (2, 3, 1, 0)).astype(matmul_dtype)
        y = jax.lax.conv_general_dilated(
            x.astype(matmul_dtype), w_hwio, (1, 1), [(pad, pad), (pad, pad)],
            dimension_numbers=("NHWC", "HWIO", "NHWC"),
            preferred_element_type=jnp.float32)
        return y + b

    def bn(x, g, be):
        m = jnp.mean(x, axis=(0, 1, 2), keepdims=True)
        v = jnp.mean((x - m) ** 2, axis=(0, 1, 2), keepdims=True)
        return (x - m) * jax.lax.rsqrt(v + EPS) * g + be

    x = jnp.transpose(x_nchw, (0, 2, 3, 1)).astype(jnp.float32)
    identity = x
    h = jnp.maximum(bn(conv(x, p["w1"], p["b1"], 0), p["g1"], p["be1"]), 0.0)
    h = jnp.maximum(bn(conv(h, p["w2"], p["b2"], 1), p["g2"], p["be2"]), 0.0)
    h = jnp.maximum(bn(conv(h, p["w3"], p["b3"], 1), p["g3"], p["be3"]), 0.0)
    out = jnp.maximum(identity + h, 0.0)
    return jnp.transpose(out, (0, 3, 1, 2))


def init_params(key, in_channels, out_channels):
    expansion = 4
    ks = jax.random.split(key, 12)
    n = jax.random.normal
    return {
        "w1": 0.1 * n(ks[0], (out_channels, in_channels, 1, 1), jnp.float32),
        "b1": 0.05 * n(ks[1], (out_channels,), jnp.float32),
        "g1": 1.0 + 0.1 * n(ks[2], (out_channels,), jnp.float32),
        "be1": 0.1 * n(ks[3], (out_channels,), jnp.float32),
        "w2": 0.1 * n(ks[4], (out_channels, out_channels, 3, 3), jnp.float32),
        "b2": 0.05 * n(ks[5], (out_channels,), jnp.float32),
        "g2": 1.0 + 0.1 * n(ks[6], (out_channels,), jnp.float32),
        "be2": 0.1 * n(ks[7], (out_channels,), jnp.float32),
        "w3": 0.1 * n(ks[8], (expansion * out_channels, out_channels, 3, 3), jnp.float32),
        "b3": 0.05 * n(ks[9], (expansion * out_channels,), jnp.float32),
        "g3": 1.0 + 0.1 * n(ks[10], (expansion * out_channels,), jnp.float32),
        "be3": 0.1 * n(ks[11], (expansion * out_channels,), jnp.float32),
    }


# --------------------------------- main ------------------------------------ #

if __name__ == "__main__":
    key = jax.random.PRNGKey(0)
    kx, kp = jax.random.split(key)

    # Block(in_channels=32, out_channels=8): in_channels == 4*out_channels so
    # the residual add is valid with the defaults identity_downsample=None, stride=1.
    N, Cin, H, W = 2, 32, 16, 16
    Cmid = 8

    x = jax.random.normal(kx, (N, Cin, H, W), dtype=jnp.float32)
    params = init_params(kp, Cin, Cmid)

    out = jax.jit(block_forward_pallas)(x, params)
    out = jax.block_until_ready(out)
    assert out.shape == (N, 4 * Cmid, H, W), out.shape

    # Tight check vs a reference with matching matmul numerics (bf16 operands,
    # f32 accumulation); loose sanity check vs the pure-f32 reference (slack
    # covers three chained bf16 MXU convolutions).
    ref_bf16 = block_forward_reference(x, params, jnp.bfloat16)
    ref_f32 = block_forward_reference(x, params, jnp.float32)
    assert jnp.allclose(out, ref_bf16, rtol=5e-3, atol=5e-3), \
        float(jnp.max(jnp.abs(out - ref_bf16)))
    assert jnp.allclose(out, ref_f32, rtol=1e-1, atol=1e-1), \
        float(jnp.max(jnp.abs(out - ref_f32)))

    print("KERNEL_OK")
</pallas_src>

<mosaic_0001>
module attributes {stable_mosaic.version = 11 : i64} {
  func.func @conv1x1_stats_kernel(%arg0: i32, %arg1: memref<256x128xbf16, #tpu.memory_space<vmem>>, %arg2: memref<128x128xbf16, #tpu.memory_space<vmem>>, %arg3: memref<256x128xf32, #tpu.memory_space<vmem>>, %arg4: memref<1x8x128xf32, #tpu.memory_space<vmem>>, %arg5: memref<1x8x128xf32, #tpu.memory_space<vmem>>) attributes {dimension_semantics = [#tpu.dimension_semantics<parallel>], iteration_bounds = array<i64: 2>, scalar_prefetch = 0 : i64, scratch_operands = 0 : i64, tpu.core_type = #tpu.core_type<tc>, window_params = [{transform_indices = @transform_0, window_bounds = array<i64: 256, 128>}, {pipeline_mode = #tpu.pipeline_mode<synchronous>, transform_indices = @transform_1, window_bounds = array<i64: 128, 128>}, {transform_indices = @transform_2, window_bounds = array<i64: 256, 128>}, {transform_indices = @transform_3, window_bounds = array<i64: 1, 8, 128>}, {transform_indices = @transform_4, window_bounds = array<i64: 1, 8, 128>}]} {
    %c0 = arith.constant 0 : index
    %c0_0 = arith.constant 0 : index
    %0 = vector.load %arg1[%c0, %c0_0] : memref<256x128xbf16, #tpu.memory_space<vmem>>, vector<256x128xbf16>
    %c0_1 = arith.constant 0 : index
    %c0_2 = arith.constant 0 : index
    %1 = vector.load %arg2[%c0_1, %c0_2] : memref<128x128xbf16, #tpu.memory_space<vmem>>, vector<128x128xbf16>
    %cst = arith.constant dense<0.000000e+00> : vector<256x128xf32>
    %2 = tpu.matmul %0, %1, %cst {dimension_numbers = #tpu.dot_dimension_numbers<[1], [0], [0], [1], [0, 0, 1, 1], [], []>} : vector<256x128xbf16>, vector<128x128xbf16>, vector<256x128xf32> -> vector<256x128xf32>
    %c0_3 = arith.constant 0 : index
    %c0_4 = arith.constant 0 : index
    %3 = vector.load %arg3[%c0_3, %c0_4] : memref<256x128xf32, #tpu.memory_space<vmem>>, vector<256x128xf32>
    tpu.vector_store %arg3[%c0_3, %c0_4], %2 {strides = array<i32>} : memref<256x128xf32, #tpu.memory_space<vmem>>, vector<256x128xf32>,
    %cst_5 = arith.constant dense<0.000000e+00> : vector<128xf32>
    %4 = vector.multi_reduction <add>, %2, %cst_5 [0] : vector<256x128xf32> to vector<128xf32>
    %5 = vector.shape_cast %4 : vector<128xf32> to vector<1x128xf32>
    %6 = arith.mulf %2, %2 : vector<256x128xf32>
    %cst_6 = arith.constant dense<0.000000e+00> : vector<128xf32>
    %7 = vector.multi_reduction <add>, %6, %cst_6 [0] : vector<256x128xf32> to vector<128xf32>
    %8 = vector.shape_cast %7 : vector<128xf32> to vector<1x128xf32>
    %9 = vector.shape_cast %5 : vector<1x128xf32> to vector<1x128xf32>
    %10 = vector.broadcast %9 : vector<1x128xf32> to vector<8x128xf32>
    %c0_7 = arith.constant 0 : index
    %c0_8 = arith.constant 0 : index
    %c0_9 = arith.constant 0 : index
    %11 = vector.load %arg4[%c0_7, %c0_8, %c0_9] : memref<1x8x128xf32, #tpu.memory_space<vmem>>, vector<1x8x128xf32>
    %12 = vector.shape_cast %11 : vector<1x8x128xf32> to vector<8x128xf32>
    %13 = vector.shape_cast %10 : vector<8x128xf32> to vector<1x8x128xf32>
    tpu.vector_store %arg4[%c0_7, %c0_8, %c0_9], %13 {strides = array<i32>} : memref<1x8x128xf32, #tpu.memory_space<vmem>>, vector<1x8x128xf32>,
    %14 = vector.shape_cast %8 : vector<1x128xf32> to vector<1x128xf32>
    %15 = vector.broadcast %14 : vector<1x128xf32> to vector<8x128xf32>
    %c0_10 = arith.constant 0 : index
    %c0_11 = arith.constant 0 : index
    %c0_12 = arith.constant 0 : index
    %16 = vector.load %arg5[%c0_10, %c0_11, %c0_12] : memref<1x8x128xf32, #tpu.memory_space<vmem>>, vector<1x8x128xf32>
    %17 = vector.shape_cast %16 : vector<1x8x128xf32> to vector<8x128xf32>
    %18 = vector.shape_cast %15 : vector<8x128xf32> to vector<1x8x128xf32>
    tpu.vector_store %arg5[%c0_10, %c0_11, %c0_12], %18 {strides = array<i32>} : memref<1x8x128xf32, #tpu.memory_space<vmem>>, vector<1x8x128xf32>,
    return
  }
  func.func @transform_0(%arg0: i32) -> (i32, i32) {
    %c0_i32 = arith.constant 0 : i32
    %c0_i32_0 = arith.constant 0 : i32
    return %arg0, %c0_i32 : i32, i32
  }
  func.func @transform_1(%arg0: i32) -> (i32, i32) {
    %c0_i32 = arith.constant 0 : i32
    %c0_i32_0 = arith.constant 0 : i32
    %c0_i32_1 = arith.constant 0 : i32
    return %c0_i32, %c0_i32_0 : i32, i32
  }
  func.func @transform_2(%arg0: i32) -> (i32, i32) {
    %c0_i32 = arith.constant 0 : i32
    %c0_i32_0 = arith.constant 0 : i32
    return %arg0, %c0_i32 : i32, i32
  }
  func.func @transform_3(%arg0: i32) -> (i32, i32, i32) {
    %c0_i32 = arith.constant 0 : i32
    %c0_i32_0 = arith.constant 0 : i32
    %c0_i32_1 = arith.constant 0 : i32
    return %arg0, %c0_i32, %c0_i32_0 : i32, i32, i32
  }
  func.func @transform_4(%arg0: i32) -> (i32, i32, i32) {
    %c0_i32 = arith.constant 0 : i32
    %c0_i32_0 = arith.constant 0 : i32
    %c0_i32_1 = arith.constant 0 : i32
    return %arg0, %c0_i32, %c0_i32_0 : i32, i32, i32
  }
}

module attributes {stable_mosaic.version = 11 : i64} {
  func.func @conv3x3_stats_kernel(%arg0: i32, %arg1: memref<1x18x18x128xf32, #tpu.memory_space<vmem>>, %arg2: memref<2x128xf32, #tpu.memory_space<vmem>>, %arg3: memref<9x128x128xbf16, #tpu.memory_space<vmem>>, %arg4: memref<1x256x128xf32, #tpu.memory_space<vmem>>, %arg5: memref<1x8x128xf32, #tpu.memory_space<vmem>>, %arg6: memref<1x8x128xf32, #tpu.memory_space<vmem>>) attributes {dimension_semantics = [#tpu.dimension_semantics<parallel>], iteration_bounds = array<i64: 2>, scalar_prefetch = 0 : i64, scratch_operands = 0 : i64, tpu.core_type = #tpu.core_type<tc>, window_params = [{transform_indices = @transform_0, window_bounds = array<i64: 1, 18, 18, 128>}, {pipeline_mode = #tpu.pipeline_mode<synchronous>, transform_indices = @transform_1, window_bounds = array<i64: 2, 128>}, {pipeline_mode = #tpu.pipeline_mode<synchronous>, transform_indices = @transform_2, window_bounds = array<i64: 9, 128, 128>}, {transform_indices = @transform_3, window_bounds = array<i64: 1, 256, 128>}, {transform_indices = @transform_4, window_bounds = array<i64: 1, 8, 128>}, {transform_indices = @transform_5, window_bounds = array<i64: 1, 8, 128>}]} {
    %c0 = arith.constant 0 : index
    %c0_0 = arith.constant 0 : index
    %c0_1 = arith.constant 0 : index
    %c0_2 = arith.constant 0 : index
    %0 = vector.load %arg1[%c0, %c0_0, %c0_1, %c0_2] : memref<1x18x18x128xf32, #tpu.memory_space<vmem>>, vector<1x18x18x128xf32>
    %1 = vector.shape_cast %0 : vector<1x18x18x128xf32> to vector<18x18x128xf32>
    %c0_3 = arith.constant 0 : index
    %c0_4 = arith.constant 0 : index
    %2 = vector.load %arg2[%c0_3, %c0_4] : memref<2x128xf32, #tpu.memory_space<vmem>>, vector<1x128xf32>
    %3 = vector.shape_cast %2 : vector<1x128xf32> to vector<1x1x128xf32>
    %c1 = arith.constant 1 : index
    %c0_5 = arith.constant 0 : index
    %4 = vector.load %arg2[%c1, %c0_5] : memref<2x128xf32, #tpu.memory_space<vmem>>, vector<1x128xf32>
    %5 = vector.shape_cast %4 : vector<1x128xf32> to vector<1x1x128xf32>
    %6 = vector.broadcast %3 : vector<1x1x128xf32> to vector<18x18x128xf32>
    %7 = arith.mulf %1, %6 : vector<18x18x128xf32>
    %8 = vector.broadcast %5 : vector<1x1x128xf32> to vector<18x18x128xf32>
    %9 = arith.addf %7, %8 : vector<18x18x128xf32>
    %cst = arith.constant 0.000000e+00 : f32
    %10 = vector.broadcast %cst : f32 to vector<18x18x128xf32>
    %11 = arith.maximumf %9, %10 : vector<18x18x128xf32>
    %12 = tpu.iota {dimensions = array<i32: 0>} : vector<18x18x128xi32>
    %13 = tpu.iota {dimensions = array<i32: 1>} : vector<18x18x128xi32>
    %c1_i32 = arith.constant 1 : i32
    %14 = vector.broadcast %c1_i32 : i32 to vector<18x18x128xi32>
    %15 = arith.cmpi sge, %12, %14 : vector<18x18x128xi32>
    %c16_i32 = arith.constant 16 : i32
    %16 = vector.broadcast %c16_i32 : i32 to vector<18x18x128xi32>
    %17 = arith.cmpi sle, %12, %16 : vector<18x18x128xi32>
    %18 = arith.andi %15, %17 : vector<18x18x128xi1>
    %c1_i32_6 = arith.constant 1 : i32
    %19 = vector.broadcast %c1_i32_6 : i32 to vector<18x18x128xi32>
    %20 = arith.cmpi sge, %13, %19 : vector<18x18x128xi32>
    %21 = arith.andi %18, %20 : vector<18x18x128xi1>
    %c16_i32_7 = arith.constant 16 : i32
    %22 = vector.broadcast %c16_i32_7 : i32 to vector<18x18x128xi32>
    %23 = arith.cmpi sle, %13, %22 : vector<18x18x128xi32>
    %24 = arith.andi %21, %23 : vector<18x18x128xi1>
    %cst_8 = arith.constant 0.000000e+00 : f32
    %25 = vector.broadcast %cst_8 : f32 to vector<18x18x128xf32>
    %26 = arith.select %24, %11, %25 : vector<18x18x128xi1>, vector<18x18x128xf32>
    %27 = vector.extract_strided_slice %26 {offsets = [0, 0, 0], sizes = [16, 16, 128], strides = [1, 1, 1]} : vector<18x18x128xf32> to vector<16x16x128xf32>
    %28 = vector.shape_cast %27 : vector<16x16x128xf32> to vector<256x128xf32>
    %29 = arith.truncf %28 : vector<256x128xf32> to vector<256x128xbf16>
    %c0_9 = arith.constant 0 : index
    %c0_10 = arith.constant 0 : index
    %c0_11 = arith.constant 0 : index
    %30 = vector.load %arg3[%c0_9, %c0_10, %c0_11] : memref<9x128x128xbf16, #tpu.memory_space<vmem>>, vector<1x128x128xbf16>
    %31 = vector.shape_cast %30 : vector<1x128x128xbf16> to vector<128x128xbf16>
    %cst_12 = arith.constant dense<0.000000e+00> : vector<256x128xf32>
    %32 = tpu.matmul %29, %31, %cst_12 {dimension_numbers = #tpu.dot_dimension_numbers<[1], [0], [0], [1], [0, 0, 1, 1], [], []>} : vector<256x128xbf16>, vector<128x128xbf16>, vector<256x128xf32> -> vector<256x128xf32>
    %33 = vector.extract_strided_slice %26 {offsets = [0, 1, 0], sizes = [16, 16, 128], strides = [1, 1, 1]} : vector<18x18x128xf32> to vector<16x16x128xf32>
    %34 = vector.shape_cast %33 : vector<16x16x128xf32> to vector<256x128xf32>
    %35 = arith.truncf %34 : vector<256x128xf32> to vector<256x128xbf16>
    %c1_13 = arith.constant 1 : index
    %c0_14 = arith.constant 0 : index
    %c0_15 = arith.constant 0 : index
    %36 = vector.load %arg3[%c1_13, %c0_14, %c0_15] : memref<9x128x128xbf16, #tpu.memory_space<vmem>>, vector<1x128x128xbf16>
    %37 = vector.shape_cast %36 : vector<1x128x128xbf16> to vector<128x128xbf16>
    %cst_16 = arith.constant dense<0.000000e+00> : vector<256x128xf32>
    %38 = tpu.matmul %35, %37, %cst_16 {dimension_numbers = #tpu.dot_dimension_numbers<[1], [0], [0], [1], [0, 0, 1, 1], [], []>} : vector<256x128xbf16>, vector<128x128xbf16>, vector<256x128xf32> -> vector<256x128xf32>
    %39 = arith.addf %32, %38 : vector<256x128xf32>
    %40 = vector.extract_strided_slice %26 {offsets = [0, 2, 0], sizes = [16, 16, 128], strides = [1, 1, 1]} : vector<18x18x128xf32> to vector<16x16x128xf32>
    %41 = vector.shape_cast %40 : vector<16x16x128xf32> to vector<256x128xf32>
    %42 = arith.truncf %41 : vector<256x128xf32> to vector<256x128xbf16>
    %c2 = arith.constant 2 : index
    %c0_17 = arith.constant 0 : index
    %c0_18 = arith.constant 0 : index
    %43 = vector.load %arg3[%c2, %c0_17, %c0_18] : memref<9x128x128xbf16, #tpu.memory_space<vmem>>, vector<1x128x128xbf16>
    %44 = vector.shape_cast %43 : vector<1x128x128xbf16> to vector<128x128xbf16>
    %cst_19 = arith.constant dense<0.000000e+00> : vector<256x128xf32>
    %45 = tpu.matmul %42, %44, %cst_19 {dimension_numbers = #tpu.dot_dimension_numbers<[1], [0], [0], [1], [0, 0, 1, 1], [], []>} : vector<256x128xbf16>, vector<128x128xbf16>, vector<256x128xf32> -> vector<256x128xf32>
    %46 = arith.addf %39, %45 : vector<256x128xf32>
    %47 = vector.extract_strided_slice %26 {offsets = [1, 0, 0], sizes = [16, 16, 128], strides = [1, 1, 1]} : vector<18x18x128xf32> to vector<16x16x128xf32>
    %48 = vector.shape_cast %47 : vector<16x16x128xf32> to vector<256x128xf32>
    %49 = arith.truncf %48 : vector<256x128xf32> to vector<256x128xbf16>
    %c3 = arith.constant 3 : index
    %c0_20 = arith.constant 0 : index
    %c0_21 = arith.constant 0 : index
    %50 = vector.load %arg3[%c3, %c0_20, %c0_21] : memref<9x128x128xbf16, #tpu.memory_space<vmem>>, vector<1x128x128xbf16>
    %51 = vector.shape_cast %50 : vector<1x128x128xbf16> to vector<128x128xbf16>
    %cst_22 = arith.constant dense<0.000000e+00> : vector<256x128xf32>
    %52 = tpu.matmul %49, %51, %cst_22 {dimension_numbers = #tpu.dot_dimension_numbers<[1], [0], [0], [1], [0, 0, 1, 1], [], []>} : vector<256x128xbf16>, vector<128x128xbf16>, vector<256x128xf32> -> vector<256x128xf32>
    %53 = arith.addf %46, %52 : vector<256x128xf32>
    %54 = vector.extract_strided_slice %26 {offsets = [1, 1, 0], sizes = [16, 16, 128], strides = [1, 1, 1]} : vector<18x18x128xf32> to vector<16x16x128xf32>
    %55 = vector.shape_cast %54 : vector<16x16x128xf32> to vector<256x128xf32>
    %56 = arith.truncf %55 : vector<256x128xf32> to vector<256x128xbf16>
    %c4 = arith.constant 4 : index
    %c0_23 = arith.constant 0 : index
    %c0_24 = arith.constant 0 : index
    %57 = vector.load %arg3[%c4, %c0_23, %c0_24] : memref<9x128x128xbf16, #tpu.memory_space<vmem>>, vector<1x128x128xbf16>
    %58 = vector.shape_cast %57 : vector<1x128x128xbf16> to vector<128x128xbf16>
    %cst_25 = arith.constant dense<0.000000e+00> : vector<256x128xf32>
    %59 = tpu.matmul %56, %58, %cst_25 {dimension_numbers = #tpu.dot_dimension_numbers<[1], [0], [0], [1], [0, 0, 1, 1], [], []>} : vector<256x128xbf16>, vector<128x128xbf16>, vector<256x128xf32> -> vector<256x128xf32>
    %60 = arith.addf %53, %59 : vector<256x128xf32>
    %61 = vector.extract_strided_slice %26 {offsets = [1, 2, 0], sizes = [16, 16, 128], strides = [1, 1, 1]} : vector<18x18x128xf32> to vector<16x16x128xf32>
    %62 = vector.shape_cast %61 : vector<16x16x128xf32> to vector<256x128xf32>
    %63 = arith.truncf %62 : vector<256x128xf32> to vector<256x128xbf16>
    %c5 = arith.constant 5 : index
    %c0_26 = arith.constant 0 : index
    %c0_27 = arith.constant 0 : index
    %64 = vector.load %arg3[%c5, %c0_26, %c0_27] : memref<9x128x128xbf16, #tpu.memory_space<vmem>>, vector<1x128x128xbf16>
    %65 = vector.shape_cast %64 : vector<1x128x128xbf16> to vector<128x128xbf16>
    %cst_28 = arith.constant dense<0.000000e+00> : vector<256x128xf32>
    %66 = tpu.matmul %63, %65, %cst_28 {dimension_numbers = #tpu.dot_dimension_numbers<[1], [0], [0], [1], [0, 0, 1, 1], [], []>} : vector<256x128xbf16>, vector<128x128xbf16>, vector<256x128xf32> -> vector<256x128xf32>
    %67 = arith.addf %60, %66 : vector<256x128xf32>
    %68 = vector.extract_strided_slice %26 {offsets = [2, 0, 0], sizes = [16, 16, 128], strides = [1, 1, 1]} : vector<18x18x128xf32> to vector<16x16x128xf32>
    %69 = vector.shape_cast %68 : vector<16x16x128xf32> to vector<256x128xf32>
    %70 = arith.truncf %69 : vector<256x128xf32> to vector<256x128xbf16>
    %c6 = arith.constant 6 : index
    %c0_29 = arith.constant 0 : index
    %c0_30 = arith.constant 0 : index
    %71 = vector.load %arg3[%c6, %c0_29, %c0_30] : memref<9x128x128xbf16, #tpu.memory_space<vmem>>, vector<1x128x128xbf16>
    %72 = vector.shape_cast %71 : vector<1x128x128xbf16> to vector<128x128xbf16>
    %cst_31 = arith.constant dense<0.000000e+00> : vector<256x128xf32>
    %73 = tpu.matmul %70, %72, %cst_31 {dimension_numbers = #tpu.dot_dimension_numbers<[1], [0], [0], [1], [0, 0, 1, 1], [], []>} : vector<256x128xbf16>, vector<128x128xbf16>, vector<256x128xf32> -> vector<256x128xf32>
    %74 = arith.addf %67, %73 : vector<256x128xf32>
    %75 = vector.extract_strided_slice %26 {offsets = [2, 1, 0], sizes = [16, 16, 128], strides = [1, 1, 1]} : vector<18x18x128xf32> to vector<16x16x128xf32>
    %76 = vector.shape_cast %75 : vector<16x16x128xf32> to vector<256x128xf32>
    %77 = arith.truncf %76 : vector<256x128xf32> to vector<256x128xbf16>
    %c7 = arith.constant 7 : index
    %c0_32 = arith.constant 0 : index
    %c0_33 = arith.constant 0 : index
    %78 = vector.load %arg3[%c7, %c0_32, %c0_33] : memref<9x128x128xbf16, #tpu.memory_space<vmem>>, vector<1x128x128xbf16>
    %79 = vector.shape_cast %78 : vector<1x128x128xbf16> to vector<128x128xbf16>
    %cst_34 = arith.constant dense<0.000000e+00> : vector<256x128xf32>
    %80 = tpu.matmul %77, %79, %cst_34 {dimension_numbers = #tpu.dot_dimension_numbers<[1], [0], [0], [1], [0, 0, 1, 1], [], []>} : vector<256x128xbf16>, vector<128x128xbf16>, vector<256x128xf32> -> vector<256x128xf32>
    %81 = arith.addf %74, %80 : vector<256x128xf32>
    %82 = vector.extract_strided_slice %26 {offsets = [2, 2, 0], sizes = [16, 16, 128], strides = [1, 1, 1]} : vector<18x18x128xf32> to vector<16x16x128xf32>
    %83 = vector.shape_cast %82 : vector<16x16x128xf32> to vector<256x128xf32>
    %84 = arith.truncf %83 : vector<256x128xf32> to vector<256x128xbf16>
    %c8 = arith.constant 8 : index
    %c0_35 = arith.constant 0 : index
    %c0_36 = arith.constant 0 : index
    %85 = vector.load %arg3[%c8, %c0_35, %c0_36] : memref<9x128x128xbf16, #tpu.memory_space<vmem>>, vector<1x128x128xbf16>
    %86 = vector.shape_cast %85 : vector<1x128x128xbf16> to vector<128x128xbf16>
    %cst_37 = arith.constant dense<0.000000e+00> : vector<256x128xf32>
    %87 = tpu.matmul %84, %86, %cst_37 {dimension_numbers = #tpu.dot_dimension_numbers<[1], [0], [0], [1], [0, 0, 1, 1], [], []>} : vector<256x128xbf16>, vector<128x128xbf16>, vector<256x128xf32> -> vector<256x128xf32>
    %88 = arith.addf %81, %87 : vector<256x128xf32>
    %c0_38 = arith.constant 0 : index
    %c0_39 = arith.constant 0 : index
    %c0_40 = arith.constant 0 : index
    %89 = vector.load %arg4[%c0_38, %c0_39, %c0_40] : memref<1x256x128xf32, #tpu.memory_space<vmem>>, vector<1x256x128xf32>
    %90 = vector.shape_cast %89 : vector<1x256x128xf32> to vector<256x128xf32>
    %91 = vector.shape_cast %88 : vector<256x128xf32> to vector<1x256x128xf32>
    tpu.vector_store %arg4[%c0_38, %c0_39, %c0_40], %91 {strides = array<i32>} : memref<1x256x128xf32, #tpu.memory_space<vmem>>, vector<1x256x128xf32>,
    %cst_41 = arith.constant dense<0.000000e+00> : vector<128xf32>
    %92 = vector.multi_reduction <add>, %88, %cst_41 [0] : vector<256x128xf32> to vector<128xf32>
    %93 = vector.shape_cast %92 : vector<128xf32> to vector<1x128xf32>
    %94 = arith.mulf %88, %88 : vector<256x128xf32>
    %cst_42 = arith.constant dense<0.000000e+00> : vector<128xf32>
    %95 = vector.multi_reduction <add>, %94, %cst_42 [0] : vector<256x128xf32> to vector<128xf32>
    %96 = vector.shape_cast %95 : vector<128xf32> to vector<1x128xf32>
    %97 = vector.shape_cast %93 : vector<1x128xf32> to vector<1x128xf32>
    %98 = vector.broadcast %97 : vector<1x128xf32> to vector<8x128xf32>
    %c0_43 = arith.constant 0 : index
    %c0_44 = arith.constant 0 : index
    %c0_45 = arith.constant 0 : index
    %99 = vector.load %arg5[%c0_43, %c0_44, %c0_45] : memref<1x8x128xf32, #tpu.memory_space<vmem>>, vector<1x8x128xf32>
    %100 = vector.shape_cast %99 : vector<1x8x128xf32> to vector<8x128xf32>
    %101 = vector.shape_cast %98 : vector<8x128xf32> to vector<1x8x128xf32>
    tpu.vector_store %arg5[%c0_43, %c0_44, %c0_45], %101 {strides = array<i32>} : memref<1x8x128xf32, #tpu.memory_space<vmem>>, vector<1x8x128xf32>,
    %102 = vector.shape_cast %96 : vector<1x128xf32> to vector<1x128xf32>
    %103 = vector.broadcast %102 : vector<1x128xf32> to vector<8x128xf32>
    %c0_46 = arith.constant 0 : index
    %c0_47 = arith.constant 0 : index
    %c0_48 = arith.constant 0 : index
    %104 = vector.load %arg6[%c0_46, %c0_47, %c0_48] : memref<1x8x128xf32, #tpu.memory_space<vmem>>, vector<1x8x128xf32>
    %105 = vector.shape_cast %104 : vector<1x8x128xf32> to vector<8x128xf32>
    %106 = vector.shape_cast %103 : vector<8x128xf32> to vector<1x8x128xf32>
    tpu.vector_store %arg6[%c0_46, %c0_47, %c0_48], %106 {strides = array<i32>} : memref<1x8x128xf32, #tpu.memory_space<vmem>>, vector<1x8x128xf32>,
    return
  }
  func.func @transform_0(%arg0: i32) -> (i32, i32, i32, i32) {
    %c0_i32 = arith.constant 0 : i32
    %c0_i32_0 = arith.constant 0 : i32
    %c0_i32_1 = arith.constant 0 : i32
    %c0_i32_2 = arith.constant 0 : i32
    return %arg0, %c0_i32, %c0_i32_0, %c0_i32_1 : i32, i32, i32, i32
  }
  func.func @transform_1(%arg0: i32) -> (i32, i32) {
    %c0_i32 = arith.constant 0 : i32
    %c0_i32_0 = arith.constant 0 : i32
    %c0_i32_1 = arith.constant 0 : i32
    return %c0_i32, %c0_i32_0 : i32, i32
  }
  func.func @transform_2(%arg0: i32) -> (i32, i32, i32) {
    %c0_i32 = arith.constant 0 : i32
    %c0_i32_0 = arith.constant 0 : i32
    %c0_i32_1 = arith.constant 0 : i32
    %c0_i32_2 = arith.constant 0 : i32
    return %c0_i32, %c0_i32_0, %c0_i32_1 : i32, i32, i32
  }
  func.func @transform_3(%arg0: i32) -> (i32, i32, i32) {
    %c0_i32 = arith.constant 0 : i32
    %c0_i32_0 = arith.constant 0 : i32
    %c0_i32_1 = arith.constant 0 : i32
    return %arg0, %c0_i32, %c0_i32_0 : i32, i32, i32
  }
  func.func @transform_4(%arg0: i32) -> (i32, i32, i32) {
    %c0_i32 = arith.constant 0 : i32
    %c0_i32_0 = arith.constant 0 : i32
    %c0_i32_1 = arith.constant 0 : i32
    return %arg0, %c0_i32, %c0_i32_0 : i32, i32, i32
  }
  func.func @transform_5(%arg0: i32) -> (i32, i32, i32) {
    %c0_i32 = arith.constant 0 : i32
    %c0_i32_0 = arith.constant 0 : i32
    %c0_i32_1 = arith.constant 0 : i32
    return %arg0, %c0_i32, %c0_i32_0 : i32, i32, i32
  }
}

module attributes {stable_mosaic.version = 11 : i64} {
  func.func @finalize_kernel(%arg0: i32, %arg1: memref<256x128xf32, #tpu.memory_space<vmem>>, %arg2: memref<256x128xf32, #tpu.memory_space<vmem>>, %arg3: memref<2x128xf32, #tpu.memory_space<vmem>>, %arg4: memref<256x128xf32, #tpu.memory_space<vmem>>) attributes {dimension_semantics = [#tpu.dimension_semantics<parallel>], iteration_bounds = array<i64: 2>, scalar_prefetch = 0 : i64, scratch_operands = 0 : i64, tpu.core_type = #tpu.core_type<tc>, window_params = [{transform_indices = @transform_0, window_bounds = array<i64: 256, 128>}, {transform_indices = @transform_1, window_bounds = array<i64: 256, 128>}, {pipeline_mode = #tpu.pipeline_mode<synchronous>, transform_indices = @transform_2, window_bounds = array<i64: 2, 128>}, {transform_indices = @transform_3, window_bounds = array<i64: 256, 128>}]} {
    %c0 = arith.constant 0 : index
    %c0_0 = arith.constant 0 : index
    %0 = vector.load %arg3[%c0, %c0_0] : memref<2x128xf32, #tpu.memory_space<vmem>>, vector<1x128xf32>
    %c1 = arith.constant 1 : index
    %c0_1 = arith.constant 0 : index
    %1 = vector.load %arg3[%c1, %c0_1] : memref<2x128xf32, #tpu.memory_space<vmem>>, vector<1x128xf32>
    %c0_2 = arith.constant 0 : index
    %c0_3 = arith.constant 0 : index
    %2 = vector.load %arg1[%c0_2, %c0_3] : memref<256x128xf32, #tpu.memory_space<vmem>>, vector<256x128xf32>
    %3 = vector.broadcast %0 : vector<1x128xf32> to vector<256x128xf32>
    %4 = arith.mulf %2, %3 : vector<256x128xf32>
    %5 = vector.broadcast %1 : vector<1x128xf32> to vector<256x128xf32>
    %6 = arith.addf %4, %5 : vector<256x128xf32>
    %cst = arith.constant 0.000000e+00 : f32
    %7 = vector.broadcast %cst : f32 to vector<256x128xf32>
    %8 = arith.maximumf %6, %7 : vector<256x128xf32>
    %c0_4 = arith.constant 0 : index
    %c0_5 = arith.constant 0 : index
    %9 = vector.load %arg2[%c0_4, %c0_5] : memref<256x128xf32, #tpu.memory_space<vmem>>, vector<256x128xf32>
    %10 = arith.addf %9, %8 : vector<256x128xf32>
    %cst_6 = arith.constant 0.000000e+00 : f32
    %11 = vector.broadcast %cst_6 : f32 to vector<256x128xf32>
    %12 = arith.maximumf %10, %11 : vector<256x128xf32>
    %c0_7 = arith.constant 0 : index
    %c0_8 = arith.constant 0 : index
    %13 = vector.load %arg4[%c0_7, %c0_8] : memref<256x128xf32, #tpu.memory_space<vmem>>, vector<256x128xf32>
    tpu.vector_store %arg4[%c0_7, %c0_8], %12 {strides = array<i32>} : memref<256x128xf32, #tpu.memory_space<vmem>>, vector<256x128xf32>,
    return
  }
  func.func @transform_0(%arg0: i32) -> (i32, i32) {
    %c0_i32 = arith.constant 0 : i32
    %c0_i32_0 = arith.constant 0 : i32
    return %arg0, %c0_i32 : i32, i32
  }
  func.func @transform_1(%arg0: i32) -> (i32, i32) {
    %c0_i32 = arith.constant 0 : i32
    %c0_i32_0 = arith.constant 0 : i32
    return %arg0, %c0_i32 : i32, i32
  }
  func.func @transform_2(%arg0: i32) -> (i32, i32) {
    %c0_i32 = arith.constant 0 : i32
    %c0_i32_0 = arith.constant 0 : i32
    %c0_i32_1 = arith.constant 0 : i32
    return %c0_i32, %c0_i32_0 : i32, i32
  }
  func.func @transform_3(%arg0: i32) -> (i32, i32) {
    %c0_i32 = arith.constant 0 : i32
    %c0_i32_0 = arith.constant 0 : i32
    return %arg0, %c0_i32 : i32, i32
  }
}

</mosaic_0001>

<llo_original>
// kernel: block_forward_pallas.4
$region0: #{block_forward_pallas.4}
  #allocation0 [shape = 'u32[]', space=smem, size = 0x4, offset = 0x4, fixed_abs, tag = 'smem constant byte address 0x4 - core index']
  #allocation1 [shape = 'u32[144,128]{1,0:T(1,128)}', space=vmem, size = 0x12000, scoped, tag = 'internal scratch']
  %s0 = inlined_call_operand.vmem [shape: bf16[512,128], index: 0, kind: input, shape index: {}]
  %s1 = inlined_call_operand.vmem [shape: bf16[128,128], index: 1, kind: input, shape index: {}]
  %s2 = inlined_call_operand.vmem [shape: f32[512,128], index: 2, kind: output, shape index: {0}]
  %s3 = inlined_call_operand.vmem [shape: f32[2,8,128], index: 3, kind: output, shape index: {1}]
  %s4 = inlined_call_operand.vmem [shape: f32[2,8,128], index: 4, kind: output, shape index: {2}]
  %5 = xla_tuple %s2, %s3, %s4
  %s6 = sld [smem:[#allocation0]]
  $region57: #{block_forward_pallas.4} parent=0
    _
  %s8 = ssub.s32 1, %s6
  %s9 = scalar_select 0, %s8, %s6
  loop: start=0, step=1, limit=4
  $region2: #{block_forward_pallas.4} parent=0 // loop_pre_header
    _
  $region3: #{block_forward_pallas.4} parent=0 // loop_header
    %s11 = sphi 0, %s15
    %p12 = scmp.ge.s32.totalorder %s11, 4
    %s21 = sphi 0, %s23
    %s24 = sphi 0, %s21
    %s25 = sphi 0, %s24
    %s41 = sphi 0, %s25
    %s45 = sphi 0, %s45
    %s47 = sphi 0, %s45
    %s48 = sphi 0, %s47
    %s62 = sphi 0, %s48
    %s68 = sphi 0, %s70
    %s71 = sphi 0, %s68
    %s72 = sphi 0, %s71
    %s88 = sphi 0, %s72
    %s94 = sphi 0, %s96
    %s97 = sphi 0, %s94
    %s98 = sphi 0, %s97
    %s114 = sphi 0, %s98
    %s120 = sphi 0, %s122
    %s123 = sphi 0, %s120
    %s124 = sphi 0, %s123
    %s140 = sphi 0, %s124
  $region4: #{block_forward_pallas.4} parent=0 // loop_header_branch
    %14 = sbr.rel (%p12) target = $region8
  $region5: #{block_forward_pallas.4} parent=0 // loop_body
    %s16 = ssub.s32 %s11, 1
    %s17 = ssub.s32 %s11, 2
    %s18 = sadd.s32 %s11, 1
    %s19 = ssub.s32 %s11, %s18
    %p20 = scmp.eq.s32.totalorder %s19, 0
    %s22 = sadd.s32 %s21, 1
    %s23 = scalar_select %p20, %s21, %s22
    %p26 = pneg %p20
    %p27 = scmp.eq.s32.totalorder %s11, 1
    %p28 = por %p26, %p27
    %p29 = scmp.ne.s32.totalorder %s21, %s24
    %p30 = scmp.eq.s32.totalorder %s11, 0
    %p31 = por %p29, %p30
    %p32 = scmp.ne.s32.totalorder %s21, %s24
    %p33 = scmp.eq.s32.totalorder %s16, 1
    %p34 = por %p32, %p33
    %p35 = scmp.ne.s32.totalorder %s24, %s25
    %p36 = scmp.eq.s32.totalorder %s16, 0
    %p37 = por %p35, %p36
    %p38 = scmp.ne.s32.totalorder %s24, %s25
    %p39 = scmp.eq.s32.totalorder %s17, 1
    %p40 = por %p38, %p39
    %p42 = scmp.ne.s32.totalorder %s25, %s41
    %p43 = scmp.eq.s32.totalorder %s17, 0
    %p44 = por %p42, %p43
    %s46 = sadd.s32 %s45, 1
    %p49 = scmp.eq.s32.totalorder %s11, 1
    %p50 = scmp.ne.s32.totalorder %s45, %s47
    %p51 = scmp.eq.s32.totalorder %s11, 0
    %p52 = por %p50, %p51
    %p53 = scmp.ne.s32.totalorder %s45, %s47
    %p54 = scmp.eq.s32.totalorder %s16, 1
    %p55 = por %p53, %p54
    %p56 = scmp.ne.s32.totalorder %s47, %s48
    %p57 = scmp.eq.s32.totalorder %s16, 0
    %p58 = por %p56, %p57
    %p59 = scmp.ne.s32.totalorder %s47, %s48
    %p60 = scmp.eq.s32.totalorder %s17, 1
    %p61 = por %p59, %p60
    %p63 = scmp.ne.s32.totalorder %s48, %s62
    %p64 = scmp.eq.s32.totalorder %s17, 0
    %p65 = por %p63, %p64
    %s66 = ssub.s32 %s11, %s18
    %p67 = scmp.eq.s32.totalorder %s66, 0
    %s69 = sadd.s32 %s68, 1
    %s70 = scalar_select %p67, %s68, %s69
    %p73 = pneg %p67
    %p74 = scmp.eq.s32.totalorder %s11, 1
    %p75 = por %p73, %p74
    %p76 = scmp.ne.s32.totalorder %s68, %s71
    %p77 = scmp.eq.s32.totalorder %s11, 0
    %p78 = por %p76, %p77
    %p79 = scmp.ne.s32.totalorder %s68, %s71
    %p80 = scmp.eq.s32.totalorder %s16, 1
    %p81 = por %p79, %p80
    %p82 = scmp.ne.s32.totalorder %s71, %s72
    %p83 = scmp.eq.s32.totalorder %s16, 0
    %p84 = por %p82, %p83
    %p85 = scmp.ne.s32.totalorder %s71, %s72
    %p86 = scmp.eq.s32.totalorder %s17, 1
    %p87 = por %p85, %p86
    %p89 = scmp.ne.s32.totalorder %s72, %s88
    %p90 = scmp.eq.s32.totalorder %s17, 0
    %p91 = por %p89, %p90
    %s92 = ssub.s32 %s11, %s18
    %p93 = scmp.eq.s32.totalorder %s92, 0
    %s95 = sadd.s32 %s94, 1
    %s96 = scalar_select %p93, %s94, %s95
    %p99 = pneg %p93
    %p100 = scmp.eq.s32.totalorder %s11, 1
    %p101 = por %p99, %p100
    %p102 = scmp.ne.s32.totalorder %s94, %s97
    %p103 = scmp.eq.s32.totalorder %s11, 0
    %p104 = por %p102, %p103
    %p105 = scmp.ne.s32.totalorder %s94, %s97
    %p106 = scmp.eq.s32.totalorder %s16, 1
    %p107 = por %p105, %p106
    %p108 = scmp.ne.s32.totalorder %s97, %s98
    %p109 = scmp.eq.s32.totalorder %s16, 0
    %p110 = por %p108, %p109
    %p111 = scmp.ne.s32.totalorder %s97, %s98
    %p112 = scmp.eq.s32.totalorder %s17, 1
    %p113 = por %p111, %p112
    %p115 = scmp.ne.s32.totalorder %s98, %s114
    %p116 = scmp.eq.s32.totalorder %s17, 0
    %p117 = por %p115, %p116
    %s118 = ssub.s32 %s11, %s18
    %p119 = scmp.eq.s32.totalorder %s118, 0
    %s121 = sadd.s32 %s120, 1
    %s122 = scalar_select %p119, %s120, %s121
    %p125 = pneg %p119
    %p126 = scmp.eq.s32.totalorder %s11, 1
    %p127 = por %p125, %p126
    %p128 = scmp.ne.s32.totalorder %s120, %s123
    %p129 = scmp.eq.s32.totalorder %s11, 0
    %p130 = por %p128, %p129
    %p131 = scmp.ne.s32.totalorder %s120, %s123
    %p132 = scmp.eq.s32.totalorder %s16, 1
    %p133 = por %p131, %p132
    %p134 = scmp.ne.s32.totalorder %s123, %s124
    %p135 = scmp.eq.s32.totalorder %s16, 0
    %p136 = por %p134, %p135
    %p137 = scmp.ne.s32.totalorder %s123, %s124
    %p138 = scmp.eq.s32.totalorder %s17, 1
    %p139 = por %p137, %p138
    %p141 = scmp.ne.s32.totalorder %s124, %s140
    %p142 = scmp.eq.s32.totalorder %s17, 0
    %p143 = por %p141, %p142
    %p144 = scmp.le.s32.totalorder 1, %s11
    %p145 = scmp.lt.s32.totalorder %s11, 3
    %p146 = pnand %p144, %p145
    %p147 = pneg %p146
    // Predicated region
    $region9: #{block_forward_pallas.4} parent=5 // pred_check
      _
    $region10: #{block_forward_pallas.4} parent=5 // pred_check_branch
      %149 = sbr.rel (%p146) target = $region12
    $region11: #{block_forward_pallas.4} parent=5 // pred_region
      %s150 = ssub.s32 %s11, 1
      // Predicated region
      $region13: #{block_forward_pallas.4} parent=11 // pred_check
        %p151 = pneg %p58
      $region14: #{block_forward_pallas.4} parent=11 // pred_check_branch
        %153 = sbr.rel (%p151) target = $region16
      $region15: #{block_forward_pallas.4} parent=11 // pred_region
        _
      $region16: #{block_forward_pallas.4} parent=11 // pred_fallthru
        _
    $region12: #{block_forward_pallas.4} parent=5 // pred_fallthru
      _
    %p154 = scmp.lt.s32.totalorder %s11, 2
    // Predicated region
    $region17: #{block_forward_pallas.4} parent=5 // pred_check
      %p155 = pneg %p154
    $region18: #{block_forward_pallas.4} parent=5 // pred_check_branch
      %157 = sbr.rel (%p155) target = $region20
    $region19: #{block_forward_pallas.4} parent=5 // pred_region
      // Predicated region
      $region21: #{block_forward_pallas.4} parent=19 // pred_check
        %p158 = pneg %p31
      $region22: #{block_forward_pallas.4} parent=19 // pred_check_branch
        %160 = sbr.rel (%p158) target = $region24
      $region23: #{block_forward_pallas.4} parent=19 // pred_region
        %s161 = smul.u32 32, %s11
        %p162 = scmp.lt.s32.totalorder %s161, 63
        %s163 = scalar_select %p162, %s161, 63
        %s164 = smul.addr %s163, 4
        %s165 = scalar_lea.vmem %s0, %s164
        %s166 = smul.u32 32, %s11
      $region24: #{block_forward_pallas.4} parent=19 // pred_fallthru
        _
    $region20: #{block_forward_pallas.4} parent=5 // pred_fallthru
      _
    %p167 = scmp.le.s32.totalorder 1, %s11
    %p168 = scmp.lt.s32.totalorder %s11, 3
    %p169 = pnand %p167, %p168
    %p170 = pneg %p169
    // Predicated region
    $region25: #{block_forward_pallas.4} parent=5 // pred_check
      _
    $region26: #{block_forward_pallas.4} parent=5 // pred_check_branch
      %172 = sbr.rel (%p169) target = $region28
    $region27: #{block_forward_pallas.4} parent=5 // pred_region
      %s173 = ssub.s32 %s11, 1
      %s174 = smul.u32 32, %s16
      %p175 = scmp.lt.s32.totalorder %s174, 63
      %s176 = scalar_select %p175, %s174, 63
      %s177 = smul.addr %s176, 4
      %s178 = scalar_lea.vmem %s0, %s177
      %p179 = pneg %p37
      %p180 = pneg %p34
      %p181 = pneg %p58
      %p182 = pneg %p55
      %p183 = pneg %p84
      %p184 = pneg %p81
      %s185 = smul.u32 32, %s16
      %p186 = scmp.lt.s32.totalorder %s185, 63
      %s187 = scalar_select %p186, %s185, 63
      %s188 = smul.addr %s187, 8
      %s189 = scalar_lea.vmem %s2, %s188
      %p190 = pneg %p110
      %p191 = pneg %p107
      %p192 = scmp.lt.s32.totalorder %s16, 1
      %s193 = scalar_select %p192, %s16, 1
      %s194 = smul.addr %s193, 8
      %s195 = scalar_lea.vmem %s3, %s194
      %p196 = pneg %p136
      %p197 = pneg %p133
      %p198 = scmp.lt.s32.totalorder %s16, 1
      %s199 = scalar_select %p198, %s16, 1
      %s200 = smul.addr %s199, 8
      %s201 = scalar_lea.vmem %s4, %s200
      %s202 = smul.u32 32, %s16
      %p203 = scmp.lt.s32.totalorder %s202, 63
      %s204 = scalar_select %p203, %s202, 63
      %s205 = smul.addr %s204, 4
      %s206 = scalar_lea.vmem %s0, %s205
      %s207 = smul.u32 32, %s16
      %s208 = smul.u32 32, %s16
      %p209 = scmp.lt.s32.totalorder %s208, 63
      %s210 = scalar_select %p209, %s208, 63
      %s211 = smul.addr %s210, 8
      %s212 = scalar_lea.vmem %s2, %s211
      %s213 = smul.u32 32, %s16
      %p214 = scmp.lt.s32.totalorder %s16, 1
      %s215 = scalar_select %p214, %s16, 1
      %s216 = smul.addr %s215, 8
      %s217 = scalar_lea.vmem %s3, %s216
      %p218 = scmp.lt.s32.totalorder %s16, 1
      %s219 = scalar_select %p218, %s16, 1
      %s220 = smul.addr %s219, 8
      %s221 = scalar_lea.vmem %s4, %s220
      %v223 = vld [vmem:[%s206] sm:$0xf]
      %v224 = vld [vmem:[%s206 + $0x4] sm:$0xf]
      %v225 = vld [vmem:[%s206 + $0x8] sm:$0xf]
      %v226 = vld [vmem:[%s206 + $0xc] sm:$0xf]
      %v227 = vld [vmem:[%s206 + $0x10] sm:$0xf]
      %v228 = vld [vmem:[%s206 + $0x14] sm:$0xf]
      %v229 = vld [vmem:[%s206 + $0x18] sm:$0xf]
      %v230 = vld [vmem:[%s206 + $0x1c] sm:$0xf]
      %v231 = vld [vmem:[%s206 + $0x20] sm:$0xf]
      %v232 = vld [vmem:[%s206 + $0x24] sm:$0xf]
      %v233 = vld [vmem:[%s206 + $0x28] sm:$0xf]
      %v234 = vld [vmem:[%s206 + $0x2c] sm:$0xf]
      %v235 = vld [vmem:[%s206 + $0x30] sm:$0xf]
      %v236 = vld [vmem:[%s206 + $0x34] sm:$0xf]
      %v237 = vld [vmem:[%s206 + $0x38] sm:$0xf]
      %v238 = vld [vmem:[%s206 + $0x3c] sm:$0xf]
      %v239 = vld [vmem:[%s206 + $0x40] sm:$0xf]
      %v240 = vld [vmem:[%s206 + $0x44] sm:$0xf]
      %v241 = vld [vmem:[%s206 + $0x48] sm:$0xf]
      %v242 = vld [vmem:[%s206 + $0x4c] sm:$0xf]
      %v243 = vld [vmem:[%s206 + $0x50] sm:$0xf]
      %v244 = vld [vmem:[%s206 + $0x54] sm:$0xf]
      %v245 = vld [vmem:[%s206 + $0x58] sm:$0xf]
      %v246 = vld [vmem:[%s206 + $0x5c] sm:$0xf]
      %v247 = vld [vmem:[%s206 + $0x60] sm:$0xf]
      %v248 = vld [vmem:[%s206 + $0x64] sm:$0xf]
      %v249 = vld [vmem:[%s206 + $0x68] sm:$0xf]
      %v250 = vld [vmem:[%s206 + $0x6c] sm:$0xf]
      %v251 = vld [vmem:[%s206 + $0x70] sm:$0xf]
      %v252 = vld [vmem:[%s206 + $0x74] sm:$0xf]
      %v253 = vld [vmem:[%s206 + $0x78] sm:$0xf]
      %v254 = vld [vmem:[%s206 + $0x7c] sm:$0xf]
      %v255 = vld [vmem:[%s1] sm:$0xf]
      %v256 = vld [vmem:[%s1 + $0x4] sm:$0xf]
      %v257 = vld [vmem:[%s1 + $0x8] sm:$0xf]
      %v258 = vld [vmem:[%s1 + $0xc] sm:$0xf]
      %v259 = vld [vmem:[%s1 + $0x10] sm:$0xf]
      %v260 = vld [vmem:[%s1 + $0x14] sm:$0xf]
      %v261 = vld [vmem:[%s1 + $0x18] sm:$0xf]
      %v262 = vld [vmem:[%s1 + $0x1c] sm:$0xf]
      %v263 = vld [vmem:[%s1 + $0x20] sm:$0xf]
      %v264 = vld [vmem:[%s1 + $0x24] sm:$0xf]
      %v265 = vld [vmem:[%s1 + $0x28] sm:$0xf]
      %v266 = vld [vmem:[%s1 + $0x2c] sm:$0xf]
      %v267 = vld [vmem:[%s1 + $0x30] sm:$0xf]
      %v268 = vld [vmem:[%s1 + $0x34] sm:$0xf]
      %v269 = vld [vmem:[%s1 + $0x38] sm:$0xf]
      %v270 = vld [vmem:[%s1 + $0x3c] sm:$0xf]
      %v303 = vunpack.c.l.b16 %v223
      %v304 = vunpack.c.l.b16 %v224
      %v305 = vunpack.c.l.b16 %v225
      %v306 = vunpack.c.l.b16 %v226
      %v307 = vunpack.c.l.b16 %v227
      %v308 = vunpack.c.l.b16 %v228
      %v309 = vunpack.c.l.b16 %v229
      %v310 = vunpack.c.l.b16 %v230
      %v311 = vunpack.c.l.b16 %v231
      %v312 = vunpack.c.l.b16 %v232
      %v313 = vunpack.c.l.b16 %v233
      %v314 = vunpack.c.l.b16 %v234
      %v315 = vunpack.c.l.b16 %v235
      %v316 = vunpack.c.l.b16 %v236
      %v317 = vunpack.c.l.b16 %v237
      %v318 = vunpack.c.l.b16 %v238
      %v319 = vunpack.c.l.b16 %v239
      %v320 = vunpack.c.l.b16 %v240
      %v321 = vunpack.c.l.b16 %v241
      %v322 = vunpack.c.l.b16 %v242
      %v323 = vunpack.c.l.b16 %v243
      %v324 = vunpack.c.l.b16 %v244
      %v325 = vunpack.c.l.b16 %v245
      %v326 = vunpack.c.l.b16 %v246
      %v327 = vunpack.c.l.b16 %v247
      %v328 = vunpack.c.l.b16 %v248
      %v329 = vunpack.c.l.b16 %v249
      %v330 = vunpack.c.l.b16 %v250
      %v331 = vunpack.c.l.b16 %v251
      %v332 = vunpack.c.l.b16 %v252
      %v333 = vunpack.c.l.b16 %v253
      %v334 = vunpack.c.l.b16 %v254
      %v335 = vpack.c.b16 %v304, %v303
      %v336 = vpack.c.b16 %v306, %v305
      %v337 = vpack.c.b16 %v308, %v307
      %v338 = vpack.c.b16 %v310, %v309
      %v339 = vpack.c.b16 %v312, %v311
      %v340 = vpack.c.b16 %v314, %v313
      %v341 = vpack.c.b16 %v316, %v315
      %v342 = vpack.c.b16 %v318, %v317
      %v343 = vpack.c.b16 %v320, %v319
      %v344 = vpack.c.b16 %v322, %v321
      %v345 = vpack.c.b16 %v324, %v323
      %v346 = vpack.c.b16 %v326, %v325
      %v347 = vpack.c.b16 %v328, %v327
      %v348 = vpack.c.b16 %v330, %v329
      %v349 = vpack.c.b16 %v332, %v331
      %v350 = vpack.c.b16 %v334, %v333
      %v383 = vunpack.c.l.b16 %v255
      %v384 = vunpack.c.l.b16 %v256
      %v385 = vunpack.c.l.b16 %v257
      %v386 = vunpack.c.l.b16 %v258
      %v387 = vunpack.c.l.b16 %v259
      %v388 = vunpack.c.l.b16 %v260
      %v389 = vunpack.c.l.b16 %v261
      %v390 = vunpack.c.l.b16 %v262
      %v391 = vunpack.c.l.b16 %v263
      %v392 = vunpack.c.l.b16 %v264
      %v393 = vunpack.c.l.b16 %v265
      %v394 = vunpack.c.l.b16 %v266
      %v395 = vunpack.c.l.b16 %v267
      %v396 = vunpack.c.l.b16 %v268
      %v397 = vunpack.c.l.b16 %v269
      %v398 = vunpack.c.l.b16 %v270
      %v399 = vpack.c.b16 %v384, %v383
      %v400 = vpack.c.b16 %v386, %v385
      %v401 = vpack.c.b16 %v388, %v387
      %v402 = vpack.c.b16 %v390, %v389
      %v403 = vpack.c.b16 %v392, %v391
      %v404 = vpack.c.b16 %v394, %v393
      %v405 = vpack.c.b16 %v396, %v395
      %v406 = vpack.c.b16 %v398, %v397
      %415 = vmatprep.subr.bf16.mxu0 0
      %416 = vmatpush1.bf16.msra.mxu0 %v399
      %417 = vmatprep.subr.bf16.mxu0 0
      %418 = vmatpush1.bf16.msra.mxu0 %v400
      %419 = vmatprep.subr.bf16.mxu0 0
      %420 = vmatpush1.bf16.msra.mxu0 %v401
      %421 = vmatprep.subr.bf16.mxu0 0
      %422 = vmatpush1.bf16.msra.mxu0 %v402
      %423 = vmatprep.subr.bf16.mxu0 0
      %424 = vmatpush1.bf16.msra.mxu0 %v403
      %425 = vmatprep.subr.bf16.mxu0 0
      %426 = vmatpush1.bf16.msra.mxu0 %v404
      %427 = vmatprep.subr.bf16.mxu0 0
      %428 = vmatpush1.bf16.msra.mxu0 %v405
      %429 = vmatprep.subr.bf16.mxu0 0
      %430 = vmatpush1.bf16.msra.mxu0 %v406
      %431 = vmatprep.subr.bf16.mxu0 0
      %432 = vmatpush1.bf16.msra.mxu0 0
      %433 = vmatprep.subr.bf16.mxu0 0
      %434 = vmatpush1.bf16.msra.mxu0 0
      %435 = vmatprep.subr.bf16.mxu0 0
      %436 = vmatpush1.bf16.msra.mxu0 0
      %437 = vmatprep.subr.bf16.mxu0 0
      %438 = vmatpush1.bf16.msra.mxu0 0
      %439 = vmatprep.subr.bf16.mxu0 0
      %440 = vmatpush1.bf16.msra.mxu0 0
      %441 = vmatprep.subr.bf16.mxu0 0
      %442 = vmatpush1.bf16.msra.mxu0 0
      %443 = vmatprep.subr.bf16.mxu0 0
      %444 = vmatpush1.bf16.msra.mxu0 0
      %445 = vmatprep.subr.bf16.mxu0 0
      %446 = vmatpush1.bf16.msra.mxu0 0
      %447 = vmatprep.mubr.bf16.mxu0 0
      %448 = vmatmul.mubr.bf16.gmra.mrb[0].mxu0 %v335
      %v449 = vpop.f32.mrb[0].mxu0
      %v450 = vadd.f32 0.0, %v449
      %v451 = vpop.f32.mrb[0].mxu0
      %v452 = vpop.f32.mrb[0].mxu0
      %v453 = vadd.f32 0.0, %v452
      %v454 = vpop.f32.mrb[0].mxu0
      %455 = vmatprep.mubr.bf16.mxu0 0
      %456 = vmatmul.mubr.bf16.gmra.mrb[0].mxu0 %v336
      %v457 = vpop.f32.mrb[0].mxu0
      %v458 = vadd.f32 0.0, %v457
      %v459 = vpop.f32.mrb[0].mxu0
      %v460 = vpop.f32.mrb[0].mxu0
      %v461 = vadd.f32 0.0, %v460
      %v462 = vpop.f32.mrb[0].mxu0
      %463 = vmatprep.mubr.bf16.mxu0 0
      %464 = vmatmul.mubr.bf16.gmra.mrb[0].mxu0 %v337
      %v465 = vpop.f32.mrb[0].mxu0
      %v466 = vadd.f32 0.0, %v465
      %v467 = vpop.f32.mrb[0].mxu0
      %v468 = vpop.f32.mrb[0].mxu0
      %v469 = vadd.f32 0.0, %v468
      %v470 = vpop.f32.mrb[0].mxu0
      %471 = vmatprep.mubr.bf16.mxu0 0
      %472 = vmatmul.mubr.bf16.gmra.mrb[0].mxu0 %v338
      %v473 = vpop.f32.mrb[0].mxu0
      %v474 = vadd.f32 0.0, %v473
      %v475 = vpop.f32.mrb[0].mxu0
      %v476 = vpop.f32.mrb[0].mxu0
      %v477 = vadd.f32 0.0, %v476
      %v478 = vpop.f32.mrb[0].mxu0
      %479 = vmatprep.mubr.bf16.mxu0 0
      %480 = vmatmul.mubr.bf16.gmra.mrb[0].mxu0 %v339
      %v481 = vpop.f32.mrb[0].mxu0
      %v482 = vadd.f32 0.0, %v481
      %v483 = vpop.f32.mrb[0].mxu0
      %v484 = vpop.f32.mrb[0].mxu0
      %v485 = vadd.f32 0.0, %v484
      %v486 = vpop.f32.mrb[0].mxu0
      %487 = vmatprep.mubr.bf16.mxu0 0
      %488 = vmatmul.mubr.bf16.gmra.mrb[0].mxu0 %v340
      %v489 = vpop.f32.mrb[0].mxu0
      %v490 = vadd.f32 0.0, %v489
      %v491 = vpop.f32.mrb[0].mxu0
      %v492 = vpop.f32.mrb[0].mxu0
      %v493 = vadd.f32 0.0, %v492
      %v494 = vpop.f32.mrb[0].mxu0
      %495 = vmatprep.mubr.bf16.mxu0 0
      %496 = vmatmul.mubr.bf16.gmra.mrb[0].mxu0 %v341
      %v497 = vpop.f32.mrb[0].mxu0
      %v498 = vadd.f32 0.0, %v497
      %v499 = vpop.f32.mrb[0].mxu0
      %v500 = vpop.f32.mrb[0].mxu0
      %v501 = vadd.f32 0.0, %v500
      %v502 = vpop.f32.mrb[0].mxu0
      %503 = vmatprep.mubr.bf16.mxu0 0
      %504 = vmatmul.mubr.bf16.gmra.mrb[0].mxu0 %v342
      %v505 = vpop.f32.mrb[0].mxu0
      %v506 = vadd.f32 0.0, %v505
      %v507 = vpop.f32.mrb[0].mxu0
      %v508 = vpop.f32.mrb[0].mxu0
      %v509 = vadd.f32 0.0, %v508
      %v510 = vpop.f32.mrb[0].mxu0
      %511 = vmatprep.mubr.bf16.mxu0 0
      %512 = vmatmul.mubr.bf16.gmra.mrb[0].mxu0 %v343
      %v513 = vpop.f32.mrb[0].mxu0
      %v514 = vadd.f32 0.0, %v513
      %v515 = vpop.f32.mrb[0].mxu0
      %v516 = vpop.f32.mrb[0].mxu0
      %v517 = vadd.f32 0.0, %v516
      %v518 = vpop.f32.mrb[0].mxu0
      %519 = vmatprep.mubr.bf16.mxu0 0
      %520 = vmatmul.mubr.bf16.gmra.mrb[0].mxu0 %v344
      %v521 = vpop.f32.mrb[0].mxu0
      %v522 = vadd.f32 0.0, %v521
      %v523 = vpop.f32.mrb[0].mxu0
      %v524 = vpop.f32.mrb[0].mxu0
      %v525 = vadd.f32 0.0, %v524
      %v526 = vpop.f32.mrb[0].mxu0
      %527 = vmatprep.mubr.bf16.mxu0 0
      %528 = vmatmul.mubr.bf16.gmra.mrb[0].mxu0 %v345
      %v529 = vpop.f32.mrb[0].mxu0
      %v530 = vadd.f32 0.0, %v529
      %v531 = vpop.f32.mrb[0].mxu0
      %v532 = vpop.f32.mrb[0].mxu0
      %v533 = vadd.f32 0.0, %v532
      %v534 = vpop.f32.mrb[0].mxu0
      %535 = vmatprep.mubr.bf16.mxu0 0
      %536 = vmatmul.mubr.bf16.gmra.mrb[0].mxu0 %v346
      %v537 = vpop.f32.mrb[0].mxu0
      %v538 = vadd.f32 0.0, %v537
      %v539 = vpop.f32.mrb[0].mxu0
      %v540 = vpop.f32.mrb[0].mxu0
      %v541 = vadd.f32 0.0, %v540
      %v542 = vpop.f32.mrb[0].mxu0
      %543 = vmatprep.mubr.bf16.mxu0 0
      %544 = vmatmul.mubr.bf16.gmra.mrb[0].mxu0 %v347
      %v545 = vpop.f32.mrb[0].mxu0
      %v546 = vadd.f32 0.0, %v545
      %v547 = vpop.f32.mrb[0].mxu0
      %v548 = vpop.f32.mrb[0].mxu0
      %v549 = vadd.f32 0.0, %v548
      %v550 = vpop.f32.mrb[0].mxu0
      %551 = vmatprep.mubr.bf16.mxu0 0
      %552 = vmatmul.mubr.bf16.gmra.mrb[0].mxu0 %v348
      %v553 = vpop.f32.mrb[0].mxu0
      %v554 = vadd.f32 0.0, %v553
      %v555 = vpop.f32.mrb[0].mxu0
      %v556 = vpop.f32.mrb[0].mxu0
      %v557 = vadd.f32 0.0, %v556
      %v558 = vpop.f32.mrb[0].mxu0
      %559 = vmatprep.mubr.bf16.mxu0 0
      %560 = vmatmul.mubr.bf16.gmra.mrb[0].mxu0 %v349
      %v561 = vpop.f32.mrb[0].mxu0
      %v562 = vadd.f32 0.0, %v561
      %v563 = vpop.f32.mrb[0].mxu0
      %v564 = vpop.f32.mrb[0].mxu0
      %v565 = vadd.f32 0.0, %v564
      %v566 = vpop.f32.mrb[0].mxu0
      %567 = vmatprep.mubr.bf16.mxu0 0
      %568 = vmatmul.mubr.bf16.gmra.mrb[0].mxu0 %v350
      %v569 = vpop.f32.mrb[0].mxu0
      %v570 = vadd.f32 0.0, %v569
      %v571 = vpop.f32.mrb[0].mxu0
      %v572 = vpop.f32.mrb[0].mxu0
      %v573 = vadd.f32 0.0, %v572
      %v574 = vpop.f32.mrb[0].mxu0
      %575 = vdwg.mxu0
      %576 = vst [vmem:[%s212] sm:$0xff] %v450
      %577 = vst [vmem:[%s212 + $0x8] sm:$0xff] %v453
      %578 = vst [vmem:[%s212 + $0x10] sm:$0xff] %v458
      %579 = vst [vmem:[%s212 + $0x18] sm:$0xff] %v461
      %580 = vst [vmem:[%s212 + $0x20] sm:$0xff] %v466
      %581 = vst [vmem:[%s212 + $0x28] sm:$0xff] %v469
      %582 = vst [vmem:[%s212 + $0x30] sm:$0xff] %v474
      %583 = vst [vmem:[%s212 + $0x38] sm:$0xff] %v477
      %584 = vst [vmem:[%s212 + $0x40] sm:$0xff] %v482
      %585 = vst [vmem:[%s212 + $0x48] sm:$0xff] %v485
      %586 = vst [vmem:[%s212 + $0x50] sm:$0xff] %v490
      %587 = vst [vmem:[%s212 + $0x58] sm:$0xff] %v493
      %588 = vst [vmem:[%s212 + $0x60] sm:$0xff] %v498
      %589 = vst [vmem:[%s212 + $0x68] sm:$0xff] %v501
      %590 = vst [vmem:[%s212 + $0x70] sm:$0xff] %v506
      %591 = vst [vmem:[%s212 + $0x78] sm:$0xff] %v509
      %592 = vst [vmem:[%s212 + $0x80] sm:$0xff] %v514
      %593 = vst [vmem:[%s212 + $0x88] sm:$0xff] %v517
      %594 = vst [vmem:[%s212 + $0x90] sm:$0xff] %v522
      %595 = vst [vmem:[%s212 + $0x98] sm:$0xff] %v525
      %596 = vst [vmem:[%s212 + $0xa0] sm:$0xff] %v530
      %597 = vst [vmem:[%s212 + $0xa8] sm:$0xff] %v533
      %598 = vst [vmem:[%s212 + $0xb0] sm:$0xff] %v538
      %599 = vst [vmem:[%s212 + $0xb8] sm:$0xff] %v541
      %600 = vst [vmem:[%s212 + $0xc0] sm:$0xff] %v546
      %601 = vst [vmem:[%s212 + $0xc8] sm:$0xff] %v549
      %602 = vst [vmem:[%s212 + $0xd0] sm:$0xff] %v554
      %603 = vst [vmem:[%s212 + $0xd8] sm:$0xff] %v557
      %604 = vst [vmem:[%s212 + $0xe0] sm:$0xff] %v562
      %605 = vst [vmem:[%s212 + $0xe8] sm:$0xff] %v565
      %606 = vst [vmem:[%s212 + $0xf0] sm:$0xff] %v570
      %607 = vst [vmem:[%s212 + $0xf8] sm:$0xff] %v573
      %v608 = vadd.f32 %v450, %v453
      %v609 = vadd.f32 %v608, %v458
      %v610 = vadd.f32 %v609, %v461
      %v611 = vadd.f32 %v610, %v466
      %v612 = vadd.f32 %v611, %v469
      %v613 = vadd.f32 %v612, %v474
      %v614 = vadd.f32 %v613, %v477
      %v615 = vadd.f32 %v614, %v482
      %v616 = vadd.f32 %v615, %v485
      %v617 = vadd.f32 %v616, %v490
      %v618 = vadd.f32 %v617, %v493
      %v619 = vadd.f32 %v618, %v498
      %v620 = vadd.f32 %v619, %v501
      %v621 = vadd.f32 %v620, %v506
      %v622 = vadd.f32 %v621, %v509
      %v623 = vadd.f32 %v622, %v514
      %v624 = vadd.f32 %v623, %v517
      %v625 = vadd.f32 %v624, %v522
      %v626 = vadd.f32 %v625, %v525
      %v627 = vadd.f32 %v626, %v530
      %v628 = vadd.f32 %v627, %v533
      %v629 = vadd.f32 %v628, %v538
      %v630 = vadd.f32 %v629, %v541
      %v631 = vadd.f32 %v630, %v546
      %v632 = vadd.f32 %v631, %v549
      %v633 = vadd.f32 %v632, %v554
      %v634 = vadd.f32 %v633, %v557
      %v635 = vadd.f32 %v634, %v562
      %v636 = vadd.f32 %v635, %v565
      %v637 = vadd.f32 %v636, %v570
      %v638 = vadd.f32 %v637, %v573
      %v639 = vrot.slane %v638, 4
      %v640 = vadd.f32 %v638, %v639
      %v641 = vrot.slane %v640, 2
      %v642 = vadd.f32 %v640, %v641
      %v643 = vrot.slane %v642, 1
      %v644 = vadd.f32 %v642, %v643
      %v645 = vmul.f32 %v450, %v450
      %v646 = vmul.f32 %v453, %v453
      %v647 = vmul.f32 %v458, %v458
      %v648 = vmul.f32 %v461, %v461
      %v649 = vmul.f32 %v466, %v466
      %v650 = vmul.f32 %v469, %v469
      %v651 = vmul.f32 %v474, %v474
      %v652 = vmul.f32 %v477, %v477
      %v653 = vmul.f32 %v482, %v482
      %v654 = vmul.f32 %v485, %v485
      %v655 = vmul.f32 %v490, %v490
      %v656 = vmul.f32 %v493, %v493
      %v657 = vmul.f32 %v498, %v498
      %v658 = vmul.f32 %v501, %v501
      %v659 = vmul.f32 %v506, %v506
      %v660 = vmul.f32 %v509, %v509
      %v661 = vmul.f32 %v514, %v514
      %v662 = vmul.f32 %v517, %v517
      %v663 = vmul.f32 %v522, %v522
      %v664 = vmul.f32 %v525, %v525
      %v665 = vmul.f32 %v530, %v530
      %v666 = vmul.f32 %v533, %v533
      %v667 = vmul.f32 %v538, %v538
      %v668 = vmul.f32 %v541, %v541
      %v669 = vmul.f32 %v546, %v546
      %v670 = vmul.f32 %v549, %v549
      %v671 = vmul.f32 %v554, %v554
      %v672 = vmul.f32 %v557, %v557
      %v673 = vmul.f32 %v562, %v562
      %v674 = vmul.f32 %v565, %v565
      %v675 = vmul.f32 %v570, %v570
      %v676 = vmul.f32 %v573, %v573
      %v677 = vadd.f32 %v645, %v646
      %v678 = vadd.f32 %v677, %v647
      %v679 = vadd.f32 %v678, %v648
      %v680 = vadd.f32 %v679, %v649
      %v681 = vadd.f32 %v680, %v650
      %v682 = vadd.f32 %v681, %v651
      %v683 = vadd.f32 %v682, %v652
      %v684 = vadd.f32 %v683, %v653
      %v685 = vadd.f32 %v684, %v654
      %v686 = vadd.f32 %v685, %v655
      %v687 = vadd.f32 %v686, %v656
      %v688 = vadd.f32 %v687, %v657
      %v689 = vadd.f32 %v688, %v658
      %v690 = vadd.f32 %v689, %v659
      %v691 = vadd.f32 %v690, %v660
      %v692 = vadd.f32 %v691, %v661
      %v693 = vadd.f32 %v692, %v662
      %v694 = vadd.f32 %v693, %v663
      %v695 = vadd.f32 %v694, %v664
      %v696 = vadd.f32 %v695, %v665
      %v697 = vadd.f32 %v696, %v666
      %v698 = vadd.f32 %v697, %v667
      %v699 = vadd.f32 %v698, %v668
      %v700 = vadd.f32 %v699, %v669
      %v701 = vadd.f32 %v700, %v670
      %v702 = vadd.f32 %v701, %v671
      %v703 = vadd.f32 %v702, %v672
      %v704 = vadd.f32 %v703, %v673
      %v705 = vadd.f32 %v704, %v674
      %v706 = vadd.f32 %v705, %v675
      %v707 = vadd.f32 %v706, %v676
      %v708 = vrot.slane %v707, 4
      %v709 = vadd.f32 %v707, %v708
      %v710 = vrot.slane %v709, 2
      %v711 = vadd.f32 %v709, %v710
      %v712 = vrot.slane %v711, 1
      %v713 = vadd.f32 %v711, %v712
      %714 = vst [vmem:[%s217] sm:$0xff] %v644
      %715 = vst [vmem:[%s221] sm:$0xff] %v713
      %s716 = smul.u32 32, %s16
      %p717 = scmp.lt.s32.totalorder %s716, 63
      %s718 = scalar_select %p717, %s716, 63
      %s719 = smul.addr %s718, 8
      %s720 = scalar_lea.vmem %s2, %s719
      %p721 = scmp.lt.s32.totalorder %s16, 1
      %s722 = scalar_select %p721, %s16, 1
      %s723 = smul.addr %s722, 8
      %s724 = scalar_lea.vmem %s3, %s723
      %p725 = scmp.lt.s32.totalorder %s16, 1
      %s726 = scalar_select %p725, %s16, 1
      %s727 = smul.addr %s726, 8
      %s728 = scalar_lea.vmem %s4, %s727
      // Predicated region
      $region29: #{block_forward_pallas.4} parent=27 // pred_check
        %p729 = pneg %p81
      $region30: #{block_forward_pallas.4} parent=27 // pred_check_branch
        %731 = sbr.rel (%p729) target = $region32
      $region31: #{block_forward_pallas.4} parent=27 // pred_region
        %s732 = smul.u32 32, %s16
      $region32: #{block_forward_pallas.4} parent=27 // pred_fallthru
        _
      // Predicated region
      $region33: #{block_forward_pallas.4} parent=27 // pred_check
        %p733 = pneg %p107
      $region34: #{block_forward_pallas.4} parent=27 // pred_check_branch
        %735 = sbr.rel (%p733) target = $region36
      $region35: #{block_forward_pallas.4} parent=27 // pred_region
        _
      $region36: #{block_forward_pallas.4} parent=27 // pred_fallthru
        _
      // Predicated region
      $region37: #{block_forward_pallas.4} parent=27 // pred_check
        %p736 = pneg %p133
      $region38: #{block_forward_pallas.4} parent=27 // pred_check_branch
        %738 = sbr.rel (%p736) target = $region40
      $region39: #{block_forward_pallas.4} parent=27 // pred_region
        _
      $region40: #{block_forward_pallas.4} parent=27 // pred_fallthru
        _
    $region28: #{block_forward_pallas.4} parent=5 // pred_fallthru
      _
    %p739 = scmp.le.s32.totalorder 2, %s11
    // Predicated region
    $region41: #{block_forward_pallas.4} parent=5 // pred_check
      %p740 = pneg %p739
    $region42: #{block_forward_pallas.4} parent=5 // pred_check_branch
      %742 = sbr.rel (%p740) target = $region44
    $region43: #{block_forward_pallas.4} parent=5 // pred_region
      %s743 = ssub.s32 %s11, 2
      // Predicated region
      $region45: #{block_forward_pallas.4} parent=43 // pred_check
        %p744 = pneg %p87
      $region46: #{block_forward_pallas.4} parent=43 // pred_check_branch
        %746 = sbr.rel (%p744) target = $region48
      $region47: #{block_forward_pallas.4} parent=43 // pred_region
        %s747 = smul.u32 32, %s17
        %p748 = scmp.lt.s32.totalorder %s747, 63
        %s749 = scalar_select %p748, %s747, 63
        %s750 = smul.addr %s749, 8
        %s751 = scalar_lea.vmem %s2, %s750
      $region48: #{block_forward_pallas.4} parent=43 // pred_fallthru
        _
      // Predicated region
      $region49: #{block_forward_pallas.4} parent=43 // pred_check
        %p752 = pneg %p113
      $region50: #{block_forward_pallas.4} parent=43 // pred_check_branch
        %754 = sbr.rel (%p752) target = $region52
      $region51: #{block_forward_pallas.4} parent=43 // pred_region
        %p755 = scmp.lt.s32.totalorder %s17, 1
        %s756 = scalar_select %p755, %s17, 1
        %s757 = smul.addr %s756, 8
        %s758 = scalar_lea.vmem %s3, %s757
      $region52: #{block_forward_pallas.4} parent=43 // pred_fallthru
        _
      // Predicated region
      $region53: #{block_forward_pallas.4} parent=43 // pred_check
        %p759 = pneg %p139
      $region54: #{block_forward_pallas.4} parent=43 // pred_check_branch
        %761 = sbr.rel (%p759) target = $region56
      $region55: #{block_forward_pallas.4} parent=43 // pred_region
        %p762 = scmp.lt.s32.totalorder %s17, 1
        %s763 = scalar_select %p762, %s17, 1
        %s764 = smul.addr %s763, 8
        %s765 = scalar_lea.vmem %s4, %s764
      $region56: #{block_forward_pallas.4} parent=43 // pred_fallthru
        _
    $region44: #{block_forward_pallas.4} parent=5 // pred_fallthru
      _
  $region6: #{block_forward_pallas.4} parent=0 // loop_footer
    %s15 = sadd.s32 1, %s11
  $region7: #{block_forward_pallas.4} parent=0 // loop_footer_branch
    %10 = sbr.rel target = $region3
  $region8: #{block_forward_pallas.4} parent=0 // loop_exit
    _

// kernel: block_forward_pallas.7
$region0: #{block_forward_pallas.7}
  #allocation0 [shape = 'u32[]', space=smem, size = 0x4, offset = 0x4, fixed_abs, tag = 'smem constant byte address 0x4 - core index']
  #allocation1 [shape = 'u32[144,128]{1,0:T(1,128)}', space=vmem, size = 0x12000, scoped, tag = 'internal scratch']
  %s0 = inlined_call_operand.vmem [shape: f32[512,128], index: 0, kind: input, shape index: {}]
  %s1 = inlined_call_operand.vmem [shape: f32[512,128], index: 1, kind: input, shape index: {}]
  %s2 = inlined_call_operand.vmem [shape: f32[2,128], index: 2, kind: input, shape index: {}]
  %s3 = inlined_call_operand.hbm [shape: f32[512,128], index: 3, kind: output, shape index: {}]
  %s4 = sld [smem:[#allocation0]]
  $region45: #{block_forward_pallas.7} parent=0
    _
  %s6 = ssub.s32 1, %s4
  %s7 = scalar_select 0, %s6, %s4
  $region1: #{block_forward_pallas.7} parent=0
    #allocation2 [shape = 'u8[262144]{0}', space=vmem, size = 0x40000, scoped, tag = 'output window, operand 0']
    #allocation3 [shape = 's32[2]{0}', space=sflag, size = 0x8, scoped, tag = 'scoped memory for block_forward_pallas.7']
    %8 = vsyncpa [#allocation3], 0
    %s9 = scalar_lea.sflag [#allocation3], 1
    %10 = vsyncpa %s9, 0
    loop: start=0, step=1, limit=4
    $region2: #{block_forward_pallas.7} parent=1 // loop_pre_header
      _
    $region3: #{block_forward_pallas.7} parent=1 // loop_header
      %s12 = sphi 0, %s16
      %p13 = scmp.ge.s32.totalorder %s12, 4
      %s22 = sphi 0, %s24
      %s25 = sphi 0, %s22
      %s26 = sphi 0, %s25
      %s42 = sphi 0, %s26
      %s48 = sphi 0, %s50
      %s51 = sphi 0, %s48
      %s52 = sphi 0, %s51
      %s68 = sphi 0, %s52
      %s72 = sphi 0, %s72
      %s74 = sphi 0, %s72
      %s75 = sphi 0, %s74
      %s89 = sphi 0, %s75
      %s95 = sphi 0, %s97
      %s98 = sphi 0, %s95
      %s99 = sphi 0, %s98
      %s115 = sphi 0, %s99
    $region4: #{block_forward_pallas.7} parent=1 // loop_header_branch
      %15 = sbr.rel (%p13) target = $region8
    $region5: #{block_forward_pallas.7} parent=1 // loop_body
      %s17 = ssub.s32 %s12, 1
      %s18 = ssub.s32 %s12, 2
      %s19 = sadd.s32 %s12, 1
      %s20 = ssub.s32 %s12, %s19
      %p21 = scmp.eq.s32.totalorder %s20, 0
      %s23 = sadd.s32 %s22, 1
      %s24 = scalar_select %p21, %s22, %s23
      %p27 = pneg %p21
      %p28 = scmp.eq.s32.totalorder %s12, 1
      %p29 = por %p27, %p28
      %p30 = scmp.ne.s32.totalorder %s22, %s25
      %p31 = scmp.eq.s32.totalorder %s12, 0
      %p32 = por %p30, %p31
      %p33 = scmp.ne.s32.totalorder %s22, %s25
      %p34 = scmp.eq.s32.totalorder %s17, 1
      %p35 = por %p33, %p34
      %p36 = scmp.ne.s32.totalorder %s25, %s26
      %p37 = scmp.eq.s32.totalorder %s17, 0
      %p38 = por %p36, %p37
      %p39 = scmp.ne.s32.totalorder %s25, %s26
      %p40 = scmp.eq.s32.totalorder %s18, 1
      %p41 = por %p39, %p40
      %p43 = scmp.ne.s32.totalorder %s26, %s42
      %p44 = scmp.eq.s32.totalorder %s18, 0
      %p45 = por %p43, %p44
      %s46 = ssub.s32 %s12, %s19
      %p47 = scmp.eq.s32.totalorder %s46, 0
      %s49 = sadd.s32 %s48, 1
      %s50 = scalar_select %p47, %s48, %s49
      %p53 = pneg %p47
      %p54 = scmp.eq.s32.totalorder %s12, 1
      %p55 = por %p53, %p54
      %p56 = scmp.ne.s32.totalorder %s48, %s51
      %p57 = scmp.eq.s32.totalorder %s12, 0
      %p58 = por %p56, %p57
      %p59 = scmp.ne.s32.totalorder %s48, %s51
      %p60 = scmp.eq.s32.totalorder %s17, 1
      %p61 = por %p59, %p60
      %p62 = scmp.ne.s32.totalorder %s51, %s52
      %p63 = scmp.eq.s32.totalorder %s17, 0
      %p64 = por %p62, %p63
      %p65 = scmp.ne.s32.totalorder %s51, %s52
      %p66 = scmp.eq.s32.totalorder %s18, 1
      %p67 = por %p65, %p66
      %p69 = scmp.ne.s32.totalorder %s52, %s68
      %p70 = scmp.eq.s32.totalorder %s18, 0
      %p71 = por %p69, %p70
      %s73 = sadd.s32 %s72, 1
      %p76 = scmp.eq.s32.totalorder %s12, 1
      %p77 = scmp.ne.s32.totalorder %s72, %s74
      %p78 = scmp.eq.s32.totalorder %s12, 0
      %p79 = por %p77, %p78
      %p80 = scmp.ne.s32.totalorder %s72, %s74
      %p81 = scmp.eq.s32.totalorder %s17, 1
      %p82 = por %p80, %p81
      %p83 = scmp.ne.s32.totalorder %s74, %s75
      %p84 = scmp.eq.s32.totalorder %s17, 0
      %p85 = por %p83, %p84
      %p86 = scmp.ne.s32.totalorder %s74, %s75
      %p87 = scmp.eq.s32.totalorder %s18, 1
      %p88 = por %p86, %p87
      %p90 = scmp.ne.s32.totalorder %s75, %s89
      %p91 = scmp.eq.s32.totalorder %s18, 0
      %p92 = por %p90, %p91
      %s93 = ssub.s32 %s12, %s19
      %p94 = scmp.eq.s32.totalorder %s93, 0
      %s96 = sadd.s32 %s95, 1
      %s97 = scalar_select %p94, %s95, %s96
      %p100 = pneg %p94
      %p101 = scmp.eq.s32.totalorder %s12, 1
      %p102 = por %p100, %p101
      %p103 = scmp.ne.s32.totalorder %s95, %s98
      %p104 = scmp.eq.s32.totalorder %s12, 0
      %p105 = por %p103, %p104
      %p106 = scmp.ne.s32.totalorder %s95, %s98
      %p107 = scmp.eq.s32.totalorder %s17, 1
      %p108 = por %p106, %p107
      %p109 = scmp.ne.s32.totalorder %s98, %s99
      %p110 = scmp.eq.s32.totalorder %s17, 0
      %p111 = por %p109, %p110
      %p112 = scmp.ne.s32.totalorder %s98, %s99
      %p113 = scmp.eq.s32.totalorder %s18, 1
      %p114 = por %p112, %p113
      %p116 = scmp.ne.s32.totalorder %s99, %s115
      %p117 = scmp.eq.s32.totalorder %s18, 0
      %p118 = por %p116, %p117
      %p119 = scmp.le.s32.totalorder 1, %s12
      %p120 = scmp.lt.s32.totalorder %s12, 3
      %p121 = pnand %p119, %p120
      %p122 = pneg %p121
      // Predicated region
      $region9: #{block_forward_pallas.7} parent=5 // pred_check
        _
      $region10: #{block_forward_pallas.7} parent=5 // pred_check_branch
        %124 = sbr.rel (%p121) target = $region12
      $region11: #{block_forward_pallas.7} parent=5 // pred_region
        %s125 = ssub.s32 %s12, 1
        // Predicated region
        $region13: #{block_forward_pallas.7} parent=11 // pred_check
          %p126 = pneg %p85
        $region14: #{block_forward_pallas.7} parent=11 // pred_check_branch
          %128 = sbr.rel (%p126) target = $region16
        $region15: #{block_forward_pallas.7} parent=11 // pred_region
          _
        $region16: #{block_forward_pallas.7} parent=11 // pred_fallthru
          _
      $region12: #{block_forward_pallas.7} parent=5 // pred_fallthru
        _
      %p129 = scmp.lt.s32.totalorder %s12, 2
      // Predicated region
      $region17: #{block_forward_pallas.7} parent=5 // pred_check
        %p130 = pneg %p129
      $region18: #{block_forward_pallas.7} parent=5 // pred_check_branch
        %132 = sbr.rel (%p130) target = $region20
      $region19: #{block_forward_pallas.7} parent=5 // pred_region
        // Predicated region
        $region21: #{block_forward_pallas.7} parent=19 // pred_check
          %p133 = pneg %p32
        $region22: #{block_forward_pallas.7} parent=19 // pred_check_branch
          %135 = sbr.rel (%p133) target = $region24
        $region23: #{block_forward_pallas.7} parent=19 // pred_region
          %s136 = smul.u32 32, %s12
          %p137 = scmp.lt.s32.totalorder %s136, 63
          %s138 = scalar_select %p137, %s136, 63
          %s139 = smul.addr %s138, 8
          %s140 = scalar_lea.vmem %s0, %s139
          %s141 = smul.u32 32, %s12
        $region24: #{block_forward_pallas.7} parent=19 // pred_fallthru
          _
        // Predicated region
        $region25: #{block_forward_pallas.7} parent=19 // pred_check
          %p142 = pneg %p58
        $region26: #{block_forward_pallas.7} parent=19 // pred_check_branch
          %144 = sbr.rel (%p142) target = $region28
        $region27: #{block_forward_pallas.7} parent=19 // pred_region
          %s145 = smul.u32 32, %s12
          %p146 = scmp.lt.s32.totalorder %s145, 63
          %s147 = scalar_select %p146, %s145, 63
          %s148 = smul.addr %s147, 8
          %s149 = scalar_lea.vmem %s1, %s148
          %s150 = smul.u32 32, %s12
        $region28: #{block_forward_pallas.7} parent=19 // pred_fallthru
          _
      $region20: #{block_forward_pallas.7} parent=5 // pred_fallthru
        _
      %p151 = scmp.le.s32.totalorder 1, %s12
      %p152 = scmp.lt.s32.totalorder %s12, 3
      %p153 = pnand %p151, %p152
      %p154 = pneg %p153
      // Predicated region
      $region29: #{block_forward_pallas.7} parent=5 // pred_check
        _
      $region30: #{block_forward_pallas.7} parent=5 // pred_check_branch
        %156 = sbr.rel (%p153) target = $region32
      $region31: #{block_forward_pallas.7} parent=5 // pred_region
        %s157 = ssub.s32 %s12, 1
        %s158 = smul.u32 32, %s17
        %p159 = scmp.lt.s32.totalorder %s158, 63
        %s160 = scalar_select %p159, %s158, 63
        %s161 = smul.addr %s160, 8
        %s162 = scalar_lea.vmem %s0, %s161
        %p163 = pneg %p38
        %p164 = pneg %p35
        %s165 = smul.u32 32, %s17
        %p166 = scmp.lt.s32.totalorder %s165, 63
        %s167 = scalar_select %p166, %s165, 63
        %s168 = smul.addr %s167, 8
        %s169 = scalar_lea.vmem %s1, %s168
        %p170 = pneg %p64
        %p171 = pneg %p61
        %p172 = pneg %p85
        %p173 = pneg %p82
        %p174 = pneg %p111
        %p175 = pneg %p108
        %s176 = sand.u32 %s98, 1
        %s177 = scalar_lea.sflag [#allocation3], %s176
        %s178 = sand.u32 %s98, 1
        %s179 = smul.addr %s178, 256
        %s180 = scalar_lea.vmem [#allocation2], %s179
        %s181 = smul.u32 32, %s17
        %p182 = scmp.lt.s32.totalorder %s181, 63
        %s183 = scalar_select %p182, %s181, 63
        %s184 = smul.addr %s183, 8
        %s185 = scalar_lea.vmem %s0, %s184
        %s186 = smul.u32 32, %s17
        %s187 = smul.u32 32, %s17
        %p188 = scmp.lt.s32.totalorder %s187, 63
        %s189 = scalar_select %p188, %s187, 63
        %s190 = smul.addr %s189, 8
        %s191 = scalar_lea.vmem %s1, %s190
        %s192 = smul.u32 32, %s17
        %s193 = smul.u32 32, %s17
        %v194 = vld [vmem:[%s2] sm:$0x1]
        %v195 = vld [vmem:[%s2 + $0x1] sm:$0x1]
        %v196 = vld [vmem:[%s185] sm:$0xff]
        %v197 = vld [vmem:[%s185 + $0x8] sm:$0xff]
        %v198 = vld [vmem:[%s185 + $0x10] sm:$0xff]
        %v199 = vld [vmem:[%s185 + $0x18] sm:$0xff]
        %v200 = vld [vmem:[%s185 + $0x20] sm:$0xff]
        %v201 = vld [vmem:[%s185 + $0x28] sm:$0xff]
        %v202 = vld [vmem:[%s185 + $0x30] sm:$0xff]
        %v203 = vld [vmem:[%s185 + $0x38] sm:$0xff]
        %v204 = vld [vmem:[%s185 + $0x40] sm:$0xff]
        %v205 = vld [vmem:[%s185 + $0x48] sm:$0xff]
        %v206 = vld [vmem:[%s185 + $0x50] sm:$0xff]
        %v207 = vld [vmem:[%s185 + $0x58] sm:$0xff]
        %v208 = vld [vmem:[%s185 + $0x60] sm:$0xff]
        %v209 = vld [vmem:[%s185 + $0x68] sm:$0xff]
        %v210 = vld [vmem:[%s185 + $0x70] sm:$0xff]
        %v211 = vld [vmem:[%s185 + $0x78] sm:$0xff]
        %v212 = vld [vmem:[%s185 + $0x80] sm:$0xff]
        %v213 = vld [vmem:[%s185 + $0x88] sm:$0xff]
        %v214 = vld [vmem:[%s185 + $0x90] sm:$0xff]
        %v215 = vld [vmem:[%s185 + $0x98] sm:$0xff]
        %v216 = vld [vmem:[%s185 + $0xa0] sm:$0xff]
        %v217 = vld [vmem:[%s185 + $0xa8] sm:$0xff]
        %v218 = vld [vmem:[%s185 + $0xb0] sm:$0xff]
        %v219 = vld [vmem:[%s185 + $0xb8] sm:$0xff]
        %v220 = vld [vmem:[%s185 + $0xc0] sm:$0xff]
        %v221 = vld [vmem:[%s185 + $0xc8] sm:$0xff]
        %v222 = vld [vmem:[%s185 + $0xd0] sm:$0xff]
        %v223 = vld [vmem:[%s185 + $0xd8] sm:$0xff]
        %v224 = vld [vmem:[%s185 + $0xe0] sm:$0xff]
        %v225 = vld [vmem:[%s185 + $0xe8] sm:$0xff]
        %v226 = vld [vmem:[%s185 + $0xf0] sm:$0xff]
        %v227 = vld [vmem:[%s185 + $0xf8] sm:$0xff]
        %v228 = vlaneseq
        %v229 = vshrl.u32 %v228, 7
        %v230 = vsub.s32 0, %v229
        %v231 = vrot.slane %v194, %v230
        %v232 = vmul.f32 %v196, %v231
        %v233 = vmul.f32 %v197, %v231
        %v234 = vmul.f32 %v198, %v231
        %v235 = vmul.f32 %v199, %v231
        %v236 = vmul.f32 %v200, %v231
        %v237 = vmul.f32 %v201, %v231
        %v238 = vmul.f32 %v202, %v231
        %v239 = vmul.f32 %v203, %v231
        %v240 = vmul.f32 %v204, %v231
        %v241 = vmul.f32 %v205, %v231
        %v242 = vmul.f32 %v206, %v231
        %v243 = vmul.f32 %v207, %v231
        %v244 = vmul.f32 %v208, %v231
        %v245 = vmul.f32 %v209, %v231
        %v246 = vmul.f32 %v210, %v231
        %v247 = vmul.f32 %v211, %v231
        %v248 = vmul.f32 %v212, %v231
        %v249 = vmul.f32 %v213, %v231
        %v250 = vmul.f32 %v214, %v231
        %v251 = vmul.f32 %v215, %v231
        %v252 = vmul.f32 %v216, %v231
        %v253 = vmul.f32 %v217, %v231
        %v254 = vmul.f32 %v218, %v231
        %v255 = vmul.f32 %v219, %v231
        %v256 = vmul.f32 %v220, %v231
        %v257 = vmul.f32 %v221, %v231
        %v258 = vmul.f32 %v222, %v231
        %v259 = vmul.f32 %v223, %v231
        %v260 = vmul.f32 %v224, %v231
        %v261 = vmul.f32 %v225, %v231
        %v262 = vmul.f32 %v226, %v231
        %v263 = vmul.f32 %v227, %v231
        %v264 = vlaneseq
        %v265 = vshrl.u32 %v264, 7
        %v266 = vsub.s32 0, %v265
        %v267 = vrot.slane %v195, %v266
        %v268 = vadd.f32 %v232, %v267
        %v269 = vadd.f32 %v233, %v267
        %v270 = vadd.f32 %v234, %v267
        %v271 = vadd.f32 %v235, %v267
        %v272 = vadd.f32 %v236, %v267
        %v273 = vadd.f32 %v237, %v267
        %v274 = vadd.f32 %v238, %v267
        %v275 = vadd.f32 %v239, %v267
        %v276 = vadd.f32 %v240, %v267
        %v277 = vadd.f32 %v241, %v267
        %v278 = vadd.f32 %v242, %v267
        %v279 = vadd.f32 %v243, %v267
        %v280 = vadd.f32 %v244, %v267
        %v281 = vadd.f32 %v245, %v267
        %v282 = vadd.f32 %v246, %v267
        %v283 = vadd.f32 %v247, %v267
        %v284 = vadd.f32 %v248, %v267
        %v285 = vadd.f32 %v249, %v267
        %v286 = vadd.f32 %v250, %v267
        %v287 = vadd.f32 %v251, %v267
        %v288 = vadd.f32 %v252, %v267
        %v289 = vadd.f32 %v253, %v267
        %v290 = vadd.f32 %v254, %v267
        %v291 = vadd.f32 %v255, %v267
        %v292 = vadd.f32 %v256, %v267
        %v293 = vadd.f32 %v257, %v267
        %v294 = vadd.f32 %v258, %v267
        %v295 = vadd.f32 %v259, %v267
        %v296 = vadd.f32 %v260, %v267
        %v297 = vadd.f32 %v261, %v267
        %v298 = vadd.f32 %v262, %v267
        %v299 = vadd.f32 %v263, %v267
        %v300 = vmax.f32 %v268, 0.0
        %v301 = vmax.f32 %v269, 0.0
        %v302 = vmax.f32 %v270, 0.0
        %v303 = vmax.f32 %v271, 0.0
        %v304 = vmax.f32 %v272, 0.0
        %v305 = vmax.f32 %v273, 0.0
        %v306 = vmax.f32 %v274, 0.0
        %v307 = vmax.f32 %v275, 0.0
        %v308 = vmax.f32 %v276, 0.0
        %v309 = vmax.f32 %v277, 0.0
        %v310 = vmax.f32 %v278, 0.0
        %v311 = vmax.f32 %v279, 0.0
        %v312 = vmax.f32 %v280, 0.0
        %v313 = vmax.f32 %v281, 0.0
        %v314 = vmax.f32 %v282, 0.0
        %v315 = vmax.f32 %v283, 0.0
        %v316 = vmax.f32 %v284, 0.0
        %v317 = vmax.f32 %v285, 0.0
        %v318 = vmax.f32 %v286, 0.0
        %v319 = vmax.f32 %v287, 0.0
        %v320 = vmax.f32 %v288, 0.0
        %v321 = vmax.f32 %v289, 0.0
        %v322 = vmax.f32 %v290, 0.0
        %v323 = vmax.f32 %v291, 0.0
        %v324 = vmax.f32 %v292, 0.0
        %v325 = vmax.f32 %v293, 0.0
        %v326 = vmax.f32 %v294, 0.0
        %v327 = vmax.f32 %v295, 0.0
        %v328 = vmax.f32 %v296, 0.0
        %v329 = vmax.f32 %v297, 0.0
        %v330 = vmax.f32 %v298, 0.0
        %v331 = vmax.f32 %v299, 0.0
        %v332 = vld [vmem:[%s191] sm:$0xff]
        %v333 = vld [vmem:[%s191 + $0x8] sm:$0xff]
        %v334 = vld [vmem:[%s191 + $0x10] sm:$0xff]
        %v335 = vld [vmem:[%s191 + $0x18] sm:$0xff]
        %v336 = vld [vmem:[%s191 + $0x20] sm:$0xff]
        %v337 = vld [vmem:[%s191 + $0x28] sm:$0xff]
        %v338 = vld [vmem:[%s191 + $0x30] sm:$0xff]
        %v339 = vld [vmem:[%s191 + $0x38] sm:$0xff]
        %v340 = vld [vmem:[%s191 + $0x40] sm:$0xff]
        %v341 = vld [vmem:[%s191 + $0x48] sm:$0xff]
        %v342 = vld [vmem:[%s191 + $0x50] sm:$0xff]
        %v343 = vld [vmem:[%s191 + $0x58] sm:$0xff]
        %v344 = vld [vmem:[%s191 + $0x60] sm:$0xff]
        %v345 = vld [vmem:[%s191 + $0x68] sm:$0xff]
        %v346 = vld [vmem:[%s191 + $0x70] sm:$0xff]
        %v347 = vld [vmem:[%s191 + $0x78] sm:$0xff]
        %v348 = vld [vmem:[%s191 + $0x80] sm:$0xff]
        %v349 = vld [vmem:[%s191 + $0x88] sm:$0xff]
        %v350 = vld [vmem:[%s191 + $0x90] sm:$0xff]
        %v351 = vld [vmem:[%s191 + $0x98] sm:$0xff]
        %v352 = vld [vmem:[%s191 + $0xa0] sm:$0xff]
        %v353 = vld [vmem:[%s191 + $0xa8] sm:$0xff]
        %v354 = vld [vmem:[%s191 + $0xb0] sm:$0xff]
        %v355 = vld [vmem:[%s191 + $0xb8] sm:$0xff]
        %v356 = vld [vmem:[%s191 + $0xc0] sm:$0xff]
        %v357 = vld [vmem:[%s191 + $0xc8] sm:$0xff]
        %v358 = vld [vmem:[%s191 + $0xd0] sm:$0xff]
        %v359 = vld [vmem:[%s191 + $0xd8] sm:$0xff]
        %v360 = vld [vmem:[%s191 + $0xe0] sm:$0xff]
        %v361 = vld [vmem:[%s191 + $0xe8] sm:$0xff]
        %v362 = vld [vmem:[%s191 + $0xf0] sm:$0xff]
        %v363 = vld [vmem:[%s191 + $0xf8] sm:$0xff]
        %v364 = vadd.f32 %v332, %v300
        %v365 = vadd.f32 %v333, %v301
        %v366 = vadd.f32 %v334, %v302
        %v367 = vadd.f32 %v335, %v303
        %v368 = vadd.f32 %v336, %v304
        %v369 = vadd.f32 %v337, %v305
        %v370 = vadd.f32 %v338, %v306
        %v371 = vadd.f32 %v339, %v307
        %v372 = vadd.f32 %v340, %v308
        %v373 = vadd.f32 %v341, %v309
        %v374 = vadd.f32 %v342, %v310
        %v375 = vadd.f32 %v343, %v311
        %v376 = vadd.f32 %v344, %v312
        %v377 = vadd.f32 %v345, %v313
        %v378 = vadd.f32 %v346, %v314
        %v379 = vadd.f32 %v347, %v315
        %v380 = vadd.f32 %v348, %v316
        %v381 = vadd.f32 %v349, %v317
        %v382 = vadd.f32 %v350, %v318
        %v383 = vadd.f32 %v351, %v319
        %v384 = vadd.f32 %v352, %v320
        %v385 = vadd.f32 %v353, %v321
        %v386 = vadd.f32 %v354, %v322
        %v387 = vadd.f32 %v355, %v323
        %v388 = vadd.f32 %v356, %v324
        %v389 = vadd.f32 %v357, %v325
        %v390 = vadd.f32 %v358, %v326
        %v391 = vadd.f32 %v359, %v327
        %v392 = vadd.f32 %v360, %v328
        %v393 = vadd.f32 %v361, %v329
        %v394 = vadd.f32 %v362, %v330
        %v395 = vadd.f32 %v363, %v331
        %v396 = vmax.f32 %v364, 0.0
        %v397 = vmax.f32 %v365, 0.0
        %v398 = vmax.f32 %v366, 0.0
        %v399 = vmax.f32 %v367, 0.0
        %v400 = vmax.f32 %v368, 0.0
        %v401 = vmax.f32 %v369, 0.0
        %v402 = vmax.f32 %v370, 0.0
        %v403 = vmax.f32 %v371, 0.0
        %v404 = vmax.f32 %v372, 0.0
        %v405 = vmax.f32 %v373, 0.0
        %v406 = vmax.f32 %v374, 0.0
        %v407 = vmax.f32 %v375, 0.0
        %v408 = vmax.f32 %v376, 0.0
        %v409 = vmax.f32 %v377, 0.0
        %v410 = vmax.f32 %v378, 0.0
        %v411 = vmax.f32 %v379, 0.0
        %v412 = vmax.f32 %v380, 0.0
        %v413 = vmax.f32 %v381, 0.0
        %v414 = vmax.f32 %v382, 0.0
        %v415 = vmax.f32 %v383, 0.0
        %v416 = vmax.f32 %v384, 0.0
        %v417 = vmax.f32 %v385, 0.0
        %v418 = vmax.f32 %v386, 0.0
        %v419 = vmax.f32 %v387, 0.0
        %v420 = vmax.f32 %v388, 0.0
        %v421 = vmax.f32 %v389, 0.0
        %v422 = vmax.f32 %v390, 0.0
        %v423 = vmax.f32 %v391, 0.0
        %v424 = vmax.f32 %v392, 0.0
        %v425 = vmax.f32 %v393, 0.0
        %v426 = vmax.f32 %v394, 0.0
        %v427 = vmax.f32 %v395, 0.0
        %428 = vst [vmem:[%s180] sm:$0xff] %v396
        %429 = vst [vmem:[%s180 + $0x8] sm:$0xff] %v397
        %430 = vst [vmem:[%s180 + $0x10] sm:$0xff] %v398
        %431 = vst [vmem:[%s180 + $0x18] sm:$0xff] %v399
        %432 = vst [vmem:[%s180 + $0x20] sm:$0xff] %v400
        %433 = vst [vmem:[%s180 + $0x28] sm:$0xff] %v401
        %434 = vst [vmem:[%s180 + $0x30] sm:$0xff] %v402
        %435 = vst [vmem:[%s180 + $0x38] sm:$0xff] %v403
        %436 = vst [vmem:[%s180 + $0x40] sm:$0xff] %v404
        %437 = vst [vmem:[%s180 + $0x48] sm:$0xff] %v405
        %438 = vst [vmem:[%s180 + $0x50] sm:$0xff] %v406
        %439 = vst [vmem:[%s180 + $0x58] sm:$0xff] %v407
        %440 = vst [vmem:[%s180 + $0x60] sm:$0xff] %v408
        %441 = vst [vmem:[%s180 + $0x68] sm:$0xff] %v409
        %442 = vst [vmem:[%s180 + $0x70] sm:$0xff] %v410
        %443 = vst [vmem:[%s180 + $0x78] sm:$0xff] %v411
        %444 = vst [vmem:[%s180 + $0x80] sm:$0xff] %v412
        %445 = vst [vmem:[%s180 + $0x88] sm:$0xff] %v413
        %446 = vst [vmem:[%s180 + $0x90] sm:$0xff] %v414
        %447 = vst [vmem:[%s180 + $0x98] sm:$0xff] %v415
        %448 = vst [vmem:[%s180 + $0xa0] sm:$0xff] %v416
        %449 = vst [vmem:[%s180 + $0xa8] sm:$0xff] %v417
        %450 = vst [vmem:[%s180 + $0xb0] sm:$0xff] %v418
        %451 = vst [vmem:[%s180 + $0xb8] sm:$0xff] %v419
        %452 = vst [vmem:[%s180 + $0xc0] sm:$0xff] %v420
        %453 = vst [vmem:[%s180 + $0xc8] sm:$0xff] %v421
        %454 = vst [vmem:[%s180 + $0xd0] sm:$0xff] %v422
        %455 = vst [vmem:[%s180 + $0xd8] sm:$0xff] %v423
        %456 = vst [vmem:[%s180 + $0xe0] sm:$0xff] %v424
        %457 = vst [vmem:[%s180 + $0xe8] sm:$0xff] %v425
        %458 = vst [vmem:[%s180 + $0xf0] sm:$0xff] %v426
        %459 = vst [vmem:[%s180 + $0xf8] sm:$0xff] %v427
        %s460 = sand.u32 %s98, 1
        %s461 = scalar_lea.sflag [#allocation3], %s460
        %s462 = sand.u32 %s98, 1
        %s463 = smul.addr %s462, 256
        %s464 = scalar_lea.vmem [#allocation2], %s463
        // Predicated region
        $region33: #{block_forward_pallas.7} parent=31 // pred_check
          %p465 = pneg %p108
        $region34: #{block_forward_pallas.7} parent=31 // pred_check_branch
          %467 = sbr.rel (%p465) target = $region36
        $region35: #{block_forward_pallas.7} parent=31 // pred_region
          %s468 = smul.u32 32, %s17
          %s470 = ssub.s32 4096, 4096
          %471 = vsyncadd %s461, %s470
          %s472 = smul.addr %s468, 128
          %s473 = scalar_lea.hbm %s3, %s472
          %s474 = sshll.u32 %s464, 4
          %s475 = int_to_ptr.vmem [resolvable:$true] %s474
          %480 = dma.vmem_to_hbm [thread:$0]  %s475, 4096, %s473, %s461, 128, 128, 8
        $region36: #{block_forward_pallas.7} parent=31 // pred_fallthru
          _
      $region32: #{block_forward_pallas.7} parent=5 // pred_fallthru
        _
      %p481 = scmp.le.s32.totalorder 2, %s12
      // Predicated region
      $region37: #{block_forward_pallas.7} parent=5 // pred_check
        %p482 = pneg %p481
      $region38: #{block_forward_pallas.7} parent=5 // pred_check_branch
        %484 = sbr.rel (%p482) target = $region40
      $region39: #{block_forward_pallas.7} parent=5 // pred_region
        %s485 = ssub.s32 %s12, 2
        // Predicated region
        $region41: #{block_forward_pallas.7} parent=39 // pred_check
          %p486 = pneg %p114
        $region42: #{block_forward_pallas.7} parent=39 // pred_check_branch
          %488 = sbr.rel (%p486) target = $region44
        $region43: #{block_forward_pallas.7} parent=39 // pred_region
          %s489 = sand.u32 %s99, 1
          %s490 = scalar_lea.sflag [#allocation3], %s489
          %s491 = sand.u32 %s99, 1
          %s492 = smul.addr %s491, 256
          %s493 = scalar_lea.vmem [#allocation2], %s492
          %494 = dma.done %s490, 4096
        $region44: #{block_forward_pallas.7} parent=39 // pred_fallthru
          _
      $region40: #{block_forward_pallas.7} parent=5 // pred_fallthru
        _
    $region6: #{block_forward_pallas.7} parent=1 // loop_footer
      %s16 = sadd.s32 1, %s12
    $region7: #{block_forward_pallas.7} parent=1 // loop_footer_branch
      %11 = sbr.rel target = $region3
    $region8: #{block_forward_pallas.7} parent=1 // loop_exit
      _
    %495 = vsyncpa [#allocation3], 1
    %s496 = scalar_lea.sflag [#allocation3], 1
    %497 = vsyncpa %s496, 1

// kernel: block_forward_pallas.5
$region0: #{block_forward_pallas.5}
  #allocation0 [shape = 'u32[]', space=smem, size = 0x4, offset = 0x4, fixed_abs, tag = 'smem constant byte address 0x4 - core index']
  #allocation1 [shape = 'u32[144,128]{1,0:T(1,128)}', space=vmem, size = 0x12000, scoped, tag = 'internal scratch']
  %s0 = inlined_call_operand.vmem [shape: f32[2,18,18,128], index: 0, kind: input, shape index: {}]
  %s1 = inlined_call_operand.vmem [shape: f32[2,128], index: 1, kind: input, shape index: {}]
  %s2 = inlined_call_operand.vmem [shape: bf16[9,128,128], index: 2, kind: input, shape index: {}]
  %s3 = inlined_call_operand.vmem [shape: f32[2,256,128], index: 3, kind: output, shape index: {0}]
  %s4 = inlined_call_operand.vmem [shape: f32[2,8,128], index: 4, kind: output, shape index: {1}]
  %s5 = inlined_call_operand.vmem [shape: f32[2,8,128], index: 5, kind: output, shape index: {2}]
  %6 = xla_tuple %s3, %s4, %s5
  %s7 = sld [smem:[#allocation0]]
  $region61: #{block_forward_pallas.5} parent=0
    _
  %s9 = ssub.s32 1, %s7
  %s10 = scalar_select 0, %s9, %s7
  loop: start=0, step=1, limit=4
  $region2: #{block_forward_pallas.5} parent=0 // loop_pre_header
    _
  $region3: #{block_forward_pallas.5} parent=0 // loop_header
    %s12 = sphi 0, %s16
    %p13 = scmp.ge.s32.totalorder %s12, 4
    %s22 = sphi 0, %s24
    %s25 = sphi 0, %s22
    %s26 = sphi 0, %s25
    %s42 = sphi 0, %s26
    %s46 = sphi 0, %s46
    %s48 = sphi 0, %s46
    %s49 = sphi 0, %s48
    %s63 = sphi 0, %s49
    %s67 = sphi 0, %s67
    %s69 = sphi 0, %s67
    %s70 = sphi 0, %s69
    %s84 = sphi 0, %s70
    %s90 = sphi 0, %s92
    %s93 = sphi 0, %s90
    %s94 = sphi 0, %s93
    %s110 = sphi 0, %s94
    %s116 = sphi 0, %s118
    %s119 = sphi 0, %s116
    %s120 = sphi 0, %s119
    %s136 = sphi 0, %s120
    %s142 = sphi 0, %s144
    %s145 = sphi 0, %s142
    %s146 = sphi 0, %s145
    %s162 = sphi 0, %s146
  $region4: #{block_forward_pallas.5} parent=0 // loop_header_branch
    %15 = sbr.rel (%p13) target = $region8
  $region5: #{block_forward_pallas.5} parent=0 // loop_body
    %s17 = ssub.s32 %s12, 1
    %s18 = ssub.s32 %s12, 2
    %s19 = sadd.s32 %s12, 1
    %s20 = ssub.s32 %s12, %s19
    %p21 = scmp.eq.s32.totalorder %s20, 0
    %s23 = sadd.s32 %s22, 1
    %s24 = scalar_select %p21, %s22, %s23
    %p27 = pneg %p21
    %p28 = scmp.eq.s32.totalorder %s12, 1
    %p29 = por %p27, %p28
    %p30 = scmp.ne.s32.totalorder %s22, %s25
    %p31 = scmp.eq.s32.totalorder %s12, 0
    %p32 = por %p30, %p31
    %p33 = scmp.ne.s32.totalorder %s22, %s25
    %p34 = scmp.eq.s32.totalorder %s17, 1
    %p35 = por %p33, %p34
    %p36 = scmp.ne.s32.totalorder %s25, %s26
    %p37 = scmp.eq.s32.totalorder %s17, 0
    %p38 = por %p36, %p37
    %p39 = scmp.ne.s32.totalorder %s25, %s26
    %p40 = scmp.eq.s32.totalorder %s18, 1
    %p41 = por %p39, %p40
    %p43 = scmp.ne.s32.totalorder %s26, %s42
    %p44 = scmp.eq.s32.totalorder %s18, 0
    %p45 = por %p43, %p44
    %s47 = sadd.s32 %s46, 1
    %p50 = scmp.eq.s32.totalorder %s12, 1
    %p51 = scmp.ne.s32.totalorder %s46, %s48
    %p52 = scmp.eq.s32.totalorder %s12, 0
    %p53 = por %p51, %p52
    %p54 = scmp.ne.s32.totalorder %s46, %s48
    %p55 = scmp.eq.s32.totalorder %s17, 1
    %p56 = por %p54, %p55
    %p57 = scmp.ne.s32.totalorder %s48, %s49
    %p58 = scmp.eq.s32.totalorder %s17, 0
    %p59 = por %p57, %p58
    %p60 = scmp.ne.s32.totalorder %s48, %s49
    %p61 = scmp.eq.s32.totalorder %s18, 1
    %p62 = por %p60, %p61
    %p64 = scmp.ne.s32.totalorder %s49, %s63
    %p65 = scmp.eq.s32.totalorder %s18, 0
    %p66 = por %p64, %p65
    %s68 = sadd.s32 %s67, 1
    %p71 = scmp.eq.s32.totalorder %s12, 1
    %p72 = scmp.ne.s32.totalorder %s67, %s69
    %p73 = scmp.eq.s32.totalorder %s12, 0
    %p74 = por %p72, %p73
    %p75 = scmp.ne.s32.totalorder %s67, %s69
    %p76 = scmp.eq.s32.totalorder %s17, 1
    %p77 = por %p75, %p76
    %p78 = scmp.ne.s32.totalorder %s69, %s70
    %p79 = scmp.eq.s32.totalorder %s17, 0
    %p80 = por %p78, %p79
    %p81 = scmp.ne.s32.totalorder %s69, %s70
    %p82 = scmp.eq.s32.totalorder %s18, 1
    %p83 = por %p81, %p82
    %p85 = scmp.ne.s32.totalorder %s70, %s84
    %p86 = scmp.eq.s32.totalorder %s18, 0
    %p87 = por %p85, %p86
    %s88 = ssub.s32 %s12, %s19
    %p89 = scmp.eq.s32.totalorder %s88, 0
    %s91 = sadd.s32 %s90, 1
    %s92 = scalar_select %p89, %s90, %s91
    %p95 = pneg %p89
    %p96 = scmp.eq.s32.totalorder %s12, 1
    %p97 = por %p95, %p96
    %p98 = scmp.ne.s32.totalorder %s90, %s93
    %p99 = scmp.eq.s32.totalorder %s12, 0
    %p100 = por %p98, %p99
    %p101 = scmp.ne.s32.totalorder %s90, %s93
    %p102 = scmp.eq.s32.totalorder %s17, 1
    %p103 = por %p101, %p102
    %p104 = scmp.ne.s32.totalorder %s93, %s94
    %p105 = scmp.eq.s32.totalorder %s17, 0
    %p106 = por %p104, %p105
    %p107 = scmp.ne.s32.totalorder %s93, %s94
    %p108 = scmp.eq.s32.totalorder %s18, 1
    %p109 = por %p107, %p108
    %p111 = scmp.ne.s32.totalorder %s94, %s110
    %p112 = scmp.eq.s32.totalorder %s18, 0
    %p113 = por %p111, %p112
    %s114 = ssub.s32 %s12, %s19
    %p115 = scmp.eq.s32.totalorder %s114, 0
    %s117 = sadd.s32 %s116, 1
    %s118 = scalar_select %p115, %s116, %s117
    %p121 = pneg %p115
    %p122 = scmp.eq.s32.totalorder %s12, 1
    %p123 = por %p121, %p122
    %p124 = scmp.ne.s32.totalorder %s116, %s119
    %p125 = scmp.eq.s32.totalorder %s12, 0
    %p126 = por %p124, %p125
    %p127 = scmp.ne.s32.totalorder %s116, %s119
    %p128 = scmp.eq.s32.totalorder %s17, 1
    %p129 = por %p127, %p128
    %p130 = scmp.ne.s32.totalorder %s119, %s120
    %p131 = scmp.eq.s32.totalorder %s17, 0
    %p132 = por %p130, %p131
    %p133 = scmp.ne.s32.totalorder %s119, %s120
    %p134 = scmp.eq.s32.totalorder %s18, 1
    %p135 = por %p133, %p134
    %p137 = scmp.ne.s32.totalorder %s120, %s136
    %p138 = scmp.eq.s32.totalorder %s18, 0
    %p139 = por %p137, %p138
    %s140 = ssub.s32 %s12, %s19
    %p141 = scmp.eq.s32.totalorder %s140, 0
    %s143 = sadd.s32 %s142, 1
    %s144 = scalar_select %p141, %s142, %s143
    %p147 = pneg %p141
    %p148 = scmp.eq.s32.totalorder %s12, 1
    %p149 = por %p147, %p148
    %p150 = scmp.ne.s32.totalorder %s142, %s145
    %p151 = scmp.eq.s32.totalorder %s12, 0
    %p152 = por %p150, %p151
    %p153 = scmp.ne.s32.totalorder %s142, %s145
    %p154 = scmp.eq.s32.totalorder %s17, 1
    %p155 = por %p153, %p154
    %p156 = scmp.ne.s32.totalorder %s145, %s146
    %p157 = scmp.eq.s32.totalorder %s17, 0
    %p158 = por %p156, %p157
    %p159 = scmp.ne.s32.totalorder %s145, %s146
    %p160 = scmp.eq.s32.totalorder %s18, 1
    %p161 = por %p159, %p160
    %p163 = scmp.ne.s32.totalorder %s146, %s162
    %p164 = scmp.eq.s32.totalorder %s18, 0
    %p165 = por %p163, %p164
    %p166 = scmp.le.s32.totalorder 1, %s12
    %p167 = scmp.lt.s32.totalorder %s12, 3
    %p168 = pnand %p166, %p167
    %p169 = pneg %p168
    // Predicated region
    $region9: #{block_forward_pallas.5} parent=5 // pred_check
      _
    $region10: #{block_forward_pallas.5} parent=5 // pred_check_branch
      %171 = sbr.rel (%p168) target = $region12
    $region11: #{block_forward_pallas.5} parent=5 // pred_region
      %s172 = ssub.s32 %s12, 1
      // Predicated region
      $region13: #{block_forward_pallas.5} parent=11 // pred_check
        %p173 = pneg %p59
      $region14: #{block_forward_pallas.5} parent=11 // pred_check_branch
        %175 = sbr.rel (%p173) target = $region16
      $region15: #{block_forward_pallas.5} parent=11 // pred_region
        _
      $region16: #{block_forward_pallas.5} parent=11 // pred_fallthru
        _
      // Predicated region
      $region17: #{block_forward_pallas.5} parent=11 // pred_check
        %p176 = pneg %p80
      $region18: #{block_forward_pallas.5} parent=11 // pred_check_branch
        %178 = sbr.rel (%p176) target = $region20
      $region19: #{block_forward_pallas.5} parent=11 // pred_region
        _
      $region20: #{block_forward_pallas.5} parent=11 // pred_fallthru
        _
    $region12: #{block_forward_pallas.5} parent=5 // pred_fallthru
      _
    %p179 = scmp.lt.s32.totalorder %s12, 2
    // Predicated region
    $region21: #{block_forward_pallas.5} parent=5 // pred_check
      %p180 = pneg %p179
    $region22: #{block_forward_pallas.5} parent=5 // pred_check_branch
      %182 = sbr.rel (%p180) target = $region24
    $region23: #{block_forward_pallas.5} parent=5 // pred_region
      // Predicated region
      $region25: #{block_forward_pallas.5} parent=23 // pred_check
        %p183 = pneg %p32
      $region26: #{block_forward_pallas.5} parent=23 // pred_check_branch
        %185 = sbr.rel (%p183) target = $region28
      $region27: #{block_forward_pallas.5} parent=23 // pred_region
        %p186 = scmp.lt.s32.totalorder %s12, 1
        %s187 = scalar_select %p186, %s12, 1
        %s188 = smul.addr %s187, 54
        %s189 = smul.addr %s188, 8
        %s190 = scalar_lea.vmem %s0, %s189
      $region28: #{block_forward_pallas.5} parent=23 // pred_fallthru
        _
    $region24: #{block_forward_pallas.5} parent=5 // pred_fallthru
      _
    %p191 = scmp.le.s32.totalorder 1, %s12
    %p192 = scmp.lt.s32.totalorder %s12, 3
    %p193 = pnand %p191, %p192
    %p194 = pneg %p193
    // Predicated region
    $region29: #{block_forward_pallas.5} parent=5 // pred_check
      _
    $region30: #{block_forward_pallas.5} parent=5 // pred_check_branch
      %196 = sbr.rel (%p193) target = $region32
    $region31: #{block_forward_pallas.5} parent=5 // pred_region
      %s197 = ssub.s32 %s12, 1
      %p198 = scmp.lt.s32.totalorder %s17, 1
      %s199 = scalar_select %p198, %s17, 1
      %s200 = smul.addr %s199, 54
      %s201 = smul.addr %s200, 8
      %s202 = scalar_lea.vmem %s0, %s201
      %p203 = pneg %p38
      %p204 = pneg %p35
      %p205 = pneg %p59
      %p206 = pneg %p56
      %p207 = pneg %p80
      %p208 = pneg %p77
      %p209 = pneg %p106
      %p210 = pneg %p103
      %p211 = scmp.lt.s32.totalorder %s17, 1
      %s212 = scalar_select %p211, %s17, 1
      %s213 = smul.addr %s212, 32
      %s214 = smul.addr %s213, 8
      %s215 = scalar_lea.vmem %s3, %s214
      %p216 = pneg %p132
      %p217 = pneg %p129
      %p218 = scmp.lt.s32.totalorder %s17, 1
      %s219 = scalar_select %p218, %s17, 1
      %s220 = smul.addr %s219, 8
      %s221 = scalar_lea.vmem %s4, %s220
      %p222 = pneg %p158
      %p223 = pneg %p155
      %p224 = scmp.lt.s32.totalorder %s17, 1
      %s225 = scalar_select %p224, %s17, 1
      %s226 = smul.addr %s225, 8
      %s227 = scalar_lea.vmem %s5, %s226
      %p228 = scmp.lt.s32.totalorder %s17, 1
      %s229 = scalar_select %p228, %s17, 1
      %s230 = smul.addr %s229, 54
      %s231 = smul.addr %s230, 8
      %s232 = scalar_lea.vmem %s0, %s231
      %p233 = scmp.lt.s32.totalorder %s17, 1
      %s234 = scalar_select %p233, %s17, 1
      %s235 = smul.addr %s234, 32
      %s236 = smul.addr %s235, 8
      %s237 = scalar_lea.vmem %s3, %s236
      %p238 = scmp.lt.s32.totalorder %s17, 1
      %s239 = scalar_select %p238, %s17, 1
      %s240 = smul.addr %s239, 8
      %s241 = scalar_lea.vmem %s4, %s240
      %p242 = scmp.lt.s32.totalorder %s17, 1
      %s243 = scalar_select %p242, %s17, 1
      %s244 = smul.addr %s243, 8
      %s245 = scalar_lea.vmem %s5, %s244
      %v247 = vld [vmem:[%s232] sm:$0xff]
      %v248 = vld [vmem:[%s232 + $0x8] sm:$0xff]
      %v249 = vld [vmem:[%s232 + $0x10] sm:$0x3]
      %v250 = vld [vmem:[%s232 + $0x18] sm:$0xff]
      %v251 = vld [vmem:[%s232 + $0x20] sm:$0xff]
      %v252 = vld [vmem:[%s232 + $0x28] sm:$0x3]
      %v253 = vld [vmem:[%s232 + $0x30] sm:$0xff]
      %v254 = vld [vmem:[%s232 + $0x38] sm:$0xff]
      %v255 = vld [vmem:[%s232 + $0x40] sm:$0x3]
      %v256 = vld [vmem:[%s232 + $0x48] sm:$0xff]
      %v257 = vld [vmem:[%s232 + $0x50] sm:$0xff]
      %v258 = vld [vmem:[%s232 + $0x58] sm:$0x3]
      %v259 = vld [vmem:[%s232 + $0x60] sm:$0xff]
      %v260 = vld [vmem:[%s232 + $0x68] sm:$0xff]
      %v261 = vld [vmem:[%s232 + $0x70] sm:$0x3]
      %v262 = vld [vmem:[%s232 + $0x78] sm:$0xff]
      %v263 = vld [vmem:[%s232 + $0x80] sm:$0xff]
      %v264 = vld [vmem:[%s232 + $0x88] sm:$0x3]
      %v265 = vld [vmem:[%s232 + $0x90] sm:$0xff]
      %v266 = vld [vmem:[%s232 + $0x98] sm:$0xff]
      %v267 = vld [vmem:[%s232 + $0xa0] sm:$0x3]
      %v268 = vld [vmem:[%s232 + $0xa8] sm:$0xff]
      %v269 = vld [vmem:[%s232 + $0xb0] sm:$0xff]
      %v270 = vld [vmem:[%s232 + $0xb8] sm:$0x3]
      %v271 = vld [vmem:[%s232 + $0xc0] sm:$0xff]
      %v272 = vld [vmem:[%s232 + $0xc8] sm:$0xff]
      %v273 = vld [vmem:[%s232 + $0xd0] sm:$0x3]
      %v274 = vld [vmem:[%s232 + $0xd8] sm:$0xff]
      %v275 = vld [vmem:[%s232 + $0xe0] sm:$0xff]
      %v276 = vld [vmem:[%s232 + $0xe8] sm:$0x3]
      %v277 = vld [vmem:[%s232 + $0xf0] sm:$0xff]
      %v278 = vld [vmem:[%s232 + $0xf8] sm:$0xff]
      %v279 = vld [vmem:[%s232 + $0x100] sm:$0x3]
      %v280 = vld [vmem:[%s232 + $0x108] sm:$0xff]
      %v281 = vld [vmem:[%s232 + $0x110] sm:$0xff]
      %v282 = vld [vmem:[%s232 + $0x118] sm:$0x3]
      %v283 = vld [vmem:[%s232 + $0x120] sm:$0xff]
      %v284 = vld [vmem:[%s232 + $0x128] sm:$0xff]
      %v285 = vld [vmem:[%s232 + $0x130] sm:$0x3]
      %v286 = vld [vmem:[%s232 + $0x138] sm:$0xff]
      %v287 = vld [vmem:[%s232 + $0x140] sm:$0xff]
      %v288 = vld [vmem:[%s232 + $0x148] sm:$0x3]
      %v289 = vld [vmem:[%s232 + $0x150] sm:$0xff]
      %v290 = vld [vmem:[%s232 + $0x158] sm:$0xff]
      %v291 = vld [vmem:[%s232 + $0x160] sm:$0x3]
      %v292 = vld [vmem:[%s232 + $0x168] sm:$0xff]
      %v293 = vld [vmem:[%s232 + $0x170] sm:$0xff]
      %v294 = vld [vmem:[%s232 + $0x178] sm:$0x3]
      %v295 = vld [vmem:[%s232 + $0x180] sm:$0xff]
      %v296 = vld [vmem:[%s232 + $0x188] sm:$0xff]
      %v297 = vld [vmem:[%s232 + $0x190] sm:$0x3]
      %v298 = vld [vmem:[%s232 + $0x198] sm:$0xff]
      %v299 = vld [vmem:[%s232 + $0x1a0] sm:$0xff]
      %v300 = vld [vmem:[%s232 + $0x1a8] sm:$0x3]
      %v301 = vld [vmem:[%s1] sm:$0x1]
      %v302 = vld [vmem:[%s1 + $0x1] sm:$0x1]
      %v303 = vlaneseq
      %v304 = vshrl.u32 %v303, 7
      %v305 = vsub.s32 0, %v304
      %v306 = vrot.slane %v301, %v305
      %v307 = vmul.f32 %v247, %v306
      %v308 = vmul.f32 %v248, %v306
      %v309 = vmul.f32 %v249, %v306
      %v310 = vmul.f32 %v250, %v306
      %v311 = vmul.f32 %v251, %v306
      %v312 = vmul.f32 %v252, %v306
      %v313 = vmul.f32 %v253, %v306
      %v314 = vmul.f32 %v254, %v306
      %v315 = vmul.f32 %v255, %v306
      %v316 = vmul.f32 %v256, %v306
      %v317 = vmul.f32 %v257, %v306
      %v318 = vmul.f32 %v258, %v306
      %v319 = vmul.f32 %v259, %v306
      %v320 = vmul.f32 %v260, %v306
      %v321 = vmul.f32 %v261, %v306
      %v322 = vmul.f32 %v262, %v306
      %v323 = vmul.f32 %v263, %v306
      %v324 = vmul.f32 %v264, %v306
      %v325 = vmul.f32 %v265, %v306
      %v326 = vmul.f32 %v266, %v306
      %v327 = vmul.f32 %v267, %v306
      %v328 = vmul.f32 %v268, %v306
      %v329 = vmul.f32 %v269, %v306
      %v330 = vmul.f32 %v270, %v306
      %v331 = vmul.f32 %v271, %v306
      %v332 = vmul.f32 %v272, %v306
      %v333 = vmul.f32 %v273, %v306
      %v334 = vmul.f32 %v274, %v306
      %v335 = vmul.f32 %v275, %v306
      %v336 = vmul.f32 %v276, %v306
      %v337 = vmul.f32 %v277, %v306
      %v338 = vmul.f32 %v278, %v306
      %v339 = vmul.f32 %v279, %v306
      %v340 = vmul.f32 %v280, %v306
      %v341 = vmul.f32 %v281, %v306
      %v342 = vmul.f32 %v282, %v306
      %v343 = vmul.f32 %v283, %v306
      %v344 = vmul.f32 %v284, %v306
      %v345 = vmul.f32 %v285, %v306
      %v346 = vmul.f32 %v286, %v306
      %v347 = vmul.f32 %v287, %v306
      %v348 = vmul.f32 %v288, %v306
      %v349 = vmul.f32 %v289, %v306
      %v350 = vmul.f32 %v290, %v306
      %v351 = vmul.f32 %v291, %v306
      %v352 = vmul.f32 %v292, %v306
      %v353 = vmul.f32 %v293, %v306
      %v354 = vmul.f32 %v294, %v306
      %v355 = vmul.f32 %v295, %v306
      %v356 = vmul.f32 %v296, %v306
      %v357 = vmul.f32 %v297, %v306
      %v358 = vmul.f32 %v298, %v306
      %v359 = vmul.f32 %v299, %v306
      %v360 = vmul.f32 %v300, %v306
      %v361 = vlaneseq
      %v362 = vshrl.u32 %v361, 7
      %v363 = vsub.s32 0, %v362
      %v364 = vrot.slane %v302, %v363
      %v365 = vadd.f32 %v307, %v364
      %v366 = vadd.f32 %v308, %v364
      %v367 = vadd.f32 %v309, %v364
      %v368 = vadd.f32 %v310, %v364
      %v369 = vadd.f32 %v311, %v364
      %v370 = vadd.f32 %v312, %v364
      %v371 = vadd.f32 %v313, %v364
      %v372 = vadd.f32 %v314, %v364
      %v373 = vadd.f32 %v315, %v364
      %v374 = vadd.f32 %v316, %v364
      %v375 = vadd.f32 %v317, %v364
      %v376 = vadd.f32 %v318, %v364
      %v377 = vadd.f32 %v319, %v364
      %v378 = vadd.f32 %v320, %v364
      %v379 = vadd.f32 %v321, %v364
      %v380 = vadd.f32 %v322, %v364
      %v381 = vadd.f32 %v323, %v364
      %v382 = vadd.f32 %v324, %v364
      %v383 = vadd.f32 %v325, %v364
      %v384 = vadd.f32 %v326, %v364
      %v385 = vadd.f32 %v327, %v364
      %v386 = vadd.f32 %v328, %v364
      %v387 = vadd.f32 %v329, %v364
      %v388 = vadd.f32 %v330, %v364
      %v389 = vadd.f32 %v331, %v364
      %v390 = vadd.f32 %v332, %v364
      %v391 = vadd.f32 %v333, %v364
      %v392 = vadd.f32 %v334, %v364
      %v393 = vadd.f32 %v335, %v364
      %v394 = vadd.f32 %v336, %v364
      %v395 = vadd.f32 %v337, %v364
      %v396 = vadd.f32 %v338, %v364
      %v397 = vadd.f32 %v339, %v364
      %v398 = vadd.f32 %v340, %v364
      %v399 = vadd.f32 %v341, %v364
      %v400 = vadd.f32 %v342, %v364
      %v401 = vadd.f32 %v343, %v364
      %v402 = vadd.f32 %v344, %v364
      %v403 = vadd.f32 %v345, %v364
      %v404 = vadd.f32 %v346, %v364
      %v405 = vadd.f32 %v347, %v364
      %v406 = vadd.f32 %v348, %v364
      %v407 = vadd.f32 %v349, %v364
      %v408 = vadd.f32 %v350, %v364
      %v409 = vadd.f32 %v351, %v364
      %v410 = vadd.f32 %v352, %v364
      %v411 = vadd.f32 %v353, %v364
      %v412 = vadd.f32 %v354, %v364
      %v413 = vadd.f32 %v355, %v364
      %v414 = vadd.f32 %v356, %v364
      %v415 = vadd.f32 %v357, %v364
      %v416 = vadd.f32 %v358, %v364
      %v417 = vadd.f32 %v359, %v364
      %v418 = vadd.f32 %v360, %v364
      %v419 = vmax.f32 %v365, 0.0
      %v420 = vmax.f32 %v366, 0.0
      %v421 = vmax.f32 %v367, 0.0
      %v422 = vmax.f32 %v368, 0.0
      %v423 = vmax.f32 %v369, 0.0
      %v424 = vmax.f32 %v370, 0.0
      %v425 = vmax.f32 %v371, 0.0
      %v426 = vmax.f32 %v372, 0.0
      %v427 = vmax.f32 %v373, 0.0
      %v428 = vmax.f32 %v374, 0.0
      %v429 = vmax.f32 %v375, 0.0
      %v430 = vmax.f32 %v376, 0.0
      %v431 = vmax.f32 %v377, 0.0
      %v432 = vmax.f32 %v378, 0.0
      %v433 = vmax.f32 %v379, 0.0
      %v434 = vmax.f32 %v380, 0.0
      %v435 = vmax.f32 %v381, 0.0
      %v436 = vmax.f32 %v382, 0.0
      %v437 = vmax.f32 %v383, 0.0
      %v438 = vmax.f32 %v384, 0.0
      %v439 = vmax.f32 %v385, 0.0
      %v440 = vmax.f32 %v386, 0.0
      %v441 = vmax.f32 %v387, 0.0
      %v442 = vmax.f32 %v388, 0.0
      %v443 = vmax.f32 %v389, 0.0
      %v444 = vmax.f32 %v390, 0.0
      %v445 = vmax.f32 %v391, 0.0
      %v446 = vmax.f32 %v392, 0.0
      %v447 = vmax.f32 %v393, 0.0
      %v448 = vmax.f32 %v394, 0.0
      %v449 = vmax.f32 %v395, 0.0
      %v450 = vmax.f32 %v396, 0.0
      %v451 = vmax.f32 %v397, 0.0
      %v452 = vmax.f32 %v398, 0.0
      %v453 = vmax.f32 %v399, 0.0
      %v454 = vmax.f32 %v400, 0.0
      %v455 = vmax.f32 %v401, 0.0
      %v456 = vmax.f32 %v402, 0.0
      %v457 = vmax.f32 %v403, 0.0
      %v458 = vmax.f32 %v404, 0.0
      %v459 = vmax.f32 %v405, 0.0
      %v460 = vmax.f32 %v406, 0.0
      %v461 = vmax.f32 %v407, 0.0
      %v462 = vmax.f32 %v408, 0.0
      %v463 = vmax.f32 %v409, 0.0
      %v464 = vmax.f32 %v410, 0.0
      %v465 = vmax.f32 %v411, 0.0
      %v466 = vmax.f32 %v412, 0.0
      %v467 = vmax.f32 %v413, 0.0
      %v468 = vmax.f32 %v414, 0.0
      %v469 = vmax.f32 %v415, 0.0
      %v470 = vmax.f32 %v416, 0.0
      %v471 = vmax.f32 %v417, 0.0
      %v472 = vmax.f32 %v418, 0.0
      %v473 = vlaneseq
      %v474 = vshrl.u32 %v473, 7
      %v475 = vadd.s32 %v474, 8
      %v476 = vadd.s32 %v474, 16
      %vm477 = vcmp.ge.s32.totalorder %v474, 1
      %vm478 = vcmp.ge.s32.totalorder %v475, 1
      %vm479 = vcmp.ge.s32.totalorder %v476, 1
      %vm480 = vmand 0, %vm477
      %vm481 = vmand 0, %vm478
      %vm482 = vmand 0, %vm479
      %vm483 = vmand 1, %vm477
      %vm484 = vmand 1, %vm478
      %vm485 = vmand 1, %vm479
      %vm486 = vcmp.le.s32.totalorder %v474, 16
      %vm487 = vcmp.le.s32.totalorder %v475, 16
      %vm488 = vcmp.le.s32.totalorder %v476, 16
      %vm489 = vmand %vm480, %vm486
      %vm490 = vmand %vm481, %vm487
      %vm491 = vmand %vm482, %vm488
      %vm492 = vmand %vm483, %vm486
      %vm493 = vmand %vm484, %vm487
      %vm494 = vmand %vm485, %vm488
      %v495 = vsel %vm489, %v419, 0.0
      %v496 = vsel %vm490, %v420, 0.0
      %v497 = vsel %vm491, %v421, 0.0
      %v498 = vsel %vm492, %v422, 0.0
      %v499 = vsel %vm493, %v423, 0.0
      %v500 = vsel %vm494, %v424, 0.0
      %v501 = vsel %vm492, %v425, 0.0
      %v502 = vsel %vm493, %v426, 0.0
      %v503 = vsel %vm494, %v427, 0.0
      %v504 = vsel %vm492, %v428, 0.0
      %v505 = vsel %vm493, %v429, 0.0
      %v506 = vsel %vm494, %v430, 0.0
      %v507 = vsel %vm492, %v431, 0.0
      %v508 = vsel %vm493, %v432, 0.0
      %v509 = vsel %vm494, %v433, 0.0
      %v510 = vsel %vm492, %v434, 0.0
      %v511 = vsel %vm493, %v435, 0.0
      %v512 = vsel %vm494, %v436, 0.0
      %v513 = vsel %vm492, %v437, 0.0
      %v514 = vsel %vm493, %v438, 0.0
      %v515 = vsel %vm494, %v439, 0.0
      %v516 = vsel %vm492, %v440, 0.0
      %v517 = vsel %vm493, %v441, 0.0
      %v518 = vsel %vm494, %v442, 0.0
      %v519 = vsel %vm492, %v443, 0.0
      %v520 = vsel %vm493, %v444, 0.0
      %v521 = vsel %vm494, %v445, 0.0
      %v522 = vsel %vm492, %v446, 0.0
      %v523 = vsel %vm493, %v447, 0.0
      %v524 = vsel %vm494, %v448, 0.0
      %v525 = vsel %vm492, %v449, 0.0
      %v526 = vsel %vm493, %v450, 0.0
      %v527 = vsel %vm494, %v451, 0.0
      %v528 = vsel %vm492, %v452, 0.0
      %v529 = vsel %vm493, %v453, 0.0
      %v530 = vsel %vm494, %v454, 0.0
      %v531 = vsel %vm492, %v455, 0.0
      %v532 = vsel %vm493, %v456, 0.0
      %v533 = vsel %vm494, %v457, 0.0
      %v534 = vsel %vm492, %v458, 0.0
      %v535 = vsel %vm493, %v459, 0.0
      %v536 = vsel %vm494, %v460, 0.0
      %v537 = vsel %vm492, %v461, 0.0
      %v538 = vsel %vm493, %v462, 0.0
      %v539 = vsel %vm494, %v463, 0.0
      %v540 = vsel %vm492, %v464, 0.0
      %v541 = vsel %vm493, %v465, 0.0
      %v542 = vsel %vm494, %v466, 0.0
      %v543 = vsel %vm492, %v467, 0.0
      %v544 = vsel %vm493, %v468, 0.0
      %v545 = vsel %vm494, %v469, 0.0
      %v546 = vsel %vm489, %v470, 0.0
      %v547 = vsel %vm490, %v471, 0.0
      %v548 = vsel %vm491, %v472, 0.0
      %v549 = vpack.c.bf16 %v496, %v495
      %v550 = vpack.c.bf16 %v499, %v498
      %v551 = vpack.c.bf16 %v502, %v501
      %v552 = vpack.c.bf16 %v505, %v504
      %v553 = vpack.c.bf16 %v508, %v507
      %v554 = vpack.c.bf16 %v511, %v510
      %v555 = vpack.c.bf16 %v514, %v513
      %v556 = vpack.c.bf16 %v517, %v516
      %v557 = vpack.c.bf16 %v520, %v519
      %v558 = vpack.c.bf16 %v523, %v522
      %v559 = vpack.c.bf16 %v526, %v525
      %v560 = vpack.c.bf16 %v529, %v528
      %v561 = vpack.c.bf16 %v532, %v531
      %v562 = vpack.c.bf16 %v535, %v534
      %v563 = vpack.c.bf16 %v538, %v537
      %v564 = vpack.c.bf16 %v541, %v540
      %v565 = vld [vmem:[%s2] sm:$0xf]
      %v566 = vld [vmem:[%s2 + $0x4] sm:$0xf]
      %v567 = vld [vmem:[%s2 + $0x8] sm:$0xf]
      %v568 = vld [vmem:[%s2 + $0xc] sm:$0xf]
      %v569 = vld [vmem:[%s2 + $0x10] sm:$0xf]
      %v570 = vld [vmem:[%s2 + $0x14] sm:$0xf]
      %v571 = vld [vmem:[%s2 + $0x18] sm:$0xf]
      %v572 = vld [vmem:[%s2 + $0x1c] sm:$0xf]
      %v573 = vld [vmem:[%s2 + $0x20] sm:$0xf]
      %v574 = vld [vmem:[%s2 + $0x24] sm:$0xf]
      %v575 = vld [vmem:[%s2 + $0x28] sm:$0xf]
      %v576 = vld [vmem:[%s2 + $0x2c] sm:$0xf]
      %v577 = vld [vmem:[%s2 + $0x30] sm:$0xf]
      %v578 = vld [vmem:[%s2 + $0x34] sm:$0xf]
      %v579 = vld [vmem:[%s2 + $0x38] sm:$0xf]
      %v580 = vld [vmem:[%s2 + $0x3c] sm:$0xf]
      %vm629 = vcmask 1046528
      %v630 = vrot.slane %v495, 1
      %v631 = vrot.slane %v496, 1
      %v632 = vsel %vm629, %v630, %v631
      %v633 = vrot.slane %v497, 1
      %v634 = vsel %vm629, %v631, %v633
      %v635 = vrot.slane %v498, 1
      %v636 = vrot.slane %v499, 1
      %v637 = vsel %vm629, %v635, %v636
      %v638 = vrot.slane %v500, 1
      %v639 = vsel %vm629, %v636, %v638
      %v640 = vrot.slane %v501, 1
      %v641 = vrot.slane %v502, 1
      %v642 = vsel %vm629, %v640, %v641
      %v643 = vrot.slane %v503, 1
      %v644 = vsel %vm629, %v641, %v643
      %v645 = vrot.slane %v504, 1
      %v646 = vrot.slane %v505, 1
      %v647 = vsel %vm629, %v645, %v646
      %v648 = vrot.slane %v506, 1
      %v649 = vsel %vm629, %v646, %v648
      %v650 = vrot.slane %v507, 1
      %v651 = vrot.slane %v508, 1
      %v652 = vsel %vm629, %v650, %v651
      %v653 = vrot.slane %v509, 1
      %v654 = vsel %vm629, %v651, %v653
      %v655 = vrot.slane %v510, 1
      %v656 = vrot.slane %v511, 1
      %v657 = vsel %vm629, %v655, %v656
      %v658 = vrot.slane %v512, 1
      %v659 = vsel %vm629, %v656, %v658
      %v660 = vrot.slane %v513, 1
      %v661 = vrot.slane %v514, 1
      %v662 = vsel %vm629, %v660, %v661
      %v663 = vrot.slane %v515, 1
      %v664 = vsel %vm629, %v661, %v663
      %v665 = vrot.slane %v516, 1
      %v666 = vrot.slane %v517, 1
      %v667 = vsel %vm629, %v665, %v666
      %v668 = vrot.slane %v518, 1
      %v669 = vsel %vm629, %v666, %v668
      %v670 = vrot.slane %v519, 1
      %v671 = vrot.slane %v520, 1
      %v672 = vsel %vm629, %v670, %v671
      %v673 = vrot.slane %v521, 1
      %v674 = vsel %vm629, %v671, %v673
      %v675 = vrot.slane %v522, 1
      %v676 = vrot.slane %v523, 1
      %v677 = vsel %vm629, %v675, %v676
      %v678 = vrot.slane %v524, 1
      %v679 = vsel %vm629, %v676, %v678
      %v680 = vrot.slane %v525, 1
      %v681 = vrot.slane %v526, 1
      %v682 = vsel %vm629, %v680, %v681
      %v683 = vrot.slane %v527, 1
      %v684 = vsel %vm629, %v681, %v683
      %v685 = vrot.slane %v528, 1
      %v686 = vrot.slane %v529, 1
      %v687 = vsel %vm629, %v685, %v686
      %v688 = vrot.slane %v530, 1
      %v689 = vsel %vm629, %v686, %v688
      %v690 = vrot.slane %v531, 1
      %v691 = vrot.slane %v532, 1
      %v692 = vsel %vm629, %v690, %v691
      %v693 = vrot.slane %v533, 1
      %v694 = vsel %vm629, %v691, %v693
      %v695 = vrot.slane %v534, 1
      %v696 = vrot.slane %v535, 1
      %v697 = vsel %vm629, %v695, %v696
      %v698 = vrot.slane %v536, 1
      %v699 = vsel %vm629, %v696, %v698
      %v700 = vrot.slane %v537, 1
      %v701 = vrot.slane %v538, 1
      %v702 = vsel %vm629, %v700, %v701
      %v703 = vrot.slane %v539, 1
      %v704 = vsel %vm629, %v701, %v703
      %v705 = vrot.slane %v540, 1
      %v706 = vrot.slane %v541, 1
      %v707 = vsel %vm629, %v705, %v706
      %v708 = vrot.slane %v542, 1
      %v709 = vsel %vm629, %v706, %v708
      %v742 = vpack.c.bf16 %v634, %v632
      %v743 = vpack.c.bf16 %v639, %v637
      %v744 = vpack.c.bf16 %v644, %v642
      %v745 = vpack.c.bf16 %v649, %v647
      %v746 = vpack.c.bf16 %v654, %v652
      %v747 = vpack.c.bf16 %v659, %v657
      %v748 = vpack.c.bf16 %v664, %v662
      %v749 = vpack.c.bf16 %v669, %v667
      %v750 = vpack.c.bf16 %v674, %v672
      %v751 = vpack.c.bf16 %v679, %v677
      %v752 = vpack.c.bf16 %v684, %v682
      %v753 = vpack.c.bf16 %v689, %v687
      %v754 = vpack.c.bf16 %v694, %v692
      %v755 = vpack.c.bf16 %v699, %v697
      %v756 = vpack.c.bf16 %v704, %v702
      %v757 = vpack.c.bf16 %v709, %v707
      %s758 = scalar_lea.vmem %s2, 64
      %v759 = vld [vmem:[%s758] sm:$0xf]
      %v760 = vld [vmem:[%s758 + $0x4] sm:$0xf]
      %v761 = vld [vmem:[%s758 + $0x8] sm:$0xf]
      %v762 = vld [vmem:[%s758 + $0xc] sm:$0xf]
      %v763 = vld [vmem:[%s758 + $0x10] sm:$0xf]
      %v764 = vld [vmem:[%s758 + $0x14] sm:$0xf]
      %v765 = vld [vmem:[%s758 + $0x18] sm:$0xf]
      %v766 = vld [vmem:[%s758 + $0x1c] sm:$0xf]
      %v767 = vld [vmem:[%s758 + $0x20] sm:$0xf]
      %v768 = vld [vmem:[%s758 + $0x24] sm:$0xf]
      %v769 = vld [vmem:[%s758 + $0x28] sm:$0xf]
      %v770 = vld [vmem:[%s758 + $0x2c] sm:$0xf]
      %v771 = vld [vmem:[%s758 + $0x30] sm:$0xf]
      %v772 = vld [vmem:[%s758 + $0x34] sm:$0xf]
      %v773 = vld [vmem:[%s758 + $0x38] sm:$0xf]
      %v774 = vld [vmem:[%s758 + $0x3c] sm:$0xf]
      %v791 = vunpack.c.l.b16 %v759
      %v792 = vunpack.c.l.b16 %v760
      %v793 = vunpack.c.l.b16 %v761
      %v794 = vunpack.c.l.b16 %v762
      %v795 = vunpack.c.l.b16 %v763
      %v796 = vunpack.c.l.b16 %v764
      %v797 = vunpack.c.l.b16 %v765
      %v798 = vunpack.c.l.b16 %v766
      %v799 = vunpack.c.l.b16 %v767
      %v800 = vunpack.c.l.b16 %v768
      %v801 = vunpack.c.l.b16 %v769
      %v802 = vunpack.c.l.b16 %v770
      %v803 = vunpack.c.l.b16 %v771
      %v804 = vunpack.c.l.b16 %v772
      %v805 = vunpack.c.l.b16 %v773
      %v806 = vunpack.c.l.b16 %v774
      %v807 = vpack.c.b16 %v792, %v791
      %v808 = vpack.c.b16 %v794, %v793
      %v809 = vpack.c.b16 %v796, %v795
      %v810 = vpack.c.b16 %v798, %v797
      %v811 = vpack.c.b16 %v800, %v799
      %v812 = vpack.c.b16 %v802, %v801
      %v813 = vpack.c.b16 %v804, %v803
      %v814 = vpack.c.b16 %v806, %v805
      %823 = vmatprep.subr.bf16.mxu0 0
      %824 = vmatpush1.bf16.msra.mxu0 %v807
      %825 = vmatprep.subr.bf16.mxu0 0
      %826 = vmatpush1.bf16.msra.mxu0 %v808
      %827 = vmatprep.subr.bf16.mxu0 0
      %828 = vmatpush1.bf16.msra.mxu0 %v809
      %829 = vmatprep.subr.bf16.mxu0 0
      %830 = vmatpush1.bf16.msra.mxu0 %v810
      %831 = vmatprep.subr.bf16.mxu0 0
      %832 = vmatpush1.bf16.msra.mxu0 %v811
      %833 = vmatprep.subr.bf16.mxu0 0
      %834 = vmatpush1.bf16.msra.mxu0 %v812
      %835 = vmatprep.subr.bf16.mxu0 0
      %836 = vmatpush1.bf16.msra.mxu0 %v813
      %837 = vmatprep.subr.bf16.mxu0 0
      %838 = vmatpush1.bf16.msra.mxu0 %v814
      %839 = vmatprep.subr.bf16.mxu0 0
      %840 = vmatpush1.bf16.msra.mxu0 0
      %841 = vmatprep.subr.bf16.mxu0 0
      %842 = vmatpush1.bf16.msra.mxu0 0
      %843 = vmatprep.subr.bf16.mxu0 0
      %844 = vmatpush1.bf16.msra.mxu0 0
      %845 = vmatprep.subr.bf16.mxu0 0
      %846 = vmatpush1.bf16.msra.mxu0 0
      %847 = vmatprep.subr.bf16.mxu0 0
      %848 = vmatpush1.bf16.msra.mxu0 0
      %849 = vmatprep.subr.bf16.mxu0 0
      %850 = vmatpush1.bf16.msra.mxu0 0
      %851 = vmatprep.subr.bf16.mxu0 0
      %852 = vmatpush1.bf16.msra.mxu0 0
      %853 = vmatprep.subr.bf16.mxu0 0
      %854 = vmatpush1.bf16.msra.mxu0 0
      %855 = vmatprep.mubr.bf16.mxu0 0
      %856 = vmatmul.mubr.bf16.gmra.mrb[0].mxu0 %v742
      %v857 = vpop.f32.mrb[0].mxu0
      %v858 = vadd.f32 0.0, %v857
      %v859 = vpop.f32.mrb[0].mxu0
      %v860 = vpop.f32.mrb[0].mxu0
      %v861 = vadd.f32 0.0, %v860
      %v862 = vpop.f32.mrb[0].mxu0
      %863 = vmatprep.mubr.bf16.mxu0 0
      %864 = vmatmul.mubr.bf16.gmra.mrb[0].mxu0 %v743
      %v865 = vpop.f32.mrb[0].mxu0
      %v866 = vadd.f32 0.0, %v865
      %v867 = vpop.f32.mrb[0].mxu0
      %v868 = vpop.f32.mrb[0].mxu0
      %v869 = vadd.f32 0.0, %v868
      %v870 = vpop.f32.mrb[0].mxu0
      %871 = vmatprep.mubr.bf16.mxu0 0
      %872 = vmatmul.mubr.bf16.gmra.mrb[0].mxu0 %v744
      %v873 = vpop.f32.mrb[0].mxu0
      %v874 = vadd.f32 0.0, %v873
      %v875 = vpop.f32.mrb[0].mxu0
      %v876 = vpop.f32.mrb[0].mxu0
      %v877 = vadd.f32 0.0, %v876
      %v878 = vpop.f32.mrb[0].mxu0
      %879 = vmatprep.mubr.bf16.mxu0 0
      %880 = vmatmul.mubr.bf16.gmra.mrb[0].mxu0 %v745
      %v881 = vpop.f32.mrb[0].mxu0
      %v882 = vadd.f32 0.0, %v881
      %v883 = vpop.f32.mrb[0].mxu0
      %v884 = vpop.f32.mrb[0].mxu0
      %v885 = vadd.f32 0.0, %v884
      %v886 = vpop.f32.mrb[0].mxu0
      %887 = vmatprep.mubr.bf16.mxu0 0
      %888 = vmatmul.mubr.bf16.gmra.mrb[0].mxu0 %v746
      %v889 = vpop.f32.mrb[0].mxu0
      %v890 = vadd.f32 0.0, %v889
      %v891 = vpop.f32.mrb[0].mxu0
      %v892 = vpop.f32.mrb[0].mxu0
      %v893 = vadd.f32 0.0, %v892
      %v894 = vpop.f32.mrb[0].mxu0
      %895 = vmatprep.mubr.bf16.mxu0 0
      %896 = vmatmul.mubr.bf16.gmra.mrb[0].mxu0 %v747
      %v897 = vpop.f32.mrb[0].mxu0
      %v898 = vadd.f32 0.0, %v897
      %v899 = vpop.f32.mrb[0].mxu0
      %v900 = vpop.f32.mrb[0].mxu0
      %v901 = vadd.f32 0.0, %v900
      %v902 = vpop.f32.mrb[0].mxu0
      %903 = vmatprep.mubr.bf16.mxu0 0
      %904 = vmatmul.mubr.bf16.gmra.mrb[0].mxu0 %v748
      %v905 = vpop.f32.mrb[0].mxu0
      %v906 = vadd.f32 0.0, %v905
      %v907 = vpop.f32.mrb[0].mxu0
      %v908 = vpop.f32.mrb[0].mxu0
      %v909 = vadd.f32 0.0, %v908
      %v910 = vpop.f32.mrb[0].mxu0
      %911 = vmatprep.mubr.bf16.mxu0 0
      %912 = vmatmul.mubr.bf16.gmra.mrb[0].mxu0 %v749
      %v913 = vpop.f32.mrb[0].mxu0
      %v914 = vadd.f32 0.0, %v913
      %v915 = vpop.f32.mrb[0].mxu0
      %v916 = vpop.f32.mrb[0].mxu0
      %v917 = vadd.f32 0.0, %v916
      %v918 = vpop.f32.mrb[0].mxu0
      %919 = vmatprep.mubr.bf16.mxu0 0
      %920 = vmatmul.mubr.bf16.gmra.mrb[0].mxu0 %v750
      %v921 = vpop.f32.mrb[0].mxu0
      %v922 = vadd.f32 0.0, %v921
      %v923 = vpop.f32.mrb[0].mxu0
      %v924 = vpop.f32.mrb[0].mxu0
      %v925 = vadd.f32 0.0, %v924
      %v926 = vpop.f32.mrb[0].mxu0
      %927 = vmatprep.mubr.bf16.mxu0 0
      %928 = vmatmul.mubr.bf16.gmra.mrb[0].mxu0 %v751
      %v929 = vpop.f32.mrb[0].mxu0
      %v930 = vadd.f32 0.0, %v929
      %v931 = vpop.f32.mrb[0].mxu0
      %v932 = vpop.f32.mrb[0].mxu0
      %v933 = vadd.f32 0.0, %v932
      %v934 = vpop.f32.mrb[0].mxu0
      %935 = vmatprep.mubr.bf16.mxu0 0
      %936 = vmatmul.mubr.bf16.gmra.mrb[0].mxu0 %v752
      %v937 = vpop.f32.mrb[0].mxu0
      %v938 = vadd.f32 0.0, %v937
      %v939 = vpop.f32.mrb[0].mxu0
      %v940 = vpop.f32.mrb[0].mxu0
      %v941 = vadd.f32 0.0, %v940
      %v942 = vpop.f32.mrb[0].mxu0
      %943 = vmatprep.mubr.bf16.mxu0 0
      %944 = vmatmul.mubr.bf16.gmra.mrb[0].mxu0 %v753
      %v945 = vpop.f32.mrb[0].mxu0
      %v946 = vadd.f32 0.0, %v945
      %v947 = vpop.f32.mrb[0].mxu0
      %v948 = vpop.f32.mrb[0].mxu0
      %v949 = vadd.f32 0.0, %v948
      %v950 = vpop.f32.mrb[0].mxu0
      %951 = vmatprep.mubr.bf16.mxu0 0
      %952 = vmatmul.mubr.bf16.gmra.mrb[0].mxu0 %v754
      %v953 = vpop.f32.mrb[0].mxu0
      %v954 = vadd.f32 0.0, %v953
      %v955 = vpop.f32.mrb[0].mxu0
      %v956 = vpop.f32.mrb[0].mxu0
      %v957 = vadd.f32 0.0, %v956
      %v958 = vpop.f32.mrb[0].mxu0
      %959 = vmatprep.mubr.bf16.mxu0 0
      %960 = vmatmul.mubr.bf16.gmra.mrb[0].mxu0 %v755
      %v961 = vpop.f32.mrb[0].mxu0
      %v962 = vadd.f32 0.0, %v961
      %v963 = vpop.f32.mrb[0].mxu0
      %v964 = vpop.f32.mrb[0].mxu0
      %v965 = vadd.f32 0.0, %v964
      %v966 = vpop.f32.mrb[0].mxu0
      %967 = vmatprep.mubr.bf16.mxu0 0
      %968 = vmatmul.mubr.bf16.gmra.mrb[0].mxu0 %v756
      %v969 = vpop.f32.mrb[0].mxu0
      %v970 = vadd.f32 0.0, %v969
      %v971 = vpop.f32.mrb[0].mxu0
      %v972 = vpop.f32.mrb[0].mxu0
      %v973 = vadd.f32 0.0, %v972
      %v974 = vpop.f32.mrb[0].mxu0
      %975 = vmatprep.mubr.bf16.mxu0 0
      %976 = vmatmul.mubr.bf16.gmra.mrb[0].mxu0 %v757
      %v977 = vpop.f32.mrb[0].mxu0
      %v978 = vadd.f32 0.0, %v977
      %v979 = vpop.f32.mrb[0].mxu0
      %v980 = vpop.f32.mrb[0].mxu0
      %v981 = vadd.f32 0.0, %v980
      %v982 = vpop.f32.mrb[0].mxu0
      %983 = vdwg.mxu0
      %v1000 = vunpack.c.l.b16 %v565
      %v1001 = vunpack.c.l.b16 %v566
      %v1002 = vunpack.c.l.b16 %v567
      %v1003 = vunpack.c.l.b16 %v568
      %v1004 = vunpack.c.l.b16 %v569
      %v1005 = vunpack.c.l.b16 %v570
      %v1006 = vunpack.c.l.b16 %v571
      %v1007 = vunpack.c.l.b16 %v572
      %v1008 = vunpack.c.l.b16 %v573
      %v1009 = vunpack.c.l.b16 %v574
      %v1010 = vunpack.c.l.b16 %v575
      %v1011 = vunpack.c.l.b16 %v576
      %v1012 = vunpack.c.l.b16 %v577
      %v1013 = vunpack.c.l.b16 %v578
      %v1014 = vunpack.c.l.b16 %v579
      %v1015 = vunpack.c.l.b16 %v580
      %v1016 = vpack.c.b16 %v1001, %v1000
      %v1017 = vpack.c.b16 %v1003, %v1002
      %v1018 = vpack.c.b16 %v1005, %v1004
      %v1019 = vpack.c.b16 %v1007, %v1006
      %v1020 = vpack.c.b16 %v1009, %v1008
      %v1021 = vpack.c.b16 %v1011, %v1010
      %v1022 = vpack.c.b16 %v1013, %v1012
      %v1023 = vpack.c.b16 %v1015, %v1014
      %1032 = vmatprep.subr.bf16.mxu0 0
      %1033 = vmatpush1.bf16.msra.mxu0 %v1016
      %1034 = vmatprep.subr.bf16.mxu0 0
      %1035 = vmatpush1.bf16.msra.mxu0 %v1017
      %1036 = vmatprep.subr.bf16.mxu0 0
      %1037 = vmatpush1.bf16.msra.mxu0 %v1018
      %1038 = vmatprep.subr.bf16.mxu0 0
      %1039 = vmatpush1.bf16.msra.mxu0 %v1019
      %1040 = vmatprep.subr.bf16.mxu0 0
      %1041 = vmatpush1.bf16.msra.mxu0 %v1020
      %1042 = vmatprep.subr.bf16.mxu0 0
      %1043 = vmatpush1.bf16.msra.mxu0 %v1021
      %1044 = vmatprep.subr.bf16.mxu0 0
      %1045 = vmatpush1.bf16.msra.mxu0 %v1022
      %1046 = vmatprep.subr.bf16.mxu0 0
      %1047 = vmatpush1.bf16.msra.mxu0 %v1023
      %1048 = vmatprep.subr.bf16.mxu0 0
      %1049 = vmatpush1.bf16.msra.mxu0 0
      %1050 = vmatprep.subr.bf16.mxu0 0
      %1051 = vmatpush1.bf16.msra.mxu0 0
      %1052 = vmatprep.subr.bf16.mxu0 0
      %1053 = vmatpush1.bf16.msra.mxu0 0
      %1054 = vmatprep.subr.bf16.mxu0 0
      %1055 = vmatpush1.bf16.msra.mxu0 0
      %1056 = vmatprep.subr.bf16.mxu0 0
      %1057 = vmatpush1.bf16.msra.mxu0 0
      %1058 = vmatprep.subr.bf16.mxu0 0
      %1059 = vmatpush1.bf16.msra.mxu0 0
      %1060 = vmatprep.subr.bf16.mxu0 0
      %1061 = vmatpush1.bf16.msra.mxu0 0
      %1062 = vmatprep.subr.bf16.mxu0 0
      %1063 = vmatpush1.bf16.msra.mxu0 0
      %1064 = vmatprep.mubr.bf16.mxu0 0
      %1065 = vmatmul.mubr.bf16.gmra.mrb[0].mxu0 %v549
      %v1066 = vpop.f32.mrb[0].mxu0
      %v1067 = vadd.f32 %v858, %v1066
      %v1068 = vpop.f32.mrb[0].mxu0
      %v1069 = vpop.f32.mrb[0].mxu0
      %v1070 = vadd.f32 %v861, %v1069
      %v1071 = vpop.f32.mrb[0].mxu0
      %1072 = vmatprep.mubr.bf16.mxu0 0
      %1073 = vmatmul.mubr.bf16.gmra.mrb[0].mxu0 %v550
      %v1074 = vpop.f32.mrb[0].mxu0
      %v1075 = vadd.f32 %v866, %v1074
      %v1076 = vpop.f32.mrb[0].mxu0
      %v1077 = vpop.f32.mrb[0].mxu0
      %v1078 = vadd.f32 %v869, %v1077
      %v1079 = vpop.f32.mrb[0].mxu0
      %1080 = vmatprep.mubr.bf16.mxu0 0
      %1081 = vmatmul.mubr.bf16.gmra.mrb[0].mxu0 %v551
      %v1082 = vpop.f32.mrb[0].mxu0
      %v1083 = vadd.f32 %v874, %v1082
      %v1084 = vpop.f32.mrb[0].mxu0
      %v1085 = vpop.f32.mrb[0].mxu0
      %v1086 = vadd.f32 %v877, %v1085
      %v1087 = vpop.f32.mrb[0].mxu0
      %1088 = vmatprep.mubr.bf16.mxu0 0
      %1089 = vmatmul.mubr.bf16.gmra.mrb[0].mxu0 %v552
      %v1090 = vpop.f32.mrb[0].mxu0
      %v1091 = vadd.f32 %v882, %v1090
      %v1092 = vpop.f32.mrb[0].mxu0
      %v1093 = vpop.f32.mrb[0].mxu0
      %v1094 = vadd.f32 %v885, %v1093
      %v1095 = vpop.f32.mrb[0].mxu0
      %1096 = vmatprep.mubr.bf16.mxu0 0
      %1097 = vmatmul.mubr.bf16.gmra.mrb[0].mxu0 %v553
      %v1098 = vpop.f32.mrb[0].mxu0
      %v1099 = vadd.f32 %v890, %v1098
      %v1100 = vpop.f32.mrb[0].mxu0
      %v1101 = vpop.f32.mrb[0].mxu0
      %v1102 = vadd.f32 %v893, %v1101
      %v1103 = vpop.f32.mrb[0].mxu0
      %1104 = vmatprep.mubr.bf16.mxu0 0
      %1105 = vmatmul.mubr.bf16.gmra.mrb[0].mxu0 %v554
      %v1106 = vpop.f32.mrb[0].mxu0
      %v1107 = vadd.f32 %v898, %v1106
      %v1108 = vpop.f32.mrb[0].mxu0
      %v1109 = vpop.f32.mrb[0].mxu0
      %v1110 = vadd.f32 %v901, %v1109
      %v1111 = vpop.f32.mrb[0].mxu0
      %1112 = vmatprep.mubr.bf16.mxu0 0
      %1113 = vmatmul.mubr.bf16.gmra.mrb[0].mxu0 %v555
      %v1114 = vpop.f32.mrb[0].mxu0
      %v1115 = vadd.f32 %v906, %v1114
      %v1116 = vpop.f32.mrb[0].mxu0
      %v1117 = vpop.f32.mrb[0].mxu0
      %v1118 = vadd.f32 %v909, %v1117
      %v1119 = vpop.f32.mrb[0].mxu0
      %1120 = vmatprep.mubr.bf16.mxu0 0
      %1121 = vmatmul.mubr.bf16.gmra.mrb[0].mxu0 %v556
      %v1122 = vpop.f32.mrb[0].mxu0
      %v1123 = vadd.f32 %v914, %v1122
      %v1124 = vpop.f32.mrb[0].mxu0
      %v1125 = vpop.f32.mrb[0].mxu0
      %v1126 = vadd.f32 %v917, %v1125
      %v1127 = vpop.f32.mrb[0].mxu0
      %1128 = vmatprep.mubr.bf16.mxu0 0
      %1129 = vmatmul.mubr.bf16.gmra.mrb[0].mxu0 %v557
      %v1130 = vpop.f32.mrb[0].mxu0
      %v1131 = vadd.f32 %v922, %v1130
      %v1132 = vpop.f32.mrb[0].mxu0
      %v1133 = vpop.f32.mrb[0].mxu0
      %v1134 = vadd.f32 %v925, %v1133
      %v1135 = vpop.f32.mrb[0].mxu0
      %1136 = vmatprep.mubr.bf16.mxu0 0
      %1137 = vmatmul.mubr.bf16.gmra.mrb[0].mxu0 %v558
      %v1138 = vpop.f32.mrb[0].mxu0
      %v1139 = vadd.f32 %v930, %v1138
      %v1140 = vpop.f32.mrb[0].mxu0
      %v1141 = vpop.f32.mrb[0].mxu0
      %v1142 = vadd.f32 %v933, %v1141
      %v1143 = vpop.f32.mrb[0].mxu0
      %1144 = vmatprep.mubr.bf16.mxu0 0
      %1145 = vmatmul.mubr.bf16.gmra.mrb[0].mxu0 %v559
      %v1146 = vpop.f32.mrb[0].mxu0
      %v1147 = vadd.f32 %v938, %v1146
      %v1148 = vpop.f32.mrb[0].mxu0
      %v1149 = vpop.f32.mrb[0].mxu0
      %v1150 = vadd.f32 %v941, %v1149
      %v1151 = vpop.f32.mrb[0].mxu0
      %1152 = vmatprep.mubr.bf16.mxu0 0
      %1153 = vmatmul.mubr.bf16.gmra.mrb[0].mxu0 %v560
      %v1154 = vpop.f32.mrb[0].mxu0
      %v1155 = vadd.f32 %v946, %v1154
      %v1156 = vpop.f32.mrb[0].mxu0
      %v1157 = vpop.f32.mrb[0].mxu0
      %v1158 = vadd.f32 %v949, %v1157
      %v1159 = vpop.f32.mrb[0].mxu0
      %1160 = vmatprep.mubr.bf16.mxu0 0
      %1161 = vmatmul.mubr.bf16.gmra.mrb[0].mxu0 %v561
      %v1162 = vpop.f32.mrb[0].mxu0
      %v1163 = vadd.f32 %v954, %v1162
      %v1164 = vpop.f32.mrb[0].mxu0
      %v1165 = vpop.f32.mrb[0].mxu0
      %v1166 = vadd.f32 %v957, %v1165
      %v1167 = vpop.f32.mrb[0].mxu0
      %1168 = vmatprep.mubr.bf16.mxu0 0
      %1169 = vmatmul.mubr.bf16.gmra.mrb[0].mxu0 %v562
      %v1170 = vpop.f32.mrb[0].mxu0
      %v1171 = vadd.f32 %v962, %v1170
      %v1172 = vpop.f32.mrb[0].mxu0
      %v1173 = vpop.f32.mrb[0].mxu0
      %v1174 = vadd.f32 %v965, %v1173
      %v1175 = vpop.f32.mrb[0].mxu0
      %1176 = vmatprep.mubr.bf16.mxu0 0
      %1177 = vmatmul.mubr.bf16.gmra.mrb[0].mxu0 %v563
      %v1178 = vpop.f32.mrb[0].mxu0
      %v1179 = vadd.f32 %v970, %v1178
      %v1180 = vpop.f32.mrb[0].mxu0
      %v1181 = vpop.f32.mrb[0].mxu0
      %v1182 = vadd.f32 %v973, %v1181
      %v1183 = vpop.f32.mrb[0].mxu0
      %1184 = vmatprep.mubr.bf16.mxu0 0
      %1185 = vmatmul.mubr.bf16.gmra.mrb[0].mxu0 %v564
      %v1186 = vpop.f32.mrb[0].mxu0
      %v1187 = vadd.f32 %v978, %v1186
      %v1188 = vpop.f32.mrb[0].mxu0
      %v1189 = vpop.f32.mrb[0].mxu0
      %v1190 = vadd.f32 %v981, %v1189
      %v1191 = vpop.f32.mrb[0].mxu0
      %1192 = vdwg.mxu0
      %vm1193 = vcmask 1045504
      %v1194 = vrot.slane %v495, 2
      %v1195 = vrot.slane %v496, 2
      %v1196 = vsel %vm1193, %v1194, %v1195
      %v1197 = vrot.slane %v497, 2
      %v1198 = vsel %vm1193, %v1195, %v1197
      %v1199 = vrot.slane %v498, 2
      %v1200 = vrot.slane %v499, 2
      %v1201 = vsel %vm1193, %v1199, %v1200
      %v1202 = vrot.slane %v500, 2
      %v1203 = vsel %vm1193, %v1200, %v1202
      %v1204 = vrot.slane %v501, 2
      %v1205 = vrot.slane %v502, 2
      %v1206 = vsel %vm1193, %v1204, %v1205
      %v1207 = vrot.slane %v503, 2
      %v1208 = vsel %vm1193, %v1205, %v1207
      %v1209 = vrot.slane %v504, 2
      %v1210 = vrot.slane %v505, 2
      %v1211 = vsel %vm1193, %v1209, %v1210
      %v1212 = vrot.slane %v506, 2
      %v1213 = vsel %vm1193, %v1210, %v1212
      %v1214 = vrot.slane %v507, 2
      %v1215 = vrot.slane %v508, 2
      %v1216 = vsel %vm1193, %v1214, %v1215
      %v1217 = vrot.slane %v509, 2
      %v1218 = vsel %vm1193, %v1215, %v1217
      %v1219 = vrot.slane %v510, 2
      %v1220 = vrot.slane %v511, 2
      %v1221 = vsel %vm1193, %v1219, %v1220
      %v1222 = vrot.slane %v512, 2
      %v1223 = vsel %vm1193, %v1220, %v1222
      %v1224 = vrot.slane %v513, 2
      %v1225 = vrot.slane %v514, 2
      %v1226 = vsel %vm1193, %v1224, %v1225
      %v1227 = vrot.slane %v515, 2
      %v1228 = vsel %vm1193, %v1225, %v1227
      %v1229 = vrot.slane %v516, 2
      %v1230 = vrot.slane %v517, 2
      %v1231 = vsel %vm1193, %v1229, %v1230
      %v1232 = vrot.slane %v518, 2
      %v1233 = vsel %vm1193, %v1230, %v1232
      %v1234 = vrot.slane %v519, 2
      %v1235 = vrot.slane %v520, 2
      %v1236 = vsel %vm1193, %v1234, %v1235
      %v1237 = vrot.slane %v521, 2
      %v1238 = vsel %vm1193, %v1235, %v1237
      %v1239 = vrot.slane %v522, 2
      %v1240 = vrot.slane %v523, 2
      %v1241 = vsel %vm1193, %v1239, %v1240
      %v1242 = vrot.slane %v524, 2
      %v1243 = vsel %vm1193, %v1240, %v1242
      %v1244 = vrot.slane %v525, 2
      %v1245 = vrot.slane %v526, 2
      %v1246 = vsel %vm1193, %v1244, %v1245
      %v1247 = vrot.slane %v527, 2
      %v1248 = vsel %vm1193, %v1245, %v1247
      %v1249 = vrot.slane %v528, 2
      %v1250 = vrot.slane %v529, 2
      %v1251 = vsel %vm1193, %v1249, %v1250
      %v1252 = vrot.slane %v530, 2
      %v1253 = vsel %vm1193, %v1250, %v1252
      %v1254 = vrot.slane %v531, 2
      %v1255 = vrot.slane %v532, 2
      %v1256 = vsel %vm1193, %v1254, %v1255
      %v1257 = vrot.slane %v533, 2
      %v1258 = vsel %vm1193, %v1255, %v1257
      %v1259 = vrot.slane %v534, 2
      %v1260 = vrot.slane %v535, 2
      %v1261 = vsel %vm1193, %v1259, %v1260
      %v1262 = vrot.slane %v536, 2
      %v1263 = vsel %vm1193, %v1260, %v1262
      %v1264 = vrot.slane %v537, 2
      %v1265 = vrot.slane %v538, 2
      %v1266 = vsel %vm1193, %v1264, %v1265
      %v1267 = vrot.slane %v539, 2
      %v1268 = vsel %vm1193, %v1265, %v1267
      %v1269 = vrot.slane %v540, 2
      %v1270 = vrot.slane %v541, 2
      %v1271 = vsel %vm1193, %v1269, %v1270
      %v1272 = vrot.slane %v542, 2
      %v1273 = vsel %vm1193, %v1270, %v1272
      %v1306 = vpack.c.bf16 %v1198, %v1196
      %v1307 = vpack.c.bf16 %v1203, %v1201
      %v1308 = vpack.c.bf16 %v1208, %v1206
      %v1309 = vpack.c.bf16 %v1213, %v1211
      %v1310 = vpack.c.bf16 %v1218, %v1216
      %v1311 = vpack.c.bf16 %v1223, %v1221
      %v1312 = vpack.c.bf16 %v1228, %v1226
      %v1313 = vpack.c.bf16 %v1233, %v1231
      %v1314 = vpack.c.bf16 %v1238, %v1236
      %v1315 = vpack.c.bf16 %v1243, %v1241
      %v1316 = vpack.c.bf16 %v1248, %v1246
      %v1317 = vpack.c.bf16 %v1253, %v1251
      %v1318 = vpack.c.bf16 %v1258, %v1256
      %v1319 = vpack.c.bf16 %v1263, %v1261
      %v1320 = vpack.c.bf16 %v1268, %v1266
      %v1321 = vpack.c.bf16 %v1273, %v1271
      %s1322 = scalar_lea.vmem %s2, 128
      %v1323 = vld [vmem:[%s1322] sm:$0xf]
      %v1324 = vld [vmem:[%s1322 + $0x4] sm:$0xf]
      %v1325 = vld [vmem:[%s1322 + $0x8] sm:$0xf]
      %v1326 = vld [vmem:[%s1322 + $0xc] sm:$0xf]
      %v1327 = vld [vmem:[%s1322 + $0x10] sm:$0xf]
      %v1328 = vld [vmem:[%s1322 + $0x14] sm:$0xf]
      %v1329 = vld [vmem:[%s1322 + $0x18] sm:$0xf]
      %v1330 = vld [vmem:[%s1322 + $0x1c] sm:$0xf]
      %v1331 = vld [vmem:[%s1322 + $0x20] sm:$0xf]
      %v1332 = vld [vmem:[%s1322 + $0x24] sm:$0xf]
      %v1333 = vld [vmem:[%s1322 + $0x28] sm:$0xf]
      %v1334 = vld [vmem:[%s1322 + $0x2c] sm:$0xf]
      %v1335 = vld [vmem:[%s1322 + $0x30] sm:$0xf]
      %v1336 = vld [vmem:[%s1322 + $0x34] sm:$0xf]
      %v1337 = vld [vmem:[%s1322 + $0x38] sm:$0xf]
      %v1338 = vld [vmem:[%s1322 + $0x3c] sm:$0xf]
      %v1355 = vunpack.c.l.b16 %v1323
      %v1356 = vunpack.c.l.b16 %v1324
      %v1357 = vunpack.c.l.b16 %v1325
      %v1358 = vunpack.c.l.b16 %v1326
      %v1359 = vunpack.c.l.b16 %v1327
      %v1360 = vunpack.c.l.b16 %v1328
      %v1361 = vunpack.c.l.b16 %v1329
      %v1362 = vunpack.c.l.b16 %v1330
      %v1363 = vunpack.c.l.b16 %v1331
      %v1364 = vunpack.c.l.b16 %v1332
      %v1365 = vunpack.c.l.b16 %v1333
      %v1366 = vunpack.c.l.b16 %v1334
      %v1367 = vunpack.c.l.b16 %v1335
      %v1368 = vunpack.c.l.b16 %v1336
      %v1369 = vunpack.c.l.b16 %v1337
      %v1370 = vunpack.c.l.b16 %v1338
      %v1371 = vpack.c.b16 %v1356, %v1355
      %v1372 = vpack.c.b16 %v1358, %v1357
      %v1373 = vpack.c.b16 %v1360, %v1359
      %v1374 = vpack.c.b16 %v1362, %v1361
      %v1375 = vpack.c.b16 %v1364, %v1363
      %v1376 = vpack.c.b16 %v1366, %v1365
      %v1377 = vpack.c.b16 %v1368, %v1367
      %v1378 = vpack.c.b16 %v1370, %v1369
      %1387 = vmatprep.subr.bf16.mxu0 0
      %1388 = vmatpush1.bf16.msra.mxu0 %v1371
      %1389 = vmatprep.subr.bf16.mxu0 0
      %1390 = vmatpush1.bf16.msra.mxu0 %v1372
      %1391 = vmatprep.subr.bf16.mxu0 0
      %1392 = vmatpush1.bf16.msra.mxu0 %v1373
      %1393 = vmatprep.subr.bf16.mxu0 0
      %1394 = vmatpush1.bf16.msra.mxu0 %v1374
      %1395 = vmatprep.subr.bf16.mxu0 0
      %1396 = vmatpush1.bf16.msra.mxu0 %v1375
      %1397 = vmatprep.subr.bf16.mxu0 0
      %1398 = vmatpush1.bf16.msra.mxu0 %v1376
      %1399 = vmatprep.subr.bf16.mxu0 0
      %1400 = vmatpush1.bf16.msra.mxu0 %v1377
      %1401 = vmatprep.subr.bf16.mxu0 0
      %1402 = vmatpush1.bf16.msra.mxu0 %v1378
      %1403 = vmatprep.subr.bf16.mxu0 0
      %1404 = vmatpush1.bf16.msra.mxu0 0
      %1405 = vmatprep.subr.bf16.mxu0 0
      %1406 = vmatpush1.bf16.msra.mxu0 0
      %1407 = vmatprep.subr.bf16.mxu0 0
      %1408 = vmatpush1.bf16.msra.mxu0 0
      %1409 = vmatprep.subr.bf16.mxu0 0
      %1410 = vmatpush1.bf16.msra.mxu0 0
      %1411 = vmatprep.subr.bf16.mxu0 0
      %1412 = vmatpush1.bf16.msra.mxu0 0
      %1413 = vmatprep.subr.bf16.mxu0 0
      %1414 = vmatpush1.bf16.msra.mxu0 0
      %1415 = vmatprep.subr.bf16.mxu0 0
      %1416 = vmatpush1.bf16.msra.mxu0 0
      %1417 = vmatprep.subr.bf16.mxu0 0
      %1418 = vmatpush1.bf16.msra.mxu0 0
      %1419 = vmatprep.mubr.bf16.mxu0 0
      %1420 = vmatmul.mubr.bf16.gmra.mrb[0].mxu0 %v1306
      %v1421 = vpop.f32.mrb[0].mxu0
      %v1422 = vadd.f32 0.0, %v1421
      %v1423 = vpop.f32.mrb[0].mxu0
      %v1424 = vpop.f32.mrb[0].mxu0
      %v1425 = vadd.f32 0.0, %v1424
      %v1426 = vpop.f32.mrb[0].mxu0
      %1427 = vmatprep.mubr.bf16.mxu0 0
      %1428 = vmatmul.mubr.bf16.gmra.mrb[0].mxu0 %v1307
      %v1429 = vpop.f32.mrb[0].mxu0
      %v1430 = vadd.f32 0.0, %v1429
      %v1431 = vpop.f32.mrb[0].mxu0
      %v1432 = vpop.f32.mrb[0].mxu0
      %v1433 = vadd.f32 0.0, %v1432
      %v1434 = vpop.f32.mrb[0].mxu0
      %1435 = vmatprep.mubr.bf16.mxu0 0
      %1436 = vmatmul.mubr.bf16.gmra.mrb[0].mxu0 %v1308
      %v1437 = vpop.f32.mrb[0].mxu0
      %v1438 = vadd.f32 0.0, %v1437
      %v1439 = vpop.f32.mrb[0].mxu0
      %v1440 = vpop.f32.mrb[0].mxu0
      %v1441 = vadd.f32 0.0, %v1440
      %v1442 = vpop.f32.mrb[0].mxu0
      %1443 = vmatprep.mubr.bf16.mxu0 0
      %1444 = vmatmul.mubr.bf16.gmra.mrb[0].mxu0 %v1309
      %v1445 = vpop.f32.mrb[0].mxu0
      %v1446 = vadd.f32 0.0, %v1445
      %v1447 = vpop.f32.mrb[0].mxu0
      %v1448 = vpop.f32.mrb[0].mxu0
      %v1449 = vadd.f32 0.0, %v1448
      %v1450 = vpop.f32.mrb[0].mxu0
      %1451 = vmatprep.mubr.bf16.mxu0 0
      %1452 = vmatmul.mubr.bf16.gmra.mrb[0].mxu0 %v1310
      %v1453 = vpop.f32.mrb[0].mxu0
      %v1454 = vadd.f32 0.0, %v1453
      %v1455 = vpop.f32.mrb[0].mxu0
      %v1456 = vpop.f32.mrb[0].mxu0
      %v1457 = vadd.f32 0.0, %v1456
      %v1458 = vpop.f32.mrb[0].mxu0
      %1459 = vmatprep.mubr.bf16.mxu0 0
      %1460 = vmatmul.mubr.bf16.gmra.mrb[0].mxu0 %v1311
      %v1461 = vpop.f32.mrb[0].mxu0
      %v1462 = vadd.f32 0.0, %v1461
      %v1463 = vpop.f32.mrb[0].mxu0
      %v1464 = vpop.f32.mrb[0].mxu0
      %v1465 = vadd.f32 0.0, %v1464
      %v1466 = vpop.f32.mrb[0].mxu0
      %1467 = vmatprep.mubr.bf16.mxu0 0
      %1468 = vmatmul.mubr.bf16.gmra.mrb[0].mxu0 %v1312
      %v1469 = vpop.f32.mrb[0].mxu0
      %v1470 = vadd.f32 0.0, %v1469
      %v1471 = vpop.f32.mrb[0].mxu0
      %v1472 = vpop.f32.mrb[0].mxu0
      %v1473 = vadd.f32 0.0, %v1472
      %v1474 = vpop.f32.mrb[0].mxu0
      %1475 = vmatprep.mubr.bf16.mxu0 0
      %1476 = vmatmul.mubr.bf16.gmra.mrb[0].mxu0 %v1313
      %v1477 = vpop.f32.mrb[0].mxu0
      %v1478 = vadd.f32 0.0, %v1477
      %v1479 = vpop.f32.mrb[0].mxu0
      %v1480 = vpop.f32.mrb[0].mxu0
      %v1481 = vadd.f32 0.0, %v1480
      %v1482 = vpop.f32.mrb[0].mxu0
      %1483 = vmatprep.mubr.bf16.mxu0 0
      %1484 = vmatmul.mubr.bf16.gmra.mrb[0].mxu0 %v1314
      %v1485 = vpop.f32.mrb[0].mxu0
      %v1486 = vadd.f32 0.0, %v1485
      %v1487 = vpop.f32.mrb[0].mxu0
      %v1488 = vpop.f32.mrb[0].mxu0
      %v1489 = vadd.f32 0.0, %v1488
      %v1490 = vpop.f32.mrb[0].mxu0
      %1491 = vmatprep.mubr.bf16.mxu0 0
      %1492 = vmatmul.mubr.bf16.gmra.mrb[0].mxu0 %v1315
      %v1493 = vpop.f32.mrb[0].mxu0
      %v1494 = vadd.f32 0.0, %v1493
      %v1495 = vpop.f32.mrb[0].mxu0
      %v1496 = vpop.f32.mrb[0].mxu0
      %v1497 = vadd.f32 0.0, %v1496
      %v1498 = vpop.f32.mrb[0].mxu0
      %1499 = vmatprep.mubr.bf16.mxu0 0
      %1500 = vmatmul.mubr.bf16.gmra.mrb[0].mxu0 %v1316
      %v1501 = vpop.f32.mrb[0].mxu0
      %v1502 = vadd.f32 0.0, %v1501
      %v1503 = vpop.f32.mrb[0].mxu0
      %v1504 = vpop.f32.mrb[0].mxu0
      %v1505 = vadd.f32 0.0, %v1504
      %v1506 = vpop.f32.mrb[0].mxu0
      %1507 = vmatprep.mubr.bf16.mxu0 0
      %1508 = vmatmul.mubr.bf16.gmra.mrb[0].mxu0 %v1317
      %v1509 = vpop.f32.mrb[0].mxu0
      %v1510 = vadd.f32 0.0, %v1509
      %v1511 = vpop.f32.mrb[0].mxu0
      %v1512 = vpop.f32.mrb[0].mxu0
      %v1513 = vadd.f32 0.0, %v1512
      %v1514 = vpop.f32.mrb[0].mxu0
      %1515 = vmatprep.mubr.bf16.mxu0 0
      %1516 = vmatmul.mubr.bf16.gmra.mrb[0].mxu0 %v1318
      %v1517 = vpop.f32.mrb[0].mxu0
      %v1518 = vadd.f32 0.0, %v1517
      %v1519 = vpop.f32.mrb[0].mxu0
      %v1520 = vpop.f32.mrb[0].mxu0
      %v1521 = vadd.f32 0.0, %v1520
      %v1522 = vpop.f32.mrb[0].mxu0
      %1523 = vmatprep.mubr.bf16.mxu0 0
      %1524 = vmatmul.mubr.bf16.gmra.mrb[0].mxu0 %v1319
      %v1525 = vpop.f32.mrb[0].mxu0
      %v1526 = vadd.f32 0.0, %v1525
      %v1527 = vpop.f32.mrb[0].mxu0
      %v1528 = vpop.f32.mrb[0].mxu0
      %v1529 = vadd.f32 0.0, %v1528
      %v1530 = vpop.f32.mrb[0].mxu0
      %1531 = vmatprep.mubr.bf16.mxu0 0
      %1532 = vmatmul.mubr.bf16.gmra.mrb[0].mxu0 %v1320
      %v1533 = vpop.f32.mrb[0].mxu0
      %v1534 = vadd.f32 0.0, %v1533
      %v1535 = vpop.f32.mrb[0].mxu0
      %v1536 = vpop.f32.mrb[0].mxu0
      %v1537 = vadd.f32 0.0, %v1536
      %v1538 = vpop.f32.mrb[0].mxu0
      %1539 = vmatprep.mubr.bf16.mxu0 0
      %1540 = vmatmul.mubr.bf16.gmra.mrb[0].mxu0 %v1321
      %v1541 = vpop.f32.mrb[0].mxu0
      %v1542 = vadd.f32 0.0, %v1541
      %v1543 = vpop.f32.mrb[0].mxu0
      %v1544 = vpop.f32.mrb[0].mxu0
      %v1545 = vadd.f32 0.0, %v1544
      %v1546 = vpop.f32.mrb[0].mxu0
      %1547 = vdwg.mxu0
      %v1548 = vadd.f32 %v1067, %v1422
      %v1549 = vadd.f32 %v1070, %v1425
      %v1550 = vadd.f32 %v1075, %v1430
      %v1551 = vadd.f32 %v1078, %v1433
      %v1552 = vadd.f32 %v1083, %v1438
      %v1553 = vadd.f32 %v1086, %v1441
      %v1554 = vadd.f32 %v1091, %v1446
      %v1555 = vadd.f32 %v1094, %v1449
      %v1556 = vadd.f32 %v1099, %v1454
      %v1557 = vadd.f32 %v1102, %v1457
      %v1558 = vadd.f32 %v1107, %v1462
      %v1559 = vadd.f32 %v1110, %v1465
      %v1560 = vadd.f32 %v1115, %v1470
      %v1561 = vadd.f32 %v1118, %v1473
      %v1562 = vadd.f32 %v1123, %v1478
      %v1563 = vadd.f32 %v1126, %v1481
      %v1564 = vadd.f32 %v1131, %v1486
      %v1565 = vadd.f32 %v1134, %v1489
      %v1566 = vadd.f32 %v1139, %v1494
      %v1567 = vadd.f32 %v1142, %v1497
      %v1568 = vadd.f32 %v1147, %v1502
      %v1569 = vadd.f32 %v1150, %v1505
      %v1570 = vadd.f32 %v1155, %v1510
      %v1571 = vadd.f32 %v1158, %v1513
      %v1572 = vadd.f32 %v1163, %v1518
      %v1573 = vadd.f32 %v1166, %v1521
      %v1574 = vadd.f32 %v1171, %v1526
      %v1575 = vadd.f32 %v1174, %v1529
      %v1576 = vadd.f32 %v1179, %v1534
      %v1577 = vadd.f32 %v1182, %v1537
      %v1578 = vadd.f32 %v1187, %v1542
      %v1579 = vadd.f32 %v1190, %v1545
      %v1580 = vpack.c.bf16 %v544, %v543
      %s1581 = scalar_lea.vmem %s2, 192
      %v1582 = vld [vmem:[%s1581] sm:$0xf]
      %v1583 = vld [vmem:[%s1581 + $0x4] sm:$0xf]
      %v1584 = vld [vmem:[%s1581 + $0x8] sm:$0xf]
      %v1585 = vld [vmem:[%s1581 + $0xc] sm:$0xf]
      %v1586 = vld [vmem:[%s1581 + $0x10] sm:$0xf]
      %v1587 = vld [vmem:[%s1581 + $0x14] sm:$0xf]
      %v1588 = vld [vmem:[%s1581 + $0x18] sm:$0xf]
      %v1589 = vld [vmem:[%s1581 + $0x1c] sm:$0xf]
      %v1590 = vld [vmem:[%s1581 + $0x20] sm:$0xf]
      %v1591 = vld [vmem:[%s1581 + $0x24] sm:$0xf]
      %v1592 = vld [vmem:[%s1581 + $0x28] sm:$0xf]
      %v1593 = vld [vmem:[%s1581 + $0x2c] sm:$0xf]
      %v1594 = vld [vmem:[%s1581 + $0x30] sm:$0xf]
      %v1595 = vld [vmem:[%s1581 + $0x34] sm:$0xf]
      %v1596 = vld [vmem:[%s1581 + $0x38] sm:$0xf]
      %v1597 = vld [vmem:[%s1581 + $0x3c] sm:$0xf]
      %v1614 = vunpack.c.l.b16 %v1582
      %v1615 = vunpack.c.l.b16 %v1583
      %v1616 = vunpack.c.l.b16 %v1584
      %v1617 = vunpack.c.l.b16 %v1585
      %v1618 = vunpack.c.l.b16 %v1586
      %v1619 = vunpack.c.l.b16 %v1587
      %v1620 = vunpack.c.l.b16 %v1588
      %v1621 = vunpack.c.l.b16 %v1589
      %v1622 = vunpack.c.l.b16 %v1590
      %v1623 = vunpack.c.l.b16 %v1591
      %v1624 = vunpack.c.l.b16 %v1592
      %v1625 = vunpack.c.l.b16 %v1593
      %v1626 = vunpack.c.l.b16 %v1594
      %v1627 = vunpack.c.l.b16 %v1595
      %v1628 = vunpack.c.l.b16 %v1596
      %v1629 = vunpack.c.l.b16 %v1597
      %v1630 = vpack.c.b16 %v1615, %v1614
      %v1631 = vpack.c.b16 %v1617, %v1616
      %v1632 = vpack.c.b16 %v1619, %v1618
      %v1633 = vpack.c.b16 %v1621, %v1620
      %v1634 = vpack.c.b16 %v1623, %v1622
      %v1635 = vpack.c.b16 %v1625, %v1624
      %v1636 = vpack.c.b16 %v1627, %v1626
      %v1637 = vpack.c.b16 %v1629, %v1628
      %1646 = vmatprep.subr.bf16.mxu0 0
      %1647 = vmatpush1.bf16.msra.mxu0 %v1630
      %1648 = vmatprep.subr.bf16.mxu0 0
      %1649 = vmatpush1.bf16.msra.mxu0 %v1631
      %1650 = vmatprep.subr.bf16.mxu0 0
      %1651 = vmatpush1.bf16.msra.mxu0 %v1632
      %1652 = vmatprep.subr.bf16.mxu0 0
      %1653 = vmatpush1.bf16.msra.mxu0 %v1633
      %1654 = vmatprep.subr.bf16.mxu0 0
      %1655 = vmatpush1.bf16.msra.mxu0 %v1634
      %1656 = vmatprep.subr.bf16.mxu0 0
      %1657 = vmatpush1.bf16.msra.mxu0 %v1635
      %1658 = vmatprep.subr.bf16.mxu0 0
      %1659 = vmatpush1.bf16.msra.mxu0 %v1636
      %1660 = vmatprep.subr.bf16.mxu0 0
      %1661 = vmatpush1.bf16.msra.mxu0 %v1637
      %1662 = vmatprep.subr.bf16.mxu0 0
      %1663 = vmatpush1.bf16.msra.mxu0 0
      %1664 = vmatprep.subr.bf16.mxu0 0
      %1665 = vmatpush1.bf16.msra.mxu0 0
      %1666 = vmatprep.subr.bf16.mxu0 0
      %1667 = vmatpush1.bf16.msra.mxu0 0
      %1668 = vmatprep.subr.bf16.mxu0 0
      %1669 = vmatpush1.bf16.msra.mxu0 0
      %1670 = vmatprep.subr.bf16.mxu0 0
      %1671 = vmatpush1.bf16.msra.mxu0 0
      %1672 = vmatprep.subr.bf16.mxu0 0
      %1673 = vmatpush1.bf16.msra.mxu0 0
      %1674 = vmatprep.subr.bf16.mxu0 0
      %1675 = vmatpush1.bf16.msra.mxu0 0
      %1676 = vmatprep.subr.bf16.mxu0 0
      %1677 = vmatpush1.bf16.msra.mxu0 0
      %1678 = vmatprep.mubr.bf16.mxu0 0
      %1679 = vmatmul.mubr.bf16.gmra.mrb[0].mxu0 %v550
      %v1680 = vpop.f32.mrb[0].mxu0
      %v1681 = vadd.f32 0.0, %v1680
      %v1682 = vpop.f32.mrb[0].mxu0
      %v1683 = vpop.f32.mrb[0].mxu0
      %v1684 = vadd.f32 0.0, %v1683
      %v1685 = vpop.f32.mrb[0].mxu0
      %1686 = vmatprep.mubr.bf16.mxu0 0
      %1687 = vmatmul.mubr.bf16.gmra.mrb[0].mxu0 %v551
      %v1688 = vpop.f32.mrb[0].mxu0
      %v1689 = vadd.f32 0.0, %v1688
      %v1690 = vpop.f32.mrb[0].mxu0
      %v1691 = vpop.f32.mrb[0].mxu0
      %v1692 = vadd.f32 0.0, %v1691
      %v1693 = vpop.f32.mrb[0].mxu0
      %1694 = vmatprep.mubr.bf16.mxu0 0
      %1695 = vmatmul.mubr.bf16.gmra.mrb[0].mxu0 %v552
      %v1696 = vpop.f32.mrb[0].mxu0
      %v1697 = vadd.f32 0.0, %v1696
      %v1698 = vpop.f32.mrb[0].mxu0
      %v1699 = vpop.f32.mrb[0].mxu0
      %v1700 = vadd.f32 0.0, %v1699
      %v1701 = vpop.f32.mrb[0].mxu0
      %1702 = vmatprep.mubr.bf16.mxu0 0
      %1703 = vmatmul.mubr.bf16.gmra.mrb[0].mxu0 %v553
      %v1704 = vpop.f32.mrb[0].mxu0
      %v1705 = vadd.f32 0.0, %v1704
      %v1706 = vpop.f32.mrb[0].mxu0
      %v1707 = vpop.f32.mrb[0].mxu0
      %v1708 = vadd.f32 0.0, %v1707
      %v1709 = vpop.f32.mrb[0].mxu0
      %1710 = vmatprep.mubr.bf16.mxu0 0
      %1711 = vmatmul.mubr.bf16.gmra.mrb[0].mxu0 %v554
      %v1712 = vpop.f32.mrb[0].mxu0
      %v1713 = vadd.f32 0.0, %v1712
      %v1714 = vpop.f32.mrb[0].mxu0
      %v1715 = vpop.f32.mrb[0].mxu0
      %v1716 = vadd.f32 0.0, %v1715
      %v1717 = vpop.f32.mrb[0].mxu0
      %1718 = vmatprep.mubr.bf16.mxu0 0
      %1719 = vmatmul.mubr.bf16.gmra.mrb[0].mxu0 %v555
      %v1720 = vpop.f32.mrb[0].mxu0
      %v1721 = vadd.f32 0.0, %v1720
      %v1722 = vpop.f32.mrb[0].mxu0
      %v1723 = vpop.f32.mrb[0].mxu0
      %v1724 = vadd.f32 0.0, %v1723
      %v1725 = vpop.f32.mrb[0].mxu0
      %1726 = vmatprep.mubr.bf16.mxu0 0
      %1727 = vmatmul.mubr.bf16.gmra.mrb[0].mxu0 %v556
      %v1728 = vpop.f32.mrb[0].mxu0
      %v1729 = vadd.f32 0.0, %v1728
      %v1730 = vpop.f32.mrb[0].mxu0
      %v1731 = vpop.f32.mrb[0].mxu0
      %v1732 = vadd.f32 0.0, %v1731
      %v1733 = vpop.f32.mrb[0].mxu0
      %1734 = vmatprep.mubr.bf16.mxu0 0
      %1735 = vmatmul.mubr.bf16.gmra.mrb[0].mxu0 %v557
      %v1736 = vpop.f32.mrb[0].mxu0
      %v1737 = vadd.f32 0.0, %v1736
      %v1738 = vpop.f32.mrb[0].mxu0
      %v1739 = vpop.f32.mrb[0].mxu0
      %v1740 = vadd.f32 0.0, %v1739
      %v1741 = vpop.f32.mrb[0].mxu0
      %1742 = vmatprep.mubr.bf16.mxu0 0
      %1743 = vmatmul.mubr.bf16.gmra.mrb[0].mxu0 %v558
      %v1744 = vpop.f32.mrb[0].mxu0
      %v1745 = vadd.f32 0.0, %v1744
      %v1746 = vpop.f32.mrb[0].mxu0
      %v1747 = vpop.f32.mrb[0].mxu0
      %v1748 = vadd.f32 0.0, %v1747
      %v1749 = vpop.f32.mrb[0].mxu0
      %1750 = vmatprep.mubr.bf16.mxu0 0
      %1751 = vmatmul.mubr.bf16.gmra.mrb[0].mxu0 %v559
      %v1752 = vpop.f32.mrb[0].mxu0
      %v1753 = vadd.f32 0.0, %v1752
      %v1754 = vpop.f32.mrb[0].mxu0
      %v1755 = vpop.f32.mrb[0].mxu0
      %v1756 = vadd.f32 0.0, %v1755
      %v1757 = vpop.f32.mrb[0].mxu0
      %1758 = vmatprep.mubr.bf16.mxu0 0
      %1759 = vmatmul.mubr.bf16.gmra.mrb[0].mxu0 %v560
      %v1760 = vpop.f32.mrb[0].mxu0
      %v1761 = vadd.f32 0.0, %v1760
      %v1762 = vpop.f32.mrb[0].mxu0
      %v1763 = vpop.f32.mrb[0].mxu0
      %v1764 = vadd.f32 0.0, %v1763
      %v1765 = vpop.f32.mrb[0].mxu0
      %1766 = vmatprep.mubr.bf16.mxu0 0
      %1767 = vmatmul.mubr.bf16.gmra.mrb[0].mxu0 %v561
      %v1768 = vpop.f32.mrb[0].mxu0
      %v1769 = vadd.f32 0.0, %v1768
      %v1770 = vpop.f32.mrb[0].mxu0
      %v1771 = vpop.f32.mrb[0].mxu0
      %v1772 = vadd.f32 0.0, %v1771
      %v1773 = vpop.f32.mrb[0].mxu0
      %1774 = vmatprep.mubr.bf16.mxu0 0
      %1775 = vmatmul.mubr.bf16.gmra.mrb[0].mxu0 %v562
      %v1776 = vpop.f32.mrb[0].mxu0
      %v1777 = vadd.f32 0.0, %v1776
      %v1778 = vpop.f32.mrb[0].mxu0
      %v1779 = vpop.f32.mrb[0].mxu0
      %v1780 = vadd.f32 0.0, %v1779
      %v1781 = vpop.f32.mrb[0].mxu0
      %1782 = vmatprep.mubr.bf16.mxu0 0
      %1783 = vmatmul.mubr.bf16.gmra.mrb[0].mxu0 %v563
      %v1784 = vpop.f32.mrb[0].mxu0
      %v1785 = vadd.f32 0.0, %v1784
      %v1786 = vpop.f32.mrb[0].mxu0
      %v1787 = vpop.f32.mrb[0].mxu0
      %v1788 = vadd.f32 0.0, %v1787
      %v1789 = vpop.f32.mrb[0].mxu0
      %1790 = vmatprep.mubr.bf16.mxu0 0
      %1791 = vmatmul.mubr.bf16.gmra.mrb[0].mxu0 %v564
      %v1792 = vpop.f32.mrb[0].mxu0
      %v1793 = vadd.f32 0.0, %v1792
      %v1794 = vpop.f32.mrb[0].mxu0
      %v1795 = vpop.f32.mrb[0].mxu0
      %v1796 = vadd.f32 0.0, %v1795
      %v1797 = vpop.f32.mrb[0].mxu0
      %1798 = vmatprep.mubr.bf16.mxu0 0
      %1799 = vmatmul.mubr.bf16.gmra.mrb[0].mxu0 %v1580
      %v1800 = vpop.f32.mrb[0].mxu0
      %v1801 = vadd.f32 0.0, %v1800
      %v1802 = vpop.f32.mrb[0].mxu0
      %v1803 = vpop.f32.mrb[0].mxu0
      %v1804 = vadd.f32 0.0, %v1803
      %v1805 = vpop.f32.mrb[0].mxu0
      %1806 = vdwg.mxu0
      %v1807 = vadd.f32 %v1548, %v1681
      %v1808 = vadd.f32 %v1549, %v1684
      %v1809 = vadd.f32 %v1550, %v1689
      %v1810 = vadd.f32 %v1551, %v1692
      %v1811 = vadd.f32 %v1552, %v1697
      %v1812 = vadd.f32 %v1553, %v1700
      %v1813 = vadd.f32 %v1554, %v1705
      %v1814 = vadd.f32 %v1555, %v1708
      %v1815 = vadd.f32 %v1556, %v1713
      %v1816 = vadd.f32 %v1557, %v1716
      %v1817 = vadd.f32 %v1558, %v1721
      %v1818 = vadd.f32 %v1559, %v1724
      %v1819 = vadd.f32 %v1560, %v1729
      %v1820 = vadd.f32 %v1561, %v1732
      %v1821 = vadd.f32 %v1562, %v1737
      %v1822 = vadd.f32 %v1563, %v1740
      %v1823 = vadd.f32 %v1564, %v1745
      %v1824 = vadd.f32 %v1565, %v1748
      %v1825 = vadd.f32 %v1566, %v1753
      %v1826 = vadd.f32 %v1567, %v1756
      %v1827 = vadd.f32 %v1568, %v1761
      %v1828 = vadd.f32 %v1569, %v1764
      %v1829 = vadd.f32 %v1570, %v1769
      %v1830 = vadd.f32 %v1571, %v1772
      %v1831 = vadd.f32 %v1572, %v1777
      %v1832 = vadd.f32 %v1573, %v1780
      %v1833 = vadd.f32 %v1574, %v1785
      %v1834 = vadd.f32 %v1575, %v1788
      %v1835 = vadd.f32 %v1576, %v1793
      %v1836 = vadd.f32 %v1577, %v1796
      %v1837 = vadd.f32 %v1578, %v1801
      %v1838 = vadd.f32 %v1579, %v1804
      %v1842 = vrot.slane %v543, 1
      %v1843 = vrot.slane %v544, 1
      %v1844 = vsel %vm629, %v1842, %v1843
      %v1845 = vrot.slane %v545, 1
      %v1846 = vsel %vm629, %v1843, %v1845
      %v1849 = vpack.c.bf16 %v1846, %v1844
      %s1850 = scalar_lea.vmem %s2, 256
      %v1851 = vld [vmem:[%s1850] sm:$0xf]
      %v1852 = vld [vmem:[%s1850 + $0x4] sm:$0xf]
      %v1853 = vld [vmem:[%s1850 + $0x8] sm:$0xf]
      %v1854 = vld [vmem:[%s1850 + $0xc] sm:$0xf]
      %v1855 = vld [vmem:[%s1850 + $0x10] sm:$0xf]
      %v1856 = vld [vmem:[%s1850 + $0x14] sm:$0xf]
      %v1857 = vld [vmem:[%s1850 + $0x18] sm:$0xf]
      %v1858 = vld [vmem:[%s1850 + $0x1c] sm:$0xf]
      %v1859 = vld [vmem:[%s1850 + $0x20] sm:$0xf]
      %v1860 = vld [vmem:[%s1850 + $0x24] sm:$0xf]
      %v1861 = vld [vmem:[%s1850 + $0x28] sm:$0xf]
      %v1862 = vld [vmem:[%s1850 + $0x2c] sm:$0xf]
      %v1863 = vld [vmem:[%s1850 + $0x30] sm:$0xf]
      %v1864 = vld [vmem:[%s1850 + $0x34] sm:$0xf]
      %v1865 = vld [vmem:[%s1850 + $0x38] sm:$0xf]
      %v1866 = vld [vmem:[%s1850 + $0x3c] sm:$0xf]
      %v1883 = vunpack.c.l.b16 %v1851
      %v1884 = vunpack.c.l.b16 %v1852
      %v1885 = vunpack.c.l.b16 %v1853
      %v1886 = vunpack.c.l.b16 %v1854
      %v1887 = vunpack.c.l.b16 %v1855
      %v1888 = vunpack.c.l.b16 %v1856
      %v1889 = vunpack.c.l.b16 %v1857
      %v1890 = vunpack.c.l.b16 %v1858
      %v1891 = vunpack.c.l.b16 %v1859
      %v1892 = vunpack.c.l.b16 %v1860
      %v1893 = vunpack.c.l.b16 %v1861
      %v1894 = vunpack.c.l.b16 %v1862
      %v1895 = vunpack.c.l.b16 %v1863
      %v1896 = vunpack.c.l.b16 %v1864
      %v1897 = vunpack.c.l.b16 %v1865
      %v1898 = vunpack.c.l.b16 %v1866
      %v1899 = vpack.c.b16 %v1884, %v1883
      %v1900 = vpack.c.b16 %v1886, %v1885
      %v1901 = vpack.c.b16 %v1888, %v1887
      %v1902 = vpack.c.b16 %v1890, %v1889
      %v1903 = vpack.c.b16 %v1892, %v1891
      %v1904 = vpack.c.b16 %v1894, %v1893
      %v1905 = vpack.c.b16 %v1896, %v1895
      %v1906 = vpack.c.b16 %v1898, %v1897
      %1915 = vmatprep.subr.bf16.mxu0 0
      %1916 = vmatpush1.bf16.msra.mxu0 %v1899
      %1917 = vmatprep.subr.bf16.mxu0 0
      %1918 = vmatpush1.bf16.msra.mxu0 %v1900
      %1919 = vmatprep.subr.bf16.mxu0 0
      %1920 = vmatpush1.bf16.msra.mxu0 %v1901
      %1921 = vmatprep.subr.bf16.mxu0 0
      %1922 = vmatpush1.bf16.msra.mxu0 %v1902
      %1923 = vmatprep.subr.bf16.mxu0 0
      %1924 = vmatpush1.bf16.msra.mxu0 %v1903
      %1925 = vmatprep.subr.bf16.mxu0 0
      %1926 = vmatpush1.bf16.msra.mxu0 %v1904
      %1927 = vmatprep.subr.bf16.mxu0 0
      %1928 = vmatpush1.bf16.msra.mxu0 %v1905
      %1929 = vmatprep.subr.bf16.mxu0 0
      %1930 = vmatpush1.bf16.msra.mxu0 %v1906
      %1931 = vmatprep.subr.bf16.mxu0 0
      %1932 = vmatpush1.bf16.msra.mxu0 0
      %1933 = vmatprep.subr.bf16.mxu0 0
      %1934 = vmatpush1.bf16.msra.mxu0 0
      %1935 = vmatprep.subr.bf16.mxu0 0
      %1936 = vmatpush1.bf16.msra.mxu0 0
      %1937 = vmatprep.subr.bf16.mxu0 0
      %1938 = vmatpush1.bf16.msra.mxu0 0
      %1939 = vmatprep.subr.bf16.mxu0 0
      %1940 = vmatpush1.bf16.msra.mxu0 0
      %1941 = vmatprep.subr.bf16.mxu0 0
      %1942 = vmatpush1.bf16.msra.mxu0 0
      %1943 = vmatprep.subr.bf16.mxu0 0
      %1944 = vmatpush1.bf16.msra.mxu0 0
      %1945 = vmatprep.subr.bf16.mxu0 0
      %1946 = vmatpush1.bf16.msra.mxu0 0
      %1947 = vmatprep.mubr.bf16.mxu0 0
      %1948 = vmatmul.mubr.bf16.gmra.mrb[0].mxu0 %v743
      %v1949 = vpop.f32.mrb[0].mxu0
      %v1950 = vadd.f32 0.0, %v1949
      %v1951 = vpop.f32.mrb[0].mxu0
      %v1952 = vpop.f32.mrb[0].mxu0
      %v1953 = vadd.f32 0.0, %v1952
      %v1954 = vpop.f32.mrb[0].mxu0
      %1955 = vmatprep.mubr.bf16.mxu0 0
      %1956 = vmatmul.mubr.bf16.gmra.mrb[0].mxu0 %v744
      %v1957 = vpop.f32.mrb[0].mxu0
      %v1958 = vadd.f32 0.0, %v1957
      %v1959 = vpop.f32.mrb[0].mxu0
      %v1960 = vpop.f32.mrb[0].mxu0
      %v1961 = vadd.f32 0.0, %v1960
      %v1962 = vpop.f32.mrb[0].mxu0
      %1963 = vmatprep.mubr.bf16.mxu0 0
      %1964 = vmatmul.mubr.bf16.gmra.mrb[0].mxu0 %v745
      %v1965 = vpop.f32.mrb[0].mxu0
      %v1966 = vadd.f32 0.0, %v1965
      %v1967 = vpop.f32.mrb[0].mxu0
      %v1968 = vpop.f32.mrb[0].mxu0
      %v1969 = vadd.f32 0.0, %v1968
      %v1970 = vpop.f32.mrb[0].mxu0
      %1971 = vmatprep.mubr.bf16.mxu0 0
      %1972 = vmatmul.mubr.bf16.gmra.mrb[0].mxu0 %v746
      %v1973 = vpop.f32.mrb[0].mxu0
      %v1974 = vadd.f32 0.0, %v1973
      %v1975 = vpop.f32.mrb[0].mxu0
      %v1976 = vpop.f32.mrb[0].mxu0
      %v1977 = vadd.f32 0.0, %v1976
      %v1978 = vpop.f32.mrb[0].mxu0
      %1979 = vmatprep.mubr.bf16.mxu0 0
      %1980 = vmatmul.mubr.bf16.gmra.mrb[0].mxu0 %v747
      %v1981 = vpop.f32.mrb[0].mxu0
      %v1982 = vadd.f32 0.0, %v1981
      %v1983 = vpop.f32.mrb[0].mxu0
      %v1984 = vpop.f32.mrb[0].mxu0
      %v1985 = vadd.f32 0.0, %v1984
      %v1986 = vpop.f32.mrb[0].mxu0
      %1987 = vmatprep.mubr.bf16.mxu0 0
      %1988 = vmatmul.mubr.bf16.gmra.mrb[0].mxu0 %v748
      %v1989 = vpop.f32.mrb[0].mxu0
      %v1990 = vadd.f32 0.0, %v1989
      %v1991 = vpop.f32.mrb[0].mxu0
      %v1992 = vpop.f32.mrb[0].mxu0
      %v1993 = vadd.f32 0.0, %v1992
      %v1994 = vpop.f32.mrb[0].mxu0
      %1995 = vmatprep.mubr.bf16.mxu0 0
      %1996 = vmatmul.mubr.bf16.gmra.mrb[0].mxu0 %v749
      %v1997 = vpop.f32.mrb[0].mxu0
      %v1998 = vadd.f32 0.0, %v1997
      %v1999 = vpop.f32.mrb[0].mxu0
      %v2000 = vpop.f32.mrb[0].mxu0
      %v2001 = vadd.f32 0.0, %v2000
      %v2002 = vpop.f32.mrb[0].mxu0
      %2003 = vmatprep.mubr.bf16.mxu0 0
      %2004 = vmatmul.mubr.bf16.gmra.mrb[0].mxu0 %v750
      %v2005 = vpop.f32.mrb[0].mxu0
      %v2006 = vadd.f32 0.0, %v2005
      %v2007 = vpop.f32.mrb[0].mxu0
      %v2008 = vpop.f32.mrb[0].mxu0
      %v2009 = vadd.f32 0.0, %v2008
      %v2010 = vpop.f32.mrb[0].mxu0
      %2011 = vmatprep.mubr.bf16.mxu0 0
      %2012 = vmatmul.mubr.bf16.gmra.mrb[0].mxu0 %v751
      %v2013 = vpop.f32.mrb[0].mxu0
      %v2014 = vadd.f32 0.0, %v2013
      %v2015 = vpop.f32.mrb[0].mxu0
      %v2016 = vpop.f32.mrb[0].mxu0
      %v2017 = vadd.f32 0.0, %v2016
      %v2018 = vpop.f32.mrb[0].mxu0
      %2019 = vmatprep.mubr.bf16.mxu0 0
      %2020 = vmatmul.mubr.bf16.gmra.mrb[0].mxu0 %v752
      %v2021 = vpop.f32.mrb[0].mxu0
      %v2022 = vadd.f32 0.0, %v2021
      %v2023 = vpop.f32.mrb[0].mxu0
      %v2024 = vpop.f32.mrb[0].mxu0
      %v2025 = vadd.f32 0.0, %v2024
      %v2026 = vpop.f32.mrb[0].mxu0
      %2027 = vmatprep.mubr.bf16.mxu0 0
      %2028 = vmatmul.mubr.bf16.gmra.mrb[0].mxu0 %v753
      %v2029 = vpop.f32.mrb[0].mxu0
      %v2030 = vadd.f32 0.0, %v2029
      %v2031 = vpop.f32.mrb[0].mxu0
      %v2032 = vpop.f32.mrb[0].mxu0
      %v2033 = vadd.f32 0.0, %v2032
      %v2034 = vpop.f32.mrb[0].mxu0
      %2035 = vmatprep.mubr.bf16.mxu0 0
      %2036 = vmatmul.mubr.bf16.gmra.mrb[0].mxu0 %v754
      %v2037 = vpop.f32.mrb[0].mxu0
      %v2038 = vadd.f32 0.0, %v2037
      %v2039 = vpop.f32.mrb[0].mxu0
      %v2040 = vpop.f32.mrb[0].mxu0
      %v2041 = vadd.f32 0.0, %v2040
      %v2042 = vpop.f32.mrb[0].mxu0
      %2043 = vmatprep.mubr.bf16.mxu0 0
      %2044 = vmatmul.mubr.bf16.gmra.mrb[0].mxu0 %v755
      %v2045 = vpop.f32.mrb[0].mxu0
      %v2046 = vadd.f32 0.0, %v2045
      %v2047 = vpop.f32.mrb[0].mxu0
      %v2048 = vpop.f32.mrb[0].mxu0
      %v2049 = vadd.f32 0.0, %v2048
      %v2050 = vpop.f32.mrb[0].mxu0
      %2051 = vmatprep.mubr.bf16.mxu0 0
      %2052 = vmatmul.mubr.bf16.gmra.mrb[0].mxu0 %v756
      %v2053 = vpop.f32.mrb[0].mxu0
      %v2054 = vadd.f32 0.0, %v2053
      %v2055 = vpop.f32.mrb[0].mxu0
      %v2056 = vpop.f32.mrb[0].mxu0
      %v2057 = vadd.f32 0.0, %v2056
      %v2058 = vpop.f32.mrb[0].mxu0
      %2059 = vmatprep.mubr.bf16.mxu0 0
      %2060 = vmatmul.mubr.bf16.gmra.mrb[0].mxu0 %v757
      %v2061 = vpop.f32.mrb[0].mxu0
      %v2062 = vadd.f32 0.0, %v2061
      %v2063 = vpop.f32.mrb[0].mxu0
      %v2064 = vpop.f32.mrb[0].mxu0
      %v2065 = vadd.f32 0.0, %v2064
      %v2066 = vpop.f32.mrb[0].mxu0
      %2067 = vmatprep.mubr.bf16.mxu0 0
      %2068 = vmatmul.mubr.bf16.gmra.mrb[0].mxu0 %v1849
      %v2069 = vpop.f32.mrb[0].mxu0
      %v2070 = vadd.f32 0.0, %v2069
      %v2071 = vpop.f32.mrb[0].mxu0
      %v2072 = vpop.f32.mrb[0].mxu0
      %v2073 = vadd.f32 0.0, %v2072
      %v2074 = vpop.f32.mrb[0].mxu0
      %2075 = vdwg.mxu0
      %v2076 = vadd.f32 %v1807, %v1950
      %v2077 = vadd.f32 %v1808, %v1953
      %v2078 = vadd.f32 %v1809, %v1958
      %v2079 = vadd.f32 %v1810, %v1961
      %v2080 = vadd.f32 %v1811, %v1966
      %v2081 = vadd.f32 %v1812, %v1969
      %v2082 = vadd.f32 %v1813, %v1974
      %v2083 = vadd.f32 %v1814, %v1977
      %v2084 = vadd.f32 %v1815, %v1982
      %v2085 = vadd.f32 %v1816, %v1985
      %v2086 = vadd.f32 %v1817, %v1990
      %v2087 = vadd.f32 %v1818, %v1993
      %v2088 = vadd.f32 %v1819, %v1998
      %v2089 = vadd.f32 %v1820, %v2001
      %v2090 = vadd.f32 %v1821, %v2006
      %v2091 = vadd.f32 %v1822, %v2009
      %v2092 = vadd.f32 %v1823, %v2014
      %v2093 = vadd.f32 %v1824, %v2017
      %v2094 = vadd.f32 %v1825, %v2022
      %v2095 = vadd.f32 %v1826, %v2025
      %v2096 = vadd.f32 %v1827, %v2030
      %v2097 = vadd.f32 %v1828, %v2033
      %v2098 = vadd.f32 %v1829, %v2038
      %v2099 = vadd.f32 %v1830, %v2041
      %v2100 = vadd.f32 %v1831, %v2046
      %v2101 = vadd.f32 %v1832, %v2049
      %v2102 = vadd.f32 %v1833, %v2054
      %v2103 = vadd.f32 %v1834, %v2057
      %v2104 = vadd.f32 %v1835, %v2062
      %v2105 = vadd.f32 %v1836, %v2065
      %v2106 = vadd.f32 %v1837, %v2070
      %v2107 = vadd.f32 %v1838, %v2073
      %v2108 = vrot.slane %v543, 2
      %v2109 = vrot.slane %v544, 2
      %v2110 = vsel %vm1193, %v2108, %v2109
      %v2111 = vrot.slane %v545, 2
      %v2112 = vsel %vm1193, %v2109, %v2111
      %v2115 = vpack.c.bf16 %v2112, %v2110
      %s2116 = scalar_lea.vmem %s2, 320
      %v2117 = vld [vmem:[%s2116] sm:$0xf]
      %v2118 = vld [vmem:[%s2116 + $0x4] sm:$0xf]
      %v2119 = vld [vmem:[%s2116 + $0x8] sm:$0xf]
      %v2120 = vld [vmem:[%s2116 + $0xc] sm:$0xf]
      %v2121 = vld [vmem:[%s2116 + $0x10] sm:$0xf]
      %v2122 = vld [vmem:[%s2116 + $0x14] sm:$0xf]
      %v2123 = vld [vmem:[%s2116 + $0x18] sm:$0xf]
      %v2124 = vld [vmem:[%s2116 + $0x1c] sm:$0xf]
      %v2125 = vld [vmem:[%s2116 + $0x20] sm:$0xf]
      %v2126 = vld [vmem:[%s2116 + $0x24] sm:$0xf]
      %v2127 = vld [vmem:[%s2116 + $0x28] sm:$0xf]
      %v2128 = vld [vmem:[%s2116 + $0x2c] sm:$0xf]
      %v2129 = vld [vmem:[%s2116 + $0x30] sm:$0xf]
      %v2130 = vld [vmem:[%s2116 + $0x34] sm:$0xf]
      %v2131 = vld [vmem:[%s2116 + $0x38] sm:$0xf]
      %v2132 = vld [vmem:[%s2116 + $0x3c] sm:$0xf]
      %v2149 = vunpack.c.l.b16 %v2117
      %v2150 = vunpack.c.l.b16 %v2118
      %v2151 = vunpack.c.l.b16 %v2119
      %v2152 = vunpack.c.l.b16 %v2120
      %v2153 = vunpack.c.l.b16 %v2121
      %v2154 = vunpack.c.l.b16 %v2122
      %v2155 = vunpack.c.l.b16 %v2123
      %v2156 = vunpack.c.l.b16 %v2124
      %v2157 = vunpack.c.l.b16 %v2125
      %v2158 = vunpack.c.l.b16 %v2126
      %v2159 = vunpack.c.l.b16 %v2127
      %v2160 = vunpack.c.l.b16 %v2128
      %v2161 = vunpack.c.l.b16 %v2129
      %v2162 = vunpack.c.l.b16 %v2130
      %v2163 = vunpack.c.l.b16 %v2131
      %v2164 = vunpack.c.l.b16 %v2132
      %v2165 = vpack.c.b16 %v2150, %v2149
      %v2166 = vpack.c.b16 %v2152, %v2151
      %v2167 = vpack.c.b16 %v2154, %v2153
      %v2168 = vpack.c.b16 %v2156, %v2155
      %v2169 = vpack.c.b16 %v2158, %v2157
      %v2170 = vpack.c.b16 %v2160, %v2159
      %v2171 = vpack.c.b16 %v2162, %v2161
      %v2172 = vpack.c.b16 %v2164, %v2163
      %2181 = vmatprep.subr.bf16.mxu0 0
      %2182 = vmatpush1.bf16.msra.mxu0 %v2165
      %2183 = vmatprep.subr.bf16.mxu0 0
      %2184 = vmatpush1.bf16.msra.mxu0 %v2166
      %2185 = vmatprep.subr.bf16.mxu0 0
      %2186 = vmatpush1.bf16.msra.mxu0 %v2167
      %2187 = vmatprep.subr.bf16.mxu0 0
      %2188 = vmatpush1.bf16.msra.mxu0 %v2168
      %2189 = vmatprep.subr.bf16.mxu0 0
      %2190 = vmatpush1.bf16.msra.mxu0 %v2169
      %2191 = vmatprep.subr.bf16.mxu0 0
      %2192 = vmatpush1.bf16.msra.mxu0 %v2170
      %2193 = vmatprep.subr.bf16.mxu0 0
      %2194 = vmatpush1.bf16.msra.mxu0 %v2171
      %2195 = vmatprep.subr.bf16.mxu0 0
      %2196 = vmatpush1.bf16.msra.mxu0 %v2172
      %2197 = vmatprep.subr.bf16.mxu0 0
      %2198 = vmatpush1.bf16.msra.mxu0 0
      %2199 = vmatprep.subr.bf16.mxu0 0
      %2200 = vmatpush1.bf16.msra.mxu0 0
      %2201 = vmatprep.subr.bf16.mxu0 0
      %2202 = vmatpush1.bf16.msra.mxu0 0
      %2203 = vmatprep.subr.bf16.mxu0 0
      %2204 = vmatpush1.bf16.msra.mxu0 0
      %2205 = vmatprep.subr.bf16.mxu0 0
      %2206 = vmatpush1.bf16.msra.mxu0 0
      %2207 = vmatprep.subr.bf16.mxu0 0
      %2208 = vmatpush1.bf16.msra.mxu0 0
      %2209 = vmatprep.subr.bf16.mxu0 0
      %2210 = vmatpush1.bf16.msra.mxu0 0
      %2211 = vmatprep.subr.bf16.mxu0 0
      %2212 = vmatpush1.bf16.msra.mxu0 0
      %2213 = vmatprep.mubr.bf16.mxu0 0
      %2214 = vmatmul.mubr.bf16.gmra.mrb[0].mxu0 %v1307
      %v2215 = vpop.f32.mrb[0].mxu0
      %v2216 = vadd.f32 0.0, %v2215
      %v2217 = vpop.f32.mrb[0].mxu0
      %v2218 = vpop.f32.mrb[0].mxu0
      %v2219 = vadd.f32 0.0, %v2218
      %v2220 = vpop.f32.mrb[0].mxu0
      %2221 = vmatprep.mubr.bf16.mxu0 0
      %2222 = vmatmul.mubr.bf16.gmra.mrb[0].mxu0 %v1308
      %v2223 = vpop.f32.mrb[0].mxu0
      %v2224 = vadd.f32 0.0, %v2223
      %v2225 = vpop.f32.mrb[0].mxu0
      %v2226 = vpop.f32.mrb[0].mxu0
      %v2227 = vadd.f32 0.0, %v2226
      %v2228 = vpop.f32.mrb[0].mxu0
      %2229 = vmatprep.mubr.bf16.mxu0 0
      %2230 = vmatmul.mubr.bf16.gmra.mrb[0].mxu0 %v1309
      %v2231 = vpop.f32.mrb[0].mxu0
      %v2232 = vadd.f32 0.0, %v2231
      %v2233 = vpop.f32.mrb[0].mxu0
      %v2234 = vpop.f32.mrb[0].mxu0
      %v2235 = vadd.f32 0.0, %v2234
      %v2236 = vpop.f32.mrb[0].mxu0
      %2237 = vmatprep.mubr.bf16.mxu0 0
      %2238 = vmatmul.mubr.bf16.gmra.mrb[0].mxu0 %v1310
      %v2239 = vpop.f32.mrb[0].mxu0
      %v2240 = vadd.f32 0.0, %v2239
      %v2241 = vpop.f32.mrb[0].mxu0
      %v2242 = vpop.f32.mrb[0].mxu0
      %v2243 = vadd.f32 0.0, %v2242
      %v2244 = vpop.f32.mrb[0].mxu0
      %2245 = vmatprep.mubr.bf16.mxu0 0
      %2246 = vmatmul.mubr.bf16.gmra.mrb[0].mxu0 %v1311
      %v2247 = vpop.f32.mrb[0].mxu0
      %v2248 = vadd.f32 0.0, %v2247
      %v2249 = vpop.f32.mrb[0].mxu0
      %v2250 = vpop.f32.mrb[0].mxu0
      %v2251 = vadd.f32 0.0, %v2250
      %v2252 = vpop.f32.mrb[0].mxu0
      %2253 = vmatprep.mubr.bf16.mxu0 0
      %2254 = vmatmul.mubr.bf16.gmra.mrb[0].mxu0 %v1312
      %v2255 = vpop.f32.mrb[0].mxu0
      %v2256 = vadd.f32 0.0, %v2255
      %v2257 = vpop.f32.mrb[0].mxu0
      %v2258 = vpop.f32.mrb[0].mxu0
      %v2259 = vadd.f32 0.0, %v2258
      %v2260 = vpop.f32.mrb[0].mxu0
      %2261 = vmatprep.mubr.bf16.mxu0 0
      %2262 = vmatmul.mubr.bf16.gmra.mrb[0].mxu0 %v1313
      %v2263 = vpop.f32.mrb[0].mxu0
      %v2264 = vadd.f32 0.0, %v2263
      %v2265 = vpop.f32.mrb[0].mxu0
      %v2266 = vpop.f32.mrb[0].mxu0
      %v2267 = vadd.f32 0.0, %v2266
      %v2268 = vpop.f32.mrb[0].mxu0
      %2269 = vmatprep.mubr.bf16.mxu0 0
      %2270 = vmatmul.mubr.bf16.gmra.mrb[0].mxu0 %v1314
      %v2271 = vpop.f32.mrb[0].mxu0
      %v2272 = vadd.f32 0.0, %v2271
      %v2273 = vpop.f32.mrb[0].mxu0
      %v2274 = vpop.f32.mrb[0].mxu0
      %v2275 = vadd.f32 0.0, %v2274
      %v2276 = vpop.f32.mrb[0].mxu0
      %2277 = vmatprep.mubr.bf16.mxu0 0
      %2278 = vmatmul.mubr.bf16.gmra.mrb[0].mxu0 %v1315
      %v2279 = vpop.f32.mrb[0].mxu0
      %v2280 = vadd.f32 0.0, %v2279
      %v2281 = vpop.f32.mrb[0].mxu0
      %v2282 = vpop.f32.mrb[0].mxu0
      %v2283 = vadd.f32 0.0, %v2282
      %v2284 = vpop.f32.mrb[0].mxu0
      %2285 = vmatprep.mubr.bf16.mxu0 0
      %2286 = vmatmul.mubr.bf16.gmra.mrb[0].mxu0 %v1316
      %v2287 = vpop.f32.mrb[0].mxu0
      %v2288 = vadd.f32 0.0, %v2287
      %v2289 = vpop.f32.mrb[0].mxu0
      %v2290 = vpop.f32.mrb[0].mxu0
      %v2291 = vadd.f32 0.0, %v2290
      %v2292 = vpop.f32.mrb[0].mxu0
      %2293 = vmatprep.mubr.bf16.mxu0 0
      %2294 = vmatmul.mubr.bf16.gmra.mrb[0].mxu0 %v1317
      %v2295 = vpop.f32.mrb[0].mxu0
      %v2296 = vadd.f32 0.0, %v2295
      %v2297 = vpop.f32.mrb[0].mxu0
      %v2298 = vpop.f32.mrb[0].mxu0
      %v2299 = vadd.f32 0.0, %v2298
      %v2300 = vpop.f32.mrb[0].mxu0
      %2301 = vmatprep.mubr.bf16.mxu0 0
      %2302 = vmatmul.mubr.bf16.gmra.mrb[0].mxu0 %v1318
      %v2303 = vpop.f32.mrb[0].mxu0
      %v2304 = vadd.f32 0.0, %v2303
      %v2305 = vpop.f32.mrb[0].mxu0
      %v2306 = vpop.f32.mrb[0].mxu0
      %v2307 = vadd.f32 0.0, %v2306
      %v2308 = vpop.f32.mrb[0].mxu0
      %2309 = vmatprep.mubr.bf16.mxu0 0
      %2310 = vmatmul.mubr.bf16.gmra.mrb[0].mxu0 %v1319
      %v2311 = vpop.f32.mrb[0].mxu0
      %v2312 = vadd.f32 0.0, %v2311
      %v2313 = vpop.f32.mrb[0].mxu0
      %v2314 = vpop.f32.mrb[0].mxu0
      %v2315 = vadd.f32 0.0, %v2314
      %v2316 = vpop.f32.mrb[0].mxu0
      %2317 = vmatprep.mubr.bf16.mxu0 0
      %2318 = vmatmul.mubr.bf16.gmra.mrb[0].mxu0 %v1320
      %v2319 = vpop.f32.mrb[0].mxu0
      %v2320 = vadd.f32 0.0, %v2319
      %v2321 = vpop.f32.mrb[0].mxu0
      %v2322 = vpop.f32.mrb[0].mxu0
      %v2323 = vadd.f32 0.0, %v2322
      %v2324 = vpop.f32.mrb[0].mxu0
      %2325 = vmatprep.mubr.bf16.mxu0 0
      %2326 = vmatmul.mubr.bf16.gmra.mrb[0].mxu0 %v1321
      %v2327 = vpop.f32.mrb[0].mxu0
      %v2328 = vadd.f32 0.0, %v2327
      %v2329 = vpop.f32.mrb[0].mxu0
      %v2330 = vpop.f32.mrb[0].mxu0
      %v2331 = vadd.f32 0.0, %v2330
      %v2332 = vpop.f32.mrb[0].mxu0
      %2333 = vmatprep.mubr.bf16.mxu0 0
      %2334 = vmatmul.mubr.bf16.gmra.mrb[0].mxu0 %v2115
      %v2335 = vpop.f32.mrb[0].mxu0
      %v2336 = vadd.f32 0.0, %v2335
      %v2337 = vpop.f32.mrb[0].mxu0
      %v2338 = vpop.f32.mrb[0].mxu0
      %v2339 = vadd.f32 0.0, %v2338
      %v2340 = vpop.f32.mrb[0].mxu0
      %2341 = vdwg.mxu0
      %v2342 = vadd.f32 %v2076, %v2216
      %v2343 = vadd.f32 %v2077, %v2219
      %v2344 = vadd.f32 %v2078, %v2224
      %v2345 = vadd.f32 %v2079, %v2227
      %v2346 = vadd.f32 %v2080, %v2232
      %v2347 = vadd.f32 %v2081, %v2235
      %v2348 = vadd.f32 %v2082, %v2240
      %v2349 = vadd.f32 %v2083, %v2243
      %v2350 = vadd.f32 %v2084, %v2248
      %v2351 = vadd.f32 %v2085, %v2251
      %v2352 = vadd.f32 %v2086, %v2256
      %v2353 = vadd.f32 %v2087, %v2259
      %v2354 = vadd.f32 %v2088, %v2264
      %v2355 = vadd.f32 %v2089, %v2267
      %v2356 = vadd.f32 %v2090, %v2272
      %v2357 = vadd.f32 %v2091, %v2275
      %v2358 = vadd.f32 %v2092, %v2280
      %v2359 = vadd.f32 %v2093, %v2283
      %v2360 = vadd.f32 %v2094, %v2288
      %v2361 = vadd.f32 %v2095, %v2291
      %v2362 = vadd.f32 %v2096, %v2296
      %v2363 = vadd.f32 %v2097, %v2299
      %v2364 = vadd.f32 %v2098, %v2304
      %v2365 = vadd.f32 %v2099, %v2307
      %v2366 = vadd.f32 %v2100, %v2312
      %v2367 = vadd.f32 %v2101, %v2315
      %v2368 = vadd.f32 %v2102, %v2320
      %v2369 = vadd.f32 %v2103, %v2323
      %v2370 = vadd.f32 %v2104, %v2328
      %v2371 = vadd.f32 %v2105, %v2331
      %v2372 = vadd.f32 %v2106, %v2336
      %v2373 = vadd.f32 %v2107, %v2339
      %v2374 = vpack.c.bf16 %v547, %v546
      %s2375 = scalar_lea.vmem %s2, 384
      %v2376 = vld [vmem:[%s2375] sm:$0xf]
      %v2377 = vld [vmem:[%s2375 + $0x4] sm:$0xf]
      %v2378 = vld [vmem:[%s2375 + $0x8] sm:$0xf]
      %v2379 = vld [vmem:[%s2375 + $0xc] sm:$0xf]
      %v2380 = vld [vmem:[%s2375 + $0x10] sm:$0xf]
      %v2381 = vld [vmem:[%s2375 + $0x14] sm:$0xf]
      %v2382 = vld [vmem:[%s2375 + $0x18] sm:$0xf]
      %v2383 = vld [vmem:[%s2375 + $0x1c] sm:$0xf]
      %v2384 = vld [vmem:[%s2375 + $0x20] sm:$0xf]
      %v2385 = vld [vmem:[%s2375 + $0x24] sm:$0xf]
      %v2386 = vld [vmem:[%s2375 + $0x28] sm:$0xf]
      %v2387 = vld [vmem:[%s2375 + $0x2c] sm:$0xf]
      %v2388 = vld [vmem:[%s2375 + $0x30] sm:$0xf]
      %v2389 = vld [vmem:[%s2375 + $0x34] sm:$0xf]
      %v2390 = vld [vmem:[%s2375 + $0x38] sm:$0xf]
      %v2391 = vld [vmem:[%s2375 + $0x3c] sm:$0xf]
      %v2408 = vunpack.c.l.b16 %v2376
      %v2409 = vunpack.c.l.b16 %v2377
      %v2410 = vunpack.c.l.b16 %v2378
      %v2411 = vunpack.c.l.b16 %v2379
      %v2412 = vunpack.c.l.b16 %v2380
      %v2413 = vunpack.c.l.b16 %v2381
      %v2414 = vunpack.c.l.b16 %v2382
      %v2415 = vunpack.c.l.b16 %v2383
      %v2416 = vunpack.c.l.b16 %v2384
      %v2417 = vunpack.c.l.b16 %v2385
      %v2418 = vunpack.c.l.b16 %v2386
      %v2419 = vunpack.c.l.b16 %v2387
      %v2420 = vunpack.c.l.b16 %v2388
      %v2421 = vunpack.c.l.b16 %v2389
      %v2422 = vunpack.c.l.b16 %v2390
      %v2423 = vunpack.c.l.b16 %v2391
      %v2424 = vpack.c.b16 %v2409, %v2408
      %v2425 = vpack.c.b16 %v2411, %v2410
      %v2426 = vpack.c.b16 %v2413, %v2412
      %v2427 = vpack.c.b16 %v2415, %v2414
      %v2428 = vpack.c.b16 %v2417, %v2416
      %v2429 = vpack.c.b16 %v2419, %v2418
      %v2430 = vpack.c.b16 %v2421, %v2420
      %v2431 = vpack.c.b16 %v2423, %v2422
      %2440 = vmatprep.subr.bf16.mxu0 0
      %2441 = vmatpush1.bf16.msra.mxu0 %v2424
      %2442 = vmatprep.subr.bf16.mxu0 0
      %2443 = vmatpush1.bf16.msra.mxu0 %v2425
      %2444 = vmatprep.subr.bf16.mxu0 0
      %2445 = vmatpush1.bf16.msra.mxu0 %v2426
      %2446 = vmatprep.subr.bf16.mxu0 0
      %2447 = vmatpush1.bf16.msra.mxu0 %v2427
      %2448 = vmatprep.subr.bf16.mxu0 0
      %2449 = vmatpush1.bf16.msra.mxu0 %v2428
      %2450 = vmatprep.subr.bf16.mxu0 0
      %2451 = vmatpush1.bf16.msra.mxu0 %v2429
      %2452 = vmatprep.subr.bf16.mxu0 0
      %2453 = vmatpush1.bf16.msra.mxu0 %v2430
      %2454 = vmatprep.subr.bf16.mxu0 0
      %2455 = vmatpush1.bf16.msra.mxu0 %v2431
      %2456 = vmatprep.subr.bf16.mxu0 0
      %2457 = vmatpush1.bf16.msra.mxu0 0
      %2458 = vmatprep.subr.bf16.mxu0 0
      %2459 = vmatpush1.bf16.msra.mxu0 0
      %2460 = vmatprep.subr.bf16.mxu0 0
      %2461 = vmatpush1.bf16.msra.mxu0 0
      %2462 = vmatprep.subr.bf16.mxu0 0
      %2463 = vmatpush1.bf16.msra.mxu0 0
      %2464 = vmatprep.subr.bf16.mxu0 0
      %2465 = vmatpush1.bf16.msra.mxu0 0
      %2466 = vmatprep.subr.bf16.mxu0 0
      %2467 = vmatpush1.bf16.msra.mxu0 0
      %2468 = vmatprep.subr.bf16.mxu0 0
      %2469 = vmatpush1.bf16.msra.mxu0 0
      %2470 = vmatprep.subr.bf16.mxu0 0
      %2471 = vmatpush1.bf16.msra.mxu0 0
      %2472 = vmatprep.mubr.bf16.mxu0 0
      %2473 = vmatmul.mubr.bf16.gmra.mrb[0].mxu0 %v551
      %v2474 = vpop.f32.mrb[0].mxu0
      %v2475 = vadd.f32 0.0, %v2474
      %v2476 = vpop.f32.mrb[0].mxu0
      %v2477 = vpop.f32.mrb[0].mxu0
      %v2478 = vadd.f32 0.0, %v2477
      %v2479 = vpop.f32.mrb[0].mxu0
      %2480 = vmatprep.mubr.bf16.mxu0 0
      %2481 = vmatmul.mubr.bf16.gmra.mrb[0].mxu0 %v552
      %v2482 = vpop.f32.mrb[0].mxu0
      %v2483 = vadd.f32 0.0, %v2482
      %v2484 = vpop.f32.mrb[0].mxu0
      %v2485 = vpop.f32.mrb[0].mxu0
      %v2486 = vadd.f32 0.0, %v2485
      %v2487 = vpop.f32.mrb[0].mxu0
      %2488 = vmatprep.mubr.bf16.mxu0 0
      %2489 = vmatmul.mubr.bf16.gmra.mrb[0].mxu0 %v553
      %v2490 = vpop.f32.mrb[0].mxu0
      %v2491 = vadd.f32 0.0, %v2490
      %v2492 = vpop.f32.mrb[0].mxu0
      %v2493 = vpop.f32.mrb[0].mxu0
      %v2494 = vadd.f32 0.0, %v2493
      %v2495 = vpop.f32.mrb[0].mxu0
      %2496 = vmatprep.mubr.bf16.mxu0 0
      %2497 = vmatmul.mubr.bf16.gmra.mrb[0].mxu0 %v554
      %v2498 = vpop.f32.mrb[0].mxu0
      %v2499 = vadd.f32 0.0, %v2498
      %v2500 = vpop.f32.mrb[0].mxu0
      %v2501 = vpop.f32.mrb[0].mxu0
      %v2502 = vadd.f32 0.0, %v2501
      %v2503 = vpop.f32.mrb[0].mxu0
      %2504 = vmatprep.mubr.bf16.mxu0 0
      %2505 = vmatmul.mubr.bf16.gmra.mrb[0].mxu0 %v555
      %v2506 = vpop.f32.mrb[0].mxu0
      %v2507 = vadd.f32 0.0, %v2506
      %v2508 = vpop.f32.mrb[0].mxu0
      %v2509 = vpop.f32.mrb[0].mxu0
      %v2510 = vadd.f32 0.0, %v2509
      %v2511 = vpop.f32.mrb[0].mxu0
      %2512 = vmatprep.mubr.bf16.mxu0 0
      %2513 = vmatmul.mubr.bf16.gmra.mrb[0].mxu0 %v556
      %v2514 = vpop.f32.mrb[0].mxu0
      %v2515 = vadd.f32 0.0, %v2514
      %v2516 = vpop.f32.mrb[0].mxu0
      %v2517 = vpop.f32.mrb[0].mxu0
      %v2518 = vadd.f32 0.0, %v2517
      %v2519 = vpop.f32.mrb[0].mxu0
      %2520 = vmatprep.mubr.bf16.mxu0 0
      %2521 = vmatmul.mubr.bf16.gmra.mrb[0].mxu0 %v557
      %v2522 = vpop.f32.mrb[0].mxu0
      %v2523 = vadd.f32 0.0, %v2522
      %v2524 = vpop.f32.mrb[0].mxu0
      %v2525 = vpop.f32.mrb[0].mxu0
      %v2526 = vadd.f32 0.0, %v2525
      %v2527 = vpop.f32.mrb[0].mxu0
      %2528 = vmatprep.mubr.bf16.mxu0 0
      %2529 = vmatmul.mubr.bf16.gmra.mrb[0].mxu0 %v558
      %v2530 = vpop.f32.mrb[0].mxu0
      %v2531 = vadd.f32 0.0, %v2530
      %v2532 = vpop.f32.mrb[0].mxu0
      %v2533 = vpop.f32.mrb[0].mxu0
      %v2534 = vadd.f32 0.0, %v2533
      %v2535 = vpop.f32.mrb[0].mxu0
      %2536 = vmatprep.mubr.bf16.mxu0 0
      %2537 = vmatmul.mubr.bf16.gmra.mrb[0].mxu0 %v559
      %v2538 = vpop.f32.mrb[0].mxu0
      %v2539 = vadd.f32 0.0, %v2538
      %v2540 = vpop.f32.mrb[0].mxu0
      %v2541 = vpop.f32.mrb[0].mxu0
      %v2542 = vadd.f32 0.0, %v2541
      %v2543 = vpop.f32.mrb[0].mxu0
      %2544 = vmatprep.mubr.bf16.mxu0 0
      %2545 = vmatmul.mubr.bf16.gmra.mrb[0].mxu0 %v560
      %v2546 = vpop.f32.mrb[0].mxu0
      %v2547 = vadd.f32 0.0, %v2546
      %v2548 = vpop.f32.mrb[0].mxu0
      %v2549 = vpop.f32.mrb[0].mxu0
      %v2550 = vadd.f32 0.0, %v2549
      %v2551 = vpop.f32.mrb[0].mxu0
      %2552 = vmatprep.mubr.bf16.mxu0 0
      %2553 = vmatmul.mubr.bf16.gmra.mrb[0].mxu0 %v561
      %v2554 = vpop.f32.mrb[0].mxu0
      %v2555 = vadd.f32 0.0, %v2554
      %v2556 = vpop.f32.mrb[0].mxu0
      %v2557 = vpop.f32.mrb[0].mxu0
      %v2558 = vadd.f32 0.0, %v2557
      %v2559 = vpop.f32.mrb[0].mxu0
      %2560 = vmatprep.mubr.bf16.mxu0 0
      %2561 = vmatmul.mubr.bf16.gmra.mrb[0].mxu0 %v562
      %v2562 = vpop.f32.mrb[0].mxu0
      %v2563 = vadd.f32 0.0, %v2562
      %v2564 = vpop.f32.mrb[0].mxu0
      %v2565 = vpop.f32.mrb[0].mxu0
      %v2566 = vadd.f32 0.0, %v2565
      %v2567 = vpop.f32.mrb[0].mxu0
      %2568 = vmatprep.mubr.bf16.mxu0 0
      %2569 = vmatmul.mubr.bf16.gmra.mrb[0].mxu0 %v563
      %v2570 = vpop.f32.mrb[0].mxu0
      %v2571 = vadd.f32 0.0, %v2570
      %v2572 = vpop.f32.mrb[0].mxu0
      %v2573 = vpop.f32.mrb[0].mxu0
      %v2574 = vadd.f32 0.0, %v2573
      %v2575 = vpop.f32.mrb[0].mxu0
      %2576 = vmatprep.mubr.bf16.mxu0 0
      %2577 = vmatmul.mubr.bf16.gmra.mrb[0].mxu0 %v564
      %v2578 = vpop.f32.mrb[0].mxu0
      %v2579 = vadd.f32 0.0, %v2578
      %v2580 = vpop.f32.mrb[0].mxu0
      %v2581 = vpop.f32.mrb[0].mxu0
      %v2582 = vadd.f32 0.0, %v2581
      %v2583 = vpop.f32.mrb[0].mxu0
      %2584 = vmatprep.mubr.bf16.mxu0 0
      %2585 = vmatmul.mubr.bf16.gmra.mrb[0].mxu0 %v1580
      %v2586 = vpop.f32.mrb[0].mxu0
      %v2587 = vadd.f32 0.0, %v2586
      %v2588 = vpop.f32.mrb[0].mxu0
      %v2589 = vpop.f32.mrb[0].mxu0
      %v2590 = vadd.f32 0.0, %v2589
      %v2591 = vpop.f32.mrb[0].mxu0
      %2592 = vmatprep.mubr.bf16.mxu0 0
      %2593 = vmatmul.mubr.bf16.gmra.mrb[0].mxu0 %v2374
      %v2594 = vpop.f32.mrb[0].mxu0
      %v2595 = vadd.f32 0.0, %v2594
      %v2596 = vpop.f32.mrb[0].mxu0
      %v2597 = vpop.f32.mrb[0].mxu0
      %v2598 = vadd.f32 0.0, %v2597
      %v2599 = vpop.f32.mrb[0].mxu0
      %2600 = vdwg.mxu0
      %v2601 = vadd.f32 %v2342, %v2475
      %v2602 = vadd.f32 %v2343, %v2478
      %v2603 = vadd.f32 %v2344, %v2483
      %v2604 = vadd.f32 %v2345, %v2486
      %v2605 = vadd.f32 %v2346, %v2491
      %v2606 = vadd.f32 %v2347, %v2494
      %v2607 = vadd.f32 %v2348, %v2499
      %v2608 = vadd.f32 %v2349, %v2502
      %v2609 = vadd.f32 %v2350, %v2507
      %v2610 = vadd.f32 %v2351, %v2510
      %v2611 = vadd.f32 %v2352, %v2515
      %v2612 = vadd.f32 %v2353, %v2518
      %v2613 = vadd.f32 %v2354, %v2523
      %v2614 = vadd.f32 %v2355, %v2526
      %v2615 = vadd.f32 %v2356, %v2531
      %v2616 = vadd.f32 %v2357, %v2534
      %v2617 = vadd.f32 %v2358, %v2539
      %v2618 = vadd.f32 %v2359, %v2542
      %v2619 = vadd.f32 %v2360, %v2547
      %v2620 = vadd.f32 %v2361, %v2550
      %v2621 = vadd.f32 %v2362, %v2555
      %v2622 = vadd.f32 %v2363, %v2558
      %v2623 = vadd.f32 %v2364, %v2563
      %v2624 = vadd.f32 %v2365, %v2566
      %v2625 = vadd.f32 %v2366, %v2571
      %v2626 = vadd.f32 %v2367, %v2574
      %v2627 = vadd.f32 %v2368, %v2579
      %v2628 = vadd.f32 %v2369, %v2582
      %v2629 = vadd.f32 %v2370, %v2587
      %v2630 = vadd.f32 %v2371, %v2590
      %v2631 = vadd.f32 %v2372, %v2595
      %v2632 = vadd.f32 %v2373, %v2598
      %v2636 = vrot.slane %v546, 1
      %v2637 = vrot.slane %v547, 1
      %v2638 = vsel %vm629, %v2636, %v2637
      %v2639 = vrot.slane %v548, 1
      %v2640 = vsel %vm629, %v2637, %v2639
      %v2643 = vpack.c.bf16 %v2640, %v2638
      %s2644 = scalar_lea.vmem %s2, 448
      %v2645 = vld [vmem:[%s2644] sm:$0xf]
      %v2646 = vld [vmem:[%s2644 + $0x4] sm:$0xf]
      %v2647 = vld [vmem:[%s2644 + $0x8] sm:$0xf]
      %v2648 = vld [vmem:[%s2644 + $0xc] sm:$0xf]
      %v2649 = vld [vmem:[%s2644 + $0x10] sm:$0xf]
      %v2650 = vld [vmem:[%s2644 + $0x14] sm:$0xf]
      %v2651 = vld [vmem:[%s2644 + $0x18] sm:$0xf]
      %v2652 = vld [vmem:[%s2644 + $0x1c] sm:$0xf]
      %v2653 = vld [vmem:[%s2644 + $0x20] sm:$0xf]
      %v2654 = vld [vmem:[%s2644 + $0x24] sm:$0xf]
      %v2655 = vld [vmem:[%s2644 + $0x28] sm:$0xf]
      %v2656 = vld [vmem:[%s2644 + $0x2c] sm:$0xf]
      %v2657 = vld [vmem:[%s2644 + $0x30] sm:$0xf]
      %v2658 = vld [vmem:[%s2644 + $0x34] sm:$0xf]
      %v2659 = vld [vmem:[%s2644 + $0x38] sm:$0xf]
      %v2660 = vld [vmem:[%s2644 + $0x3c] sm:$0xf]
      %v2677 = vunpack.c.l.b16 %v2645
      %v2678 = vunpack.c.l.b16 %v2646
      %v2679 = vunpack.c.l.b16 %v2647
      %v2680 = vunpack.c.l.b16 %v2648
      %v2681 = vunpack.c.l.b16 %v2649
      %v2682 = vunpack.c.l.b16 %v2650
      %v2683 = vunpack.c.l.b16 %v2651
      %v2684 = vunpack.c.l.b16 %v2652
      %v2685 = vunpack.c.l.b16 %v2653
      %v2686 = vunpack.c.l.b16 %v2654
      %v2687 = vunpack.c.l.b16 %v2655
      %v2688 = vunpack.c.l.b16 %v2656
      %v2689 = vunpack.c.l.b16 %v2657
      %v2690 = vunpack.c.l.b16 %v2658
      %v2691 = vunpack.c.l.b16 %v2659
      %v2692 = vunpack.c.l.b16 %v2660
      %v2693 = vpack.c.b16 %v2678, %v2677
      %v2694 = vpack.c.b16 %v2680, %v2679
      %v2695 = vpack.c.b16 %v2682, %v2681
      %v2696 = vpack.c.b16 %v2684, %v2683
      %v2697 = vpack.c.b16 %v2686, %v2685
      %v2698 = vpack.c.b16 %v2688, %v2687
      %v2699 = vpack.c.b16 %v2690, %v2689
      %v2700 = vpack.c.b16 %v2692, %v2691
      %2709 = vmatprep.subr.bf16.mxu0 0
      %2710 = vmatpush1.bf16.msra.mxu0 %v2693
      %2711 = vmatprep.subr.bf16.mxu0 0
      %2712 = vmatpush1.bf16.msra.mxu0 %v2694
      %2713 = vmatprep.subr.bf16.mxu0 0
      %2714 = vmatpush1.bf16.msra.mxu0 %v2695
      %2715 = vmatprep.subr.bf16.mxu0 0
      %2716 = vmatpush1.bf16.msra.mxu0 %v2696
      %2717 = vmatprep.subr.bf16.mxu0 0
      %2718 = vmatpush1.bf16.msra.mxu0 %v2697
      %2719 = vmatprep.subr.bf16.mxu0 0
      %2720 = vmatpush1.bf16.msra.mxu0 %v2698
      %2721 = vmatprep.subr.bf16.mxu0 0
      %2722 = vmatpush1.bf16.msra.mxu0 %v2699
      %2723 = vmatprep.subr.bf16.mxu0 0
      %2724 = vmatpush1.bf16.msra.mxu0 %v2700
      %2725 = vmatprep.subr.bf16.mxu0 0
      %2726 = vmatpush1.bf16.msra.mxu0 0
      %2727 = vmatprep.subr.bf16.mxu0 0
      %2728 = vmatpush1.bf16.msra.mxu0 0
      %2729 = vmatprep.subr.bf16.mxu0 0
      %2730 = vmatpush1.bf16.msra.mxu0 0
      %2731 = vmatprep.subr.bf16.mxu0 0
      %2732 = vmatpush1.bf16.msra.mxu0 0
      %2733 = vmatprep.subr.bf16.mxu0 0
      %2734 = vmatpush1.bf16.msra.mxu0 0
      %2735 = vmatprep.subr.bf16.mxu0 0
      %2736 = vmatpush1.bf16.msra.mxu0 0
      %2737 = vmatprep.subr.bf16.mxu0 0
      %2738 = vmatpush1.bf16.msra.mxu0 0
      %2739 = vmatprep.subr.bf16.mxu0 0
      %2740 = vmatpush1.bf16.msra.mxu0 0
      %2741 = vmatprep.mubr.bf16.mxu0 0
      %2742 = vmatmul.mubr.bf16.gmra.mrb[0].mxu0 %v744
      %v2743 = vpop.f32.mrb[0].mxu0
      %v2744 = vadd.f32 0.0, %v2743
      %v2745 = vpop.f32.mrb[0].mxu0
      %v2746 = vpop.f32.mrb[0].mxu0
      %v2747 = vadd.f32 0.0, %v2746
      %v2748 = vpop.f32.mrb[0].mxu0
      %2749 = vmatprep.mubr.bf16.mxu0 0
      %2750 = vmatmul.mubr.bf16.gmra.mrb[0].mxu0 %v745
      %v2751 = vpop.f32.mrb[0].mxu0
      %v2752 = vadd.f32 0.0, %v2751
      %v2753 = vpop.f32.mrb[0].mxu0
      %v2754 = vpop.f32.mrb[0].mxu0
      %v2755 = vadd.f32 0.0, %v2754
      %v2756 = vpop.f32.mrb[0].mxu0
      %2757 = vmatprep.mubr.bf16.mxu0 0
      %2758 = vmatmul.mubr.bf16.gmra.mrb[0].mxu0 %v746
      %v2759 = vpop.f32.mrb[0].mxu0
      %v2760 = vadd.f32 0.0, %v2759
      %v2761 = vpop.f32.mrb[0].mxu0
      %v2762 = vpop.f32.mrb[0].mxu0
      %v2763 = vadd.f32 0.0, %v2762
      %v2764 = vpop.f32.mrb[0].mxu0
      %2765 = vmatprep.mubr.bf16.mxu0 0
      %2766 = vmatmul.mubr.bf16.gmra.mrb[0].mxu0 %v747
      %v2767 = vpop.f32.mrb[0].mxu0
      %v2768 = vadd.f32 0.0, %v2767
      %v2769 = vpop.f32.mrb[0].mxu0
      %v2770 = vpop.f32.mrb[0].mxu0
      %v2771 = vadd.f32 0.0, %v2770
      %v2772 = vpop.f32.mrb[0].mxu0
      %2773 = vmatprep.mubr.bf16.mxu0 0
      %2774 = vmatmul.mubr.bf16.gmra.mrb[0].mxu0 %v748
      %v2775 = vpop.f32.mrb[0].mxu0
      %v2776 = vadd.f32 0.0, %v2775
      %v2777 = vpop.f32.mrb[0].mxu0
      %v2778 = vpop.f32.mrb[0].mxu0
      %v2779 = vadd.f32 0.0, %v2778
      %v2780 = vpop.f32.mrb[0].mxu0
      %2781 = vmatprep.mubr.bf16.mxu0 0
      %2782 = vmatmul.mubr.bf16.gmra.mrb[0].mxu0 %v749
      %v2783 = vpop.f32.mrb[0].mxu0
      %v2784 = vadd.f32 0.0, %v2783
      %v2785 = vpop.f32.mrb[0].mxu0
      %v2786 = vpop.f32.mrb[0].mxu0
      %v2787 = vadd.f32 0.0, %v2786
      %v2788 = vpop.f32.mrb[0].mxu0
      %2789 = vmatprep.mubr.bf16.mxu0 0
      %2790 = vmatmul.mubr.bf16.gmra.mrb[0].mxu0 %v750
      %v2791 = vpop.f32.mrb[0].mxu0
      %v2792 = vadd.f32 0.0, %v2791
      %v2793 = vpop.f32.mrb[0].mxu0
      %v2794 = vpop.f32.mrb[0].mxu0
      %v2795 = vadd.f32 0.0, %v2794
      %v2796 = vpop.f32.mrb[0].mxu0
      %2797 = vmatprep.mubr.bf16.mxu0 0
      %2798 = vmatmul.mubr.bf16.gmra.mrb[0].mxu0 %v751
      %v2799 = vpop.f32.mrb[0].mxu0
      %v2800 = vadd.f32 0.0, %v2799
      %v2801 = vpop.f32.mrb[0].mxu0
      %v2802 = vpop.f32.mrb[0].mxu0
      %v2803 = vadd.f32 0.0, %v2802
      %v2804 = vpop.f32.mrb[0].mxu0
      %2805 = vmatprep.mubr.bf16.mxu0 0
      %2806 = vmatmul.mubr.bf16.gmra.mrb[0].mxu0 %v752
      %v2807 = vpop.f32.mrb[0].mxu0
      %v2808 = vadd.f32 0.0, %v2807
      %v2809 = vpop.f32.mrb[0].mxu0
      %v2810 = vpop.f32.mrb[0].mxu0
      %v2811 = vadd.f32 0.0, %v2810
      %v2812 = vpop.f32.mrb[0].mxu0
      %2813 = vmatprep.mubr.bf16.mxu0 0
      %2814 = vmatmul.mubr.bf16.gmra.mrb[0].mxu0 %v753
      %v2815 = vpop.f32.mrb[0].mxu0
      %v2816 = vadd.f32 0.0, %v2815
      %v2817 = vpop.f32.mrb[0].mxu0
      %v2818 = vpop.f32.mrb[0].mxu0
      %v2819 = vadd.f32 0.0, %v2818
      %v2820 = vpop.f32.mrb[0].mxu0
      %2821 = vmatprep.mubr.bf16.mxu0 0
      %2822 = vmatmul.mubr.bf16.gmra.mrb[0].mxu0 %v754
      %v2823 = vpop.f32.mrb[0].mxu0
      %v2824 = vadd.f32 0.0, %v2823
      %v2825 = vpop.f32.mrb[0].mxu0
      %v2826 = vpop.f32.mrb[0].mxu0
      %v2827 = vadd.f32 0.0, %v2826
      %v2828 = vpop.f32.mrb[0].mxu0
      %2829 = vmatprep.mubr.bf16.mxu0 0
      %2830 = vmatmul.mubr.bf16.gmra.mrb[0].mxu0 %v755
      %v2831 = vpop.f32.mrb[0].mxu0
      %v2832 = vadd.f32 0.0, %v2831
      %v2833 = vpop.f32.mrb[0].mxu0
      %v2834 = vpop.f32.mrb[0].mxu0
      %v2835 = vadd.f32 0.0, %v2834
      %v2836 = vpop.f32.mrb[0].mxu0
      %2837 = vmatprep.mubr.bf16.mxu0 0
      %2838 = vmatmul.mubr.bf16.gmra.mrb[0].mxu0 %v756
      %v2839 = vpop.f32.mrb[0].mxu0
      %v2840 = vadd.f32 0.0, %v2839
      %v2841 = vpop.f32.mrb[0].mxu0
      %v2842 = vpop.f32.mrb[0].mxu0
      %v2843 = vadd.f32 0.0, %v2842
      %v2844 = vpop.f32.mrb[0].mxu0
      %2845 = vmatprep.mubr.bf16.mxu0 0
      %2846 = vmatmul.mubr.bf16.gmra.mrb[0].mxu0 %v757
      %v2847 = vpop.f32.mrb[0].mxu0
      %v2848 = vadd.f32 0.0, %v2847
      %v2849 = vpop.f32.mrb[0].mxu0
      %v2850 = vpop.f32.mrb[0].mxu0
      %v2851 = vadd.f32 0.0, %v2850
      %v2852 = vpop.f32.mrb[0].mxu0
      %2853 = vmatprep.mubr.bf16.mxu0 0
      %2854 = vmatmul.mubr.bf16.gmra.mrb[0].mxu0 %v1849
      %v2855 = vpop.f32.mrb[0].mxu0
      %v2856 = vadd.f32 0.0, %v2855
      %v2857 = vpop.f32.mrb[0].mxu0
      %v2858 = vpop.f32.mrb[0].mxu0
      %v2859 = vadd.f32 0.0, %v2858
      %v2860 = vpop.f32.mrb[0].mxu0
      %2861 = vmatprep.mubr.bf16.mxu0 0
      %2862 = vmatmul.mubr.bf16.gmra.mrb[0].mxu0 %v2643
      %v2863 = vpop.f32.mrb[0].mxu0
      %v2864 = vadd.f32 0.0, %v2863
      %v2865 = vpop.f32.mrb[0].mxu0
      %v2866 = vpop.f32.mrb[0].mxu0
      %v2867 = vadd.f32 0.0, %v2866
      %v2868 = vpop.f32.mrb[0].mxu0
      %2869 = vdwg.mxu0
      %v2870 = vadd.f32 %v2601, %v2744
      %v2871 = vadd.f32 %v2602, %v2747
      %v2872 = vadd.f32 %v2603, %v2752
      %v2873 = vadd.f32 %v2604, %v2755
      %v2874 = vadd.f32 %v2605, %v2760
      %v2875 = vadd.f32 %v2606, %v2763
      %v2876 = vadd.f32 %v2607, %v2768
      %v2877 = vadd.f32 %v2608, %v2771
      %v2878 = vadd.f32 %v2609, %v2776
      %v2879 = vadd.f32 %v2610, %v2779
      %v2880 = vadd.f32 %v2611, %v2784
      %v2881 = vadd.f32 %v2612, %v2787
      %v2882 = vadd.f32 %v2613, %v2792
      %v2883 = vadd.f32 %v2614, %v2795
      %v2884 = vadd.f32 %v2615, %v2800
      %v2885 = vadd.f32 %v2616, %v2803
      %v2886 = vadd.f32 %v2617, %v2808
      %v2887 = vadd.f32 %v2618, %v2811
      %v2888 = vadd.f32 %v2619, %v2816
      %v2889 = vadd.f32 %v2620, %v2819
      %v2890 = vadd.f32 %v2621, %v2824
      %v2891 = vadd.f32 %v2622, %v2827
      %v2892 = vadd.f32 %v2623, %v2832
      %v2893 = vadd.f32 %v2624, %v2835
      %v2894 = vadd.f32 %v2625, %v2840
      %v2895 = vadd.f32 %v2626, %v2843
      %v2896 = vadd.f32 %v2627, %v2848
      %v2897 = vadd.f32 %v2628, %v2851
      %v2898 = vadd.f32 %v2629, %v2856
      %v2899 = vadd.f32 %v2630, %v2859
      %v2900 = vadd.f32 %v2631, %v2864
      %v2901 = vadd.f32 %v2632, %v2867
      %v2902 = vrot.slane %v546, 2
      %v2903 = vrot.slane %v547, 2
      %v2904 = vsel %vm1193, %v2902, %v2903
      %v2905 = vrot.slane %v548, 2
      %v2906 = vsel %vm1193, %v2903, %v2905
      %v2909 = vpack.c.bf16 %v2906, %v2904
      %s2910 = scalar_lea.vmem %s2, 512
      %v2911 = vld [vmem:[%s2910] sm:$0xf]
      %v2912 = vld [vmem:[%s2910 + $0x4] sm:$0xf]
      %v2913 = vld [vmem:[%s2910 + $0x8] sm:$0xf]
      %v2914 = vld [vmem:[%s2910 + $0xc] sm:$0xf]
      %v2915 = vld [vmem:[%s2910 + $0x10] sm:$0xf]
      %v2916 = vld [vmem:[%s2910 + $0x14] sm:$0xf]
      %v2917 = vld [vmem:[%s2910 + $0x18] sm:$0xf]
      %v2918 = vld [vmem:[%s2910 + $0x1c] sm:$0xf]
      %v2919 = vld [vmem:[%s2910 + $0x20] sm:$0xf]
      %v2920 = vld [vmem:[%s2910 + $0x24] sm:$0xf]
      %v2921 = vld [vmem:[%s2910 + $0x28] sm:$0xf]
      %v2922 = vld [vmem:[%s2910 + $0x2c] sm:$0xf]
      %v2923 = vld [vmem:[%s2910 + $0x30] sm:$0xf]
      %v2924 = vld [vmem:[%s2910 + $0x34] sm:$0xf]
      %v2925 = vld [vmem:[%s2910 + $0x38] sm:$0xf]
      %v2926 = vld [vmem:[%s2910 + $0x3c] sm:$0xf]
      %v2943 = vunpack.c.l.b16 %v2911
      %v2944 = vunpack.c.l.b16 %v2912
      %v2945 = vunpack.c.l.b16 %v2913
      %v2946 = vunpack.c.l.b16 %v2914
      %v2947 = vunpack.c.l.b16 %v2915
      %v2948 = vunpack.c.l.b16 %v2916
      %v2949 = vunpack.c.l.b16 %v2917
      %v2950 = vunpack.c.l.b16 %v2918
      %v2951 = vunpack.c.l.b16 %v2919
      %v2952 = vunpack.c.l.b16 %v2920
      %v2953 = vunpack.c.l.b16 %v2921
      %v2954 = vunpack.c.l.b16 %v2922
      %v2955 = vunpack.c.l.b16 %v2923
      %v2956 = vunpack.c.l.b16 %v2924
      %v2957 = vunpack.c.l.b16 %v2925
      %v2958 = vunpack.c.l.b16 %v2926
      %v2959 = vpack.c.b16 %v2944, %v2943
      %v2960 = vpack.c.b16 %v2946, %v2945
      %v2961 = vpack.c.b16 %v2948, %v2947
      %v2962 = vpack.c.b16 %v2950, %v2949
      %v2963 = vpack.c.b16 %v2952, %v2951
      %v2964 = vpack.c.b16 %v2954, %v2953
      %v2965 = vpack.c.b16 %v2956, %v2955
      %v2966 = vpack.c.b16 %v2958, %v2957
      %2975 = vmatprep.subr.bf16.mxu0 0
      %2976 = vmatpush1.bf16.msra.mxu0 %v2959
      %2977 = vmatprep.subr.bf16.mxu0 0
      %2978 = vmatpush1.bf16.msra.mxu0 %v2960
      %2979 = vmatprep.subr.bf16.mxu0 0
      %2980 = vmatpush1.bf16.msra.mxu0 %v2961
      %2981 = vmatprep.subr.bf16.mxu0 0
      %2982 = vmatpush1.bf16.msra.mxu0 %v2962
      %2983 = vmatprep.subr.bf16.mxu0 0
      %2984 = vmatpush1.bf16.msra.mxu0 %v2963
      %2985 = vmatprep.subr.bf16.mxu0 0
      %2986 = vmatpush1.bf16.msra.mxu0 %v2964
      %2987 = vmatprep.subr.bf16.mxu0 0
      %2988 = vmatpush1.bf16.msra.mxu0 %v2965
      %2989 = vmatprep.subr.bf16.mxu0 0
      %2990 = vmatpush1.bf16.msra.mxu0 %v2966
      %2991 = vmatprep.subr.bf16.mxu0 0
      %2992 = vmatpush1.bf16.msra.mxu0 0
      %2993 = vmatprep.subr.bf16.mxu0 0
      %2994 = vmatpush1.bf16.msra.mxu0 0
      %2995 = vmatprep.subr.bf16.mxu0 0
      %2996 = vmatpush1.bf16.msra.mxu0 0
      %2997 = vmatprep.subr.bf16.mxu0 0
      %2998 = vmatpush1.bf16.msra.mxu0 0
      %2999 = vmatprep.subr.bf16.mxu0 0
      %3000 = vmatpush1.bf16.msra.mxu0 0
      %3001 = vmatprep.subr.bf16.mxu0 0
      %3002 = vmatpush1.bf16.msra.mxu0 0
      %3003 = vmatprep.subr.bf16.mxu0 0
      %3004 = vmatpush1.bf16.msra.mxu0 0
      %3005 = vmatprep.subr.bf16.mxu0 0
      %3006 = vmatpush1.bf16.msra.mxu0 0
      %3007 = vmatprep.mubr.bf16.mxu0 0
      %3008 = vmatmul.mubr.bf16.gmra.mrb[0].mxu0 %v1308
      %v3009 = vpop.f32.mrb[0].mxu0
      %v3010 = vadd.f32 0.0, %v3009
      %v3011 = vpop.f32.mrb[0].mxu0
      %v3012 = vpop.f32.mrb[0].mxu0
      %v3013 = vadd.f32 0.0, %v3012
      %v3014 = vpop.f32.mrb[0].mxu0
      %3015 = vmatprep.mubr.bf16.mxu0 0
      %3016 = vmatmul.mubr.bf16.gmra.mrb[0].mxu0 %v1309
      %v3017 = vpop.f32.mrb[0].mxu0
      %v3018 = vadd.f32 0.0, %v3017
      %v3019 = vpop.f32.mrb[0].mxu0
      %v3020 = vpop.f32.mrb[0].mxu0
      %v3021 = vadd.f32 0.0, %v3020
      %v3022 = vpop.f32.mrb[0].mxu0
      %3023 = vmatprep.mubr.bf16.mxu0 0
      %3024 = vmatmul.mubr.bf16.gmra.mrb[0].mxu0 %v1310
      %v3025 = vpop.f32.mrb[0].mxu0
      %v3026 = vadd.f32 0.0, %v3025
      %v3027 = vpop.f32.mrb[0].mxu0
      %v3028 = vpop.f32.mrb[0].mxu0
      %v3029 = vadd.f32 0.0, %v3028
      %v3030 = vpop.f32.mrb[0].mxu0
      %3031 = vmatprep.mubr.bf16.mxu0 0
      %3032 = vmatmul.mubr.bf16.gmra.mrb[0].mxu0 %v1311
      %v3033 = vpop.f32.mrb[0].mxu0
      %v3034 = vadd.f32 0.0, %v3033
      %v3035 = vpop.f32.mrb[0].mxu0
      %v3036 = vpop.f32.mrb[0].mxu0
      %v3037 = vadd.f32 0.0, %v3036
      %v3038 = vpop.f32.mrb[0].mxu0
      %3039 = vmatprep.mubr.bf16.mxu0 0
      %3040 = vmatmul.mubr.bf16.gmra.mrb[0].mxu0 %v1312
      %v3041 = vpop.f32.mrb[0].mxu0
      %v3042 = vadd.f32 0.0, %v3041
      %v3043 = vpop.f32.mrb[0].mxu0
      %v3044 = vpop.f32.mrb[0].mxu0
      %v3045 = vadd.f32 0.0, %v3044
      %v3046 = vpop.f32.mrb[0].mxu0
      %3047 = vmatprep.mubr.bf16.mxu0 0
      %3048 = vmatmul.mubr.bf16.gmra.mrb[0].mxu0 %v1313
      %v3049 = vpop.f32.mrb[0].mxu0
      %v3050 = vadd.f32 0.0, %v3049
      %v3051 = vpop.f32.mrb[0].mxu0
      %v3052 = vpop.f32.mrb[0].mxu0
      %v3053 = vadd.f32 0.0, %v3052
      %v3054 = vpop.f32.mrb[0].mxu0
      %3055 = vmatprep.mubr.bf16.mxu0 0
      %3056 = vmatmul.mubr.bf16.gmra.mrb[0].mxu0 %v1314
      %v3057 = vpop.f32.mrb[0].mxu0
      %v3058 = vadd.f32 0.0, %v3057
      %v3059 = vpop.f32.mrb[0].mxu0
      %v3060 = vpop.f32.mrb[0].mxu0
      %v3061 = vadd.f32 0.0, %v3060
      %v3062 = vpop.f32.mrb[0].mxu0
      %3063 = vmatprep.mubr.bf16.mxu0 0
      %3064 = vmatmul.mubr.bf16.gmra.mrb[0].mxu0 %v1315
      %v3065 = vpop.f32.mrb[0].mxu0
      %v3066 = vadd.f32 0.0, %v3065
      %v3067 = vpop.f32.mrb[0].mxu0
      %v3068 = vpop.f32.mrb[0].mxu0
      %v3069 = vadd.f32 0.0, %v3068
      %v3070 = vpop.f32.mrb[0].mxu0
      %3071 = vmatprep.mubr.bf16.mxu0 0
      %3072 = vmatmul.mubr.bf16.gmra.mrb[0].mxu0 %v1316
      %v3073 = vpop.f32.mrb[0].mxu0
      %v3074 = vadd.f32 0.0, %v3073
      %v3075 = vpop.f32.mrb[0].mxu0
      %v3076 = vpop.f32.mrb[0].mxu0
      %v3077 = vadd.f32 0.0, %v3076
      %v3078 = vpop.f32.mrb[0].mxu0
      %3079 = vmatprep.mubr.bf16.mxu0 0
      %3080 = vmatmul.mubr.bf16.gmra.mrb[0].mxu0 %v1317
      %v3081 = vpop.f32.mrb[0].mxu0
      %v3082 = vadd.f32 0.0, %v3081
      %v3083 = vpop.f32.mrb[0].mxu0
      %v3084 = vpop.f32.mrb[0].mxu0
      %v3085 = vadd.f32 0.0, %v3084
      %v3086 = vpop.f32.mrb[0].mxu0
      %3087 = vmatprep.mubr.bf16.mxu0 0
      %3088 = vmatmul.mubr.bf16.gmra.mrb[0].mxu0 %v1318
      %v3089 = vpop.f32.mrb[0].mxu0
      %v3090 = vadd.f32 0.0, %v3089
      %v3091 = vpop.f32.mrb[0].mxu0
      %v3092 = vpop.f32.mrb[0].mxu0
      %v3093 = vadd.f32 0.0, %v3092
      %v3094 = vpop.f32.mrb[0].mxu0
      %3095 = vmatprep.mubr.bf16.mxu0 0
      %3096 = vmatmul.mubr.bf16.gmra.mrb[0].mxu0 %v1319
      %v3097 = vpop.f32.mrb[0].mxu0
      %v3098 = vadd.f32 0.0, %v3097
      %v3099 = vpop.f32.mrb[0].mxu0
      %v3100 = vpop.f32.mrb[0].mxu0
      %v3101 = vadd.f32 0.0, %v3100
      %v3102 = vpop.f32.mrb[0].mxu0
      %3103 = vmatprep.mubr.bf16.mxu0 0
      %3104 = vmatmul.mubr.bf16.gmra.mrb[0].mxu0 %v1320
      %v3105 = vpop.f32.mrb[0].mxu0
      %v3106 = vadd.f32 0.0, %v3105
      %v3107 = vpop.f32.mrb[0].mxu0
      %v3108 = vpop.f32.mrb[0].mxu0
      %v3109 = vadd.f32 0.0, %v3108
      %v3110 = vpop.f32.mrb[0].mxu0
      %3111 = vmatprep.mubr.bf16.mxu0 0
      %3112 = vmatmul.mubr.bf16.gmra.mrb[0].mxu0 %v1321
      %v3113 = vpop.f32.mrb[0].mxu0
      %v3114 = vadd.f32 0.0, %v3113
      %v3115 = vpop.f32.mrb[0].mxu0
      %v3116 = vpop.f32.mrb[0].mxu0
      %v3117 = vadd.f32 0.0, %v3116
      %v3118 = vpop.f32.mrb[0].mxu0
      %3119 = vmatprep.mubr.bf16.mxu0 0
      %3120 = vmatmul.mubr.bf16.gmra.mrb[0].mxu0 %v2115
      %v3121 = vpop.f32.mrb[0].mxu0
      %v3122 = vadd.f32 0.0, %v3121
      %v3123 = vpop.f32.mrb[0].mxu0
      %v3124 = vpop.f32.mrb[0].mxu0
      %v3125 = vadd.f32 0.0, %v3124
      %v3126 = vpop.f32.mrb[0].mxu0
      %3127 = vmatprep.mubr.bf16.mxu0 0
      %3128 = vmatmul.mubr.bf16.gmra.mrb[0].mxu0 %v2909
      %v3129 = vpop.f32.mrb[0].mxu0
      %v3130 = vadd.f32 0.0, %v3129
      %v3131 = vpop.f32.mrb[0].mxu0
      %v3132 = vpop.f32.mrb[0].mxu0
      %v3133 = vadd.f32 0.0, %v3132
      %v3134 = vpop.f32.mrb[0].mxu0
      %3135 = vdwg.mxu0
      %v3136 = vadd.f32 %v2870, %v3010
      %v3137 = vadd.f32 %v2871, %v3013
      %v3138 = vadd.f32 %v2872, %v3018
      %v3139 = vadd.f32 %v2873, %v3021
      %v3140 = vadd.f32 %v2874, %v3026
      %v3141 = vadd.f32 %v2875, %v3029
      %v3142 = vadd.f32 %v2876, %v3034
      %v3143 = vadd.f32 %v2877, %v3037
      %v3144 = vadd.f32 %v2878, %v3042
      %v3145 = vadd.f32 %v2879, %v3045
      %v3146 = vadd.f32 %v2880, %v3050
      %v3147 = vadd.f32 %v2881, %v3053
      %v3148 = vadd.f32 %v2882, %v3058
      %v3149 = vadd.f32 %v2883, %v3061
      %v3150 = vadd.f32 %v2884, %v3066
      %v3151 = vadd.f32 %v2885, %v3069
      %v3152 = vadd.f32 %v2886, %v3074
      %v3153 = vadd.f32 %v2887, %v3077
      %v3154 = vadd.f32 %v2888, %v3082
      %v3155 = vadd.f32 %v2889, %v3085
      %v3156 = vadd.f32 %v2890, %v3090
      %v3157 = vadd.f32 %v2891, %v3093
      %v3158 = vadd.f32 %v2892, %v3098
      %v3159 = vadd.f32 %v2893, %v3101
      %v3160 = vadd.f32 %v2894, %v3106
      %v3161 = vadd.f32 %v2895, %v3109
      %v3162 = vadd.f32 %v2896, %v3114
      %v3163 = vadd.f32 %v2897, %v3117
      %v3164 = vadd.f32 %v2898, %v3122
      %v3165 = vadd.f32 %v2899, %v3125
      %v3166 = vadd.f32 %v2900, %v3130
      %v3167 = vadd.f32 %v2901, %v3133
      %3168 = vst [vmem:[%s237] sm:$0xff] %v3136
      %3169 = vst [vmem:[%s237 + $0x8] sm:$0xff] %v3137
      %3170 = vst [vmem:[%s237 + $0x10] sm:$0xff] %v3138
      %3171 = vst [vmem:[%s237 + $0x18] sm:$0xff] %v3139
      %3172 = vst [vmem:[%s237 + $0x20] sm:$0xff] %v3140
      %3173 = vst [vmem:[%s237 + $0x28] sm:$0xff] %v3141
      %3174 = vst [vmem:[%s237 + $0x30] sm:$0xff] %v3142
      %3175 = vst [vmem:[%s237 + $0x38] sm:$0xff] %v3143
      %3176 = vst [vmem:[%s237 + $0x40] sm:$0xff] %v3144
      %3177 = vst [vmem:[%s237 + $0x48] sm:$0xff] %v3145
      %3178 = vst [vmem:[%s237 + $0x50] sm:$0xff] %v3146
      %3179 = vst [vmem:[%s237 + $0x58] sm:$0xff] %v3147
      %3180 = vst [vmem:[%s237 + $0x60] sm:$0xff] %v3148
      %3181 = vst [vmem:[%s237 + $0x68] sm:$0xff] %v3149
      %3182 = vst [vmem:[%s237 + $0x70] sm:$0xff] %v3150
      %3183 = vst [vmem:[%s237 + $0x78] sm:$0xff] %v3151
      %3184 = vst [vmem:[%s237 + $0x80] sm:$0xff] %v3152
      %3185 = vst [vmem:[%s237 + $0x88] sm:$0xff] %v3153
      %3186 = vst [vmem:[%s237 + $0x90] sm:$0xff] %v3154
      %3187 = vst [vmem:[%s237 + $0x98] sm:$0xff] %v3155
      %3188 = vst [vmem:[%s237 + $0xa0] sm:$0xff] %v3156
      %3189 = vst [vmem:[%s237 + $0xa8] sm:$0xff] %v3157
      %3190 = vst [vmem:[%s237 + $0xb0] sm:$0xff] %v3158
      %3191 = vst [vmem:[%s237 + $0xb8] sm:$0xff] %v3159
      %3192 = vst [vmem:[%s237 + $0xc0] sm:$0xff] %v3160
      %3193 = vst [vmem:[%s237 + $0xc8] sm:$0xff] %v3161
      %3194 = vst [vmem:[%s237 + $0xd0] sm:$0xff] %v3162
      %3195 = vst [vmem:[%s237 + $0xd8] sm:$0xff] %v3163
      %3196 = vst [vmem:[%s237 + $0xe0] sm:$0xff] %v3164
      %3197 = vst [vmem:[%s237 + $0xe8] sm:$0xff] %v3165
      %3198 = vst [vmem:[%s237 + $0xf0] sm:$0xff] %v3166
      %3199 = vst [vmem:[%s237 + $0xf8] sm:$0xff] %v3167
      %v3200 = vadd.f32 %v3136, %v3137
      %v3201 = vadd.f32 %v3200, %v3138
      %v3202 = vadd.f32 %v3201, %v3139
      %v3203 = vadd.f32 %v3202, %v3140
      %v3204 = vadd.f32 %v3203, %v3141
      %v3205 = vadd.f32 %v3204, %v3142
      %v3206 = vadd.f32 %v3205, %v3143
      %v3207 = vadd.f32 %v3206, %v3144
      %v3208 = vadd.f32 %v3207, %v3145
      %v3209 = vadd.f32 %v3208, %v3146
      %v3210 = vadd.f32 %v3209, %v3147
      %v3211 = vadd.f32 %v3210, %v3148
      %v3212 = vadd.f32 %v3211, %v3149
      %v3213 = vadd.f32 %v3212, %v3150
      %v3214 = vadd.f32 %v3213, %v3151
      %v3215 = vadd.f32 %v3214, %v3152
      %v3216 = vadd.f32 %v3215, %v3153
      %v3217 = vadd.f32 %v3216, %v3154
      %v3218 = vadd.f32 %v3217, %v3155
      %v3219 = vadd.f32 %v3218, %v3156
      %v3220 = vadd.f32 %v3219, %v3157
      %v3221 = vadd.f32 %v3220, %v3158
      %v3222 = vadd.f32 %v3221, %v3159
      %v3223 = vadd.f32 %v3222, %v3160
      %v3224 = vadd.f32 %v3223, %v3161
      %v3225 = vadd.f32 %v3224, %v3162
      %v3226 = vadd.f32 %v3225, %v3163
      %v3227 = vadd.f32 %v3226, %v3164
      %v3228 = vadd.f32 %v3227, %v3165
      %v3229 = vadd.f32 %v3228, %v3166
      %v3230 = vadd.f32 %v3229, %v3167
      %v3231 = vrot.slane %v3230, 4
      %v3232 = vadd.f32 %v3230, %v3231
      %v3233 = vrot.slane %v3232, 2
      %v3234 = vadd.f32 %v3232, %v3233
      %v3235 = vrot.slane %v3234, 1
      %v3236 = vadd.f32 %v3234, %v3235
      %v3237 = vmul.f32 %v3136, %v3136
      %v3238 = vmul.f32 %v3137, %v3137
      %v3239 = vmul.f32 %v3138, %v3138
      %v3240 = vmul.f32 %v3139, %v3139
      %v3241 = vmul.f32 %v3140, %v3140
      %v3242 = vmul.f32 %v3141, %v3141
      %v3243 = vmul.f32 %v3142, %v3142
      %v3244 = vmul.f32 %v3143, %v3143
      %v3245 = vmul.f32 %v3144, %v3144
      %v3246 = vmul.f32 %v3145, %v3145
      %v3247 = vmul.f32 %v3146, %v3146
      %v3248 = vmul.f32 %v3147, %v3147
      %v3249 = vmul.f32 %v3148, %v3148
      %v3250 = vmul.f32 %v3149, %v3149
      %v3251 = vmul.f32 %v3150, %v3150
      %v3252 = vmul.f32 %v3151, %v3151
      %v3253 = vmul.f32 %v3152, %v3152
      %v3254 = vmul.f32 %v3153, %v3153
      %v3255 = vmul.f32 %v3154, %v3154
      %v3256 = vmul.f32 %v3155, %v3155
      %v3257 = vmul.f32 %v3156, %v3156
      %v3258 = vmul.f32 %v3157, %v3157
      %v3259 = vmul.f32 %v3158, %v3158
      %v3260 = vmul.f32 %v3159, %v3159
      %v3261 = vmul.f32 %v3160, %v3160
      %v3262 = vmul.f32 %v3161, %v3161
      %v3263 = vmul.f32 %v3162, %v3162
      %v3264 = vmul.f32 %v3163, %v3163
      %v3265 = vmul.f32 %v3164, %v3164
      %v3266 = vmul.f32 %v3165, %v3165
      %v3267 = vmul.f32 %v3166, %v3166
      %v3268 = vmul.f32 %v3167, %v3167
      %v3269 = vadd.f32 %v3237, %v3238
      %v3270 = vadd.f32 %v3269, %v3239
      %v3271 = vadd.f32 %v3270, %v3240
      %v3272 = vadd.f32 %v3271, %v3241
      %v3273 = vadd.f32 %v3272, %v3242
      %v3274 = vadd.f32 %v3273, %v3243
      %v3275 = vadd.f32 %v3274, %v3244
      %v3276 = vadd.f32 %v3275, %v3245
      %v3277 = vadd.f32 %v3276, %v3246
      %v3278 = vadd.f32 %v3277, %v3247
      %v3279 = vadd.f32 %v3278, %v3248
      %v3280 = vadd.f32 %v3279, %v3249
      %v3281 = vadd.f32 %v3280, %v3250
      %v3282 = vadd.f32 %v3281, %v3251
      %v3283 = vadd.f32 %v3282, %v3252
      %v3284 = vadd.f32 %v3283, %v3253
      %v3285 = vadd.f32 %v3284, %v3254
      %v3286 = vadd.f32 %v3285, %v3255
      %v3287 = vadd.f32 %v3286, %v3256
      %v3288 = vadd.f32 %v3287, %v3257
      %v3289 = vadd.f32 %v3288, %v3258
      %v3290 = vadd.f32 %v3289, %v3259
      %v3291 = vadd.f32 %v3290, %v3260
      %v3292 = vadd.f32 %v3291, %v3261
      %v3293 = vadd.f32 %v3292, %v3262
      %v3294 = vadd.f32 %v3293, %v3263
      %v3295 = vadd.f32 %v3294, %v3264
      %v3296 = vadd.f32 %v3295, %v3265
      %v3297 = vadd.f32 %v3296, %v3266
      %v3298 = vadd.f32 %v3297, %v3267
      %v3299 = vadd.f32 %v3298, %v3268
      %v3300 = vrot.slane %v3299, 4
      %v3301 = vadd.f32 %v3299, %v3300
      %v3302 = vrot.slane %v3301, 2
      %v3303 = vadd.f32 %v3301, %v3302
      %v3304 = vrot.slane %v3303, 1
      %v3305 = vadd.f32 %v3303, %v3304
      %3306 = vst [vmem:[%s241] sm:$0xff] %v3236
      %3307 = vst [vmem:[%s245] sm:$0xff] %v3305
      %p3308 = scmp.lt.s32.totalorder %s17, 1
      %s3309 = scalar_select %p3308, %s17, 1
      %s3310 = smul.addr %s3309, 32
      %s3311 = smul.addr %s3310, 8
      %s3312 = scalar_lea.vmem %s3, %s3311
      %p3313 = scmp.lt.s32.totalorder %s17, 1
      %s3314 = scalar_select %p3313, %s17, 1
      %s3315 = smul.addr %s3314, 8
      %s3316 = scalar_lea.vmem %s4, %s3315
      %p3317 = scmp.lt.s32.totalorder %s17, 1
      %s3318 = scalar_select %p3317, %s17, 1
      %s3319 = smul.addr %s3318, 8
      %s3320 = scalar_lea.vmem %s5, %s3319
      // Predicated region
      $region33: #{block_forward_pallas.5} parent=31 // pred_check
        %p3321 = pneg %p103
      $region34: #{block_forward_pallas.5} parent=31 // pred_check_branch
        %3323 = sbr.rel (%p3321) target = $region36
      $region35: #{block_forward_pallas.5} parent=31 // pred_region
        _
      $region36: #{block_forward_pallas.5} parent=31 // pred_fallthru
        _
      // Predicated region
      $region37: #{block_forward_pallas.5} parent=31 // pred_check
        %p3324 = pneg %p129
      $region38: #{block_forward_pallas.5} parent=31 // pred_check_branch
        %3326 = sbr.rel (%p3324) target = $region40
      $region39: #{block_forward_pallas.5} parent=31 // pred_region
        _
      $region40: #{block_forward_pallas.5} parent=31 // pred_fallthru
        _
      // Predicated region
      $region41: #{block_forward_pallas.5} parent=31 // pred_check
        %p3327 = pneg %p155
      $region42: #{block_forward_pallas.5} parent=31 // pred_check_branch
        %3329 = sbr.rel (%p3327) target = $region44
      $region43: #{block_forward_pallas.5} parent=31 // pred_region
        _
      $region44: #{block_forward_pallas.5} parent=31 // pred_fallthru
        _
    $region32: #{block_forward_pallas.5} parent=5 // pred_fallthru
      _
    %p3330 = scmp.le.s32.totalorder 2, %s12
    // Predicated region
    $region45: #{block_forward_pallas.5} parent=5 // pred_check
      %p3331 = pneg %p3330
    $region46: #{block_forward_pallas.5} parent=5 // pred_check_branch
      %3333 = sbr.rel (%p3331) target = $region48
    $region47: #{block_forward_pallas.5} parent=5 // pred_region
      %s3334 = ssub.s32 %s12, 2
      // Predicated region
      $region49: #{block_forward_pallas.5} parent=47 // pred_check
        %p3335 = pneg %p109
      $region50: #{block_forward_pallas.5} parent=47 // pred_check_branch
        %3337 = sbr.rel (%p3335) target = $region52
      $region51: #{block_forward_pallas.5} parent=47 // pred_region
        %p3338 = scmp.lt.s32.totalorder %s18, 1
        %s3339 = scalar_select %p3338, %s18, 1
        %s3340 = smul.addr %s3339, 32
        %s3341 = smul.addr %s3340, 8
        %s3342 = scalar_lea.vmem %s3, %s3341
      $region52: #{block_forward_pallas.5} parent=47 // pred_fallthru
        _
      // Predicated region
      $region53: #{block_forward_pallas.5} parent=47 // pred_check
        %p3343 = pneg %p135
      $region54: #{block_forward_pallas.5} parent=47 // pred_check_branch
        %3345 = sbr.rel (%p3343) target = $region56
      $region55: #{block_forward_pallas.5} parent=47 // pred_region
        %p3346 = scmp.lt.s32.totalorder %s18, 1
        %s3347 = scalar_select %p3346, %s18, 1
        %s3348 = smul.addr %s3347, 8
        %s3349 = scalar_lea.vmem %s4, %s3348
      $region56: #{block_forward_pallas.5} parent=47 // pred_fallthru
        _
      // Predicated region
      $region57: #{block_forward_pallas.5} parent=47 // pred_check
        %p3350 = pneg %p161
      $region58: #{block_forward_pallas.5} parent=47 // pred_check_branch
        %3352 = sbr.rel (%p3350) target = $region60
      $region59: #{block_forward_pallas.5} parent=47 // pred_region
        %p3353 = scmp.lt.s32.totalorder %s18, 1
        %s3354 = scalar_select %p3353, %s18, 1
        %s3355 = smul.addr %s3354, 8
        %s3356 = scalar_lea.vmem %s5, %s3355
      $region60: #{block_forward_pallas.5} parent=47 // pred_fallthru
        _
    $region48: #{block_forward_pallas.5} parent=5 // pred_fallthru
      _
  $region6: #{block_forward_pallas.5} parent=0 // loop_footer
    %s16 = sadd.s32 1, %s12
  $region7: #{block_forward_pallas.5} parent=0 // loop_footer_branch
    %11 = sbr.rel target = $region3
  $region8: #{block_forward_pallas.5} parent=0 // loop_exit
    _

</llo_original>
